<compile_context>
chip_gen: v7x
topology: tpu7x:2x2x1
jax: 0.10.0
libtpu: 0.0.40
codegen_flags: <defaults>
</compile_context>

<pallas_src>
import functools

import jax
import jax.numpy as jnp
from jax.experimental import pallas as pl
from jax.experimental.pallas import tpu as pltpu

_VMEM_LIMIT_BYTES = 32 * 1024 * 1024   # explicit; well under v7x's 64 MiB/TC
_LANE = 128                            # lane width; conv channels padded to this


# ----------------------------------------------------------------------------
# Tiled GEMM + bias (+optional ReLU) kernel: out = relu?(x @ w + b)
# ----------------------------------------------------------------------------
def _matmul_bias_kernel(x_ref, w_ref, b_ref, o_ref, acc_ref, *, apply_relu):
    @pl.when(pl.program_id(2) == 0)
    def _():
        acc_ref[...] = jnp.zeros_like(acc_ref)

    a = x_ref[...].astype(jnp.bfloat16)          # bf16 MXU operands
    acc_ref[...] += jnp.dot(a, w_ref[...], preferred_element_type=jnp.float32)

    @pl.when(pl.program_id(2) == pl.num_programs(2) - 1)
    def _():
        y = acc_ref[...] + b_ref[...]            # f32 epilogue
        if apply_relu:
            y = jnp.maximum(y, 0.0)
        o_ref[...] = y.astype(o_ref.dtype)


def _pick_tile(dim, target, quantum):
    """Largest multiple of `quantum` <= target that divides dim (else full)."""
    if dim <= target:
        return dim
    t = (target // quantum) * quantum
    while t >= quantum:
        if dim % t == 0:
            return t
        t -= quantum
    return dim


def matmul_bias(x, w, bias, *, relu=False, tm=256, tn=256, tk=512):
    """x: (M, K) f32, w: (K, N) bf16, bias: (N,)/(1, N) f32 -> (M, N) f32."""
    M, K = x.shape
    K2, N = w.shape
    assert K == K2
    bias2 = bias.reshape(1, N).astype(jnp.float32)
    tm = _pick_tile(M, tm, 8)
    tn = _pick_tile(N, tn, 128)
    tk = _pick_tile(K, tk, 128)
    grid = (M // tm, N // tn, K // tk)
    kernel = functools.partial(_matmul_bias_kernel, apply_relu=relu)
    bytes_accessed = M * K * 4 + K * N * 2 + N * 4 + M * N * 4
    return pl.pallas_call(
        kernel,
        out_shape=jax.ShapeDtypeStruct((M, N), jnp.float32),
        grid=grid,
        in_specs=[
            pl.BlockSpec((tm, tk), lambda i, j, k: (i, k)),
            pl.BlockSpec((tk, tn), lambda i, j, k: (k, j)),
            pl.BlockSpec((1, tn), lambda i, j, k: (0, j)),
        ],
        out_specs=pl.BlockSpec((tm, tn), lambda i, j, k: (i, j)),
        scratch_shapes=[pltpu.VMEM((tm, tn), jnp.float32)],
        compiler_params=pltpu.CompilerParams(
            dimension_semantics=("parallel", "parallel", "arbitrary"),
            vmem_limit_bytes=_VMEM_LIMIT_BYTES),
        cost_estimate=pl.CostEstimate(flops=int(2 * M * N * K),
                                      transcendentals=0,
                                      bytes_accessed=int(bytes_accessed)),
    )(x, w, bias2)


# ----------------------------------------------------------------------------
# Conv2d(k=3, pad=1, stride s) + ReLU as 9 accumulated shifted GEMMs in-kernel.
# The padded input arrives phase-split (mod s) so every tap window is a
# contiguous slice -- no strided access and no im2col in HBM.
# ----------------------------------------------------------------------------
def _conv_kernel(xph_ref, w_ref, b_ref, o_ref, *, kh_kw, stride, out_h, out_wc):
    KH, KW = kh_kw
    cin = xph_ref.shape[-1]
    cout = w_ref.shape[-1]
    acc = jnp.zeros((out_h * out_wc, cout), jnp.float32)
    for kh in range(KH):
        for kw in range(KW):
            win = xph_ref[kh % stride, kw % stride, 0,
                          kh // stride: kh // stride + out_h,
                          kw // stride: kw // stride + out_wc, :]
            win = win.reshape(out_h * out_wc, cin).astype(jnp.bfloat16)
            acc = acc + jnp.dot(win, w_ref[kh * KW + kw],
                                preferred_element_type=jnp.float32)
    y = jnp.maximum(acc + b_ref[...], 0.0)       # f32 bias + ReLU epilogue
    o_ref[0] = y.astype(o_ref.dtype)


def conv_layer(x, w_taps, bias, *, stride):
    """x: (B, H, W, Cin) f32; w_taps: (9, Cin, Cout) bf16; bias: (1, Cout) f32.
    Returns (B, OH, OW, Cout) f32 with Cout lane-padded to 128 upstream."""
    B, H, W, Cin = x.shape
    n_taps, cin_w, Cout = w_taps.shape
    KH = KW = 3
    assert n_taps == KH * KW and cin_w == Cin
    OH = (H + 2 - KH) // stride + 1
    OW = (W + 2 - KW) // stride + 1
    OWc = OW if OW % 8 == 0 else ((OW + 7) // 8) * 8   # sublane-aligned width
    PH = (KH - 1) // stride + OH
    PW = (KW - 1) // stride + OWc

    # Zero-pad + phase-split (mod stride): ~1x HBM traffic (vs 9x im2col).
    xp = jnp.pad(x, ((0, 0), (1, 1), (1, 1), (0, 0)))
    rows = []
    for pr in range(stride):
        cols = []
        for pc in range(stride):
            ph = xp[:, pr::stride, pc::stride, :][:, :PH, :PW, :]
            ph = jnp.pad(ph, ((0, 0), (0, PH - ph.shape[1]),
                              (0, PW - ph.shape[2]), (0, 0)))
            cols.append(ph)
        rows.append(jnp.stack(cols, axis=0))
    xph = jnp.stack(rows, axis=0)                # (s, s, B, PH, PW, Cin)

    kernel = functools.partial(_conv_kernel, kh_kw=(KH, KW), stride=stride,
                               out_h=OH, out_wc=OWc)
    flops = 2 * B * OH * OWc * KH * KW * Cin * Cout
    bytes_accessed = (xph.size * 4 + w_taps.size * 2 + bias.size * 4
                      + B * OH * OWc * Cout * 4)
    out = pl.pallas_call(
        kernel,
        out_shape=jax.ShapeDtypeStruct((B, OH * OWc, Cout), jnp.float32),
        grid=(B,),
        in_specs=[
            pl.BlockSpec((stride, stride, 1, PH, PW, Cin),
                         lambda bi: (0, 0, bi, 0, 0, 0)),
            pl.BlockSpec((n_taps, Cin, Cout), lambda bi: (0, 0, 0)),
            pl.BlockSpec((1, Cout), lambda bi: (0, 0)),
        ],
        out_specs=pl.BlockSpec((1, OH * OWc, Cout), lambda bi: (bi, 0, 0)),
        compiler_params=pltpu.CompilerParams(
            dimension_semantics=("parallel",),          # megacore over batch
            vmem_limit_bytes=_VMEM_LIMIT_BYTES),
        cost_estimate=pl.CostEstimate(flops=int(flops), transcendentals=0,
                                      bytes_accessed=int(bytes_accessed)),
    )(xph, w_taps, bias)

    # Drop the (zero-padded) compute-only columns; keep lane-padded channels.
    return out.reshape(B, OH, OWc, Cout)[:, :, :OW, :]


# ----------------------------------------------------------------------------
# One-time parameter repacking (outside the hot path):
#  * conv weights -> (9, Cin_pad, 128) bf16, taps ordered (kh, kw)
#  * fc1/fc2 fused, rows permuted from NCHW- to NHWC-flatten order, N padded
#    to 128, stored pre-transposed in bf16.
# ----------------------------------------------------------------------------
def prepare_params(params, img_h, img_w):
    def conv_w(w, b, cin_pad, cout_pad):
        cout, cin, kh, kw = w.shape
        wt = jnp.transpose(w, (2, 3, 1, 0)).reshape(kh * kw, cin, cout)
        wt = jnp.pad(wt, ((0, 0), (0, cin_pad - cin), (0, cout_pad - cout)))
        bp = jnp.pad(b, (0, cout_pad - cout)).reshape(1, cout_pad)
        return wt.astype(jnp.bfloat16), bp.astype(jnp.float32)

    w1, b1 = conv_w(params["w1"], params["b1"], 8, _LANE)       # Cin 3 -> 8
    w2, b2 = conv_w(params["w2"], params["b2"], _LANE, _LANE)   # Cin 32 -> 128
    w3, b3 = conv_w(params["w3"], params["b3"], _LANE, _LANE)   # Cin 64 -> 128

    oh, ow = img_h // 4, img_w // 4
    enc = params["fc1_b"].shape[0]

    def perm_fc(wfc):   # (E, C*H*W) NCHW-flatten -> (H*W*C, E) NHWC-flatten
        return (wfc.reshape(enc, 128, oh, ow)
                   .transpose(2, 3, 1, 0)
                   .reshape(oh * ow * 128, enc))

    n_out = max(_LANE, ((2 * enc + _LANE - 1) // _LANE) * _LANE)
    wfc = jnp.concatenate([perm_fc(params["fc1_w"]),
                           perm_fc(params["fc2_w"])], axis=1)
    wfc = jnp.pad(wfc, ((0, 0), (0, n_out - 2 * enc))).astype(jnp.bfloat16)
    bfc = jnp.concatenate([params["fc1_b"], params["fc2_b"]])
    bfc = jnp.pad(bfc, (0, n_out - 2 * enc)).reshape(1, n_out).astype(jnp.float32)

    return {"w1": w1, "b1": b1, "w2": w2, "b2": b2, "w3": w3, "b3": b3,
            "wfc": wfc, "bfc": bfc}


# ----------------------------------------------------------------------------
# VarEncoder forward
# ----------------------------------------------------------------------------
def var_encoder_forward(x_nchw, prep, *, encoding_dim):
    B = x_nchw.shape[0]
    # NCHW -> NHWC; pad the 3 input channels to 8 for an aligned contraction.
    x = jnp.transpose(x_nchw, (0, 2, 3, 1)).astype(jnp.float32)
    x = jnp.pad(x, ((0, 0), (0, 0), (0, 0), (0, 8 - x.shape[-1])))

    h = conv_layer(x, prep["w1"], prep["b1"], stride=2)   # (B, H/2, W/2, 128)
    h = conv_layer(h, prep["w2"], prep["b2"], stride=2)   # (B, H/4, W/4, 128)
    h = conv_layer(h, prep["w3"], prep["b3"], stride=1)   # (B, H/4, W/4, 128)

    # NHWC flatten; FC weights were pre-permuted to this order (no transpose).
    xf = h.reshape(B, -1)                                 # (B, 128*H/4*W/4)
    out = matmul_bias(xf, prep["wfc"], prep["bfc"], relu=False)   # fused fc1+fc2
    mu = out[:, :encoding_dim]
    log_var = out[:, encoding_dim:2 * encoding_dim]
    return mu, log_var


# ----------------------------------------------------------------------------
# Deterministic parameter construction (synthetic; no checkpoint load)
# ----------------------------------------------------------------------------
def init_params(key, img_h, img_w, encoding_dim):
    ks = jax.random.split(key, 10)
    feat = 128 * (img_h // 4) * (img_w // 4)

    def n(k, shape, scale):
        return jax.random.normal(k, shape, dtype=jnp.float32) * scale

    return {
        "w1": n(ks[0], (32, 3, 3, 3), 0.1),
        "b1": n(ks[1], (32,), 0.1),
        "w2": n(ks[2], (64, 32, 3, 3), 0.05),
        "b2": n(ks[3], (64,), 0.05),
        "w3": n(ks[4], (128, 64, 3, 3), 0.03),
        "b3": n(ks[5], (128,), 0.03),
        "fc1_w": n(ks[6], (encoding_dim, feat), 0.01),
        "fc1_b": n(ks[7], (encoding_dim,), 0.01),
        "fc2_w": n(ks[8], (encoding_dim, feat), 0.01),
        "fc2_b": n(ks[9], (encoding_dim,), 0.01),
    }


if __name__ == "__main__":
    IMG_H = IMG_W = 16
    BATCH = 2
    ENCODING_DIM = 32

    key = jax.random.PRNGKey(0)
    k_x, k_p = jax.random.split(key)

    x = jax.random.normal(k_x, (BATCH, 3, IMG_H, IMG_W), dtype=jnp.float32)
    params = init_params(k_p, IMG_H, IMG_W, ENCODING_DIM)
    prep = prepare_params(params, IMG_H, IMG_W)   # one-time repack, outside jit

    fwd = jax.jit(functools.partial(var_encoder_forward,
                                    encoding_dim=ENCODING_DIM))
    mu, log_var = fwd(x, prep)
    jax.block_until_ready((mu, log_var))

    assert mu.shape == (BATCH, ENCODING_DIM)
    assert log_var.shape == (BATCH, ENCODING_DIM)
    print("KERNEL_OK")
</pallas_src>

<mosaic_0001>
module attributes {stable_mosaic.version = 11 : i64} {
  func.func @_conv_kernel(%arg0: i32, %arg1: memref<2x2x1x9x9x8xf32, #tpu.memory_space<vmem>>, %arg2: memref<9x8x128xbf16, #tpu.memory_space<vmem>>, %arg3: memref<1x128xf32, #tpu.memory_space<vmem>>, %arg4: memref<1x64x128xf32, #tpu.memory_space<vmem>>) attributes {dimension_semantics = [#tpu.dimension_semantics<parallel>], iteration_bounds = array<i64: 2>, scalar_prefetch = 0 : i64, scratch_operands = 0 : i64, tpu.core_type = #tpu.core_type<tc>, window_params = [{transform_indices = @transform_0, window_bounds = array<i64: 2, 2, 1, 9, 9, 8>}, {pipeline_mode = #tpu.pipeline_mode<synchronous>, transform_indices = @transform_1, window_bounds = array<i64: 9, 8, 128>}, {pipeline_mode = #tpu.pipeline_mode<synchronous>, transform_indices = @transform_2, window_bounds = array<i64: 1, 128>}, {transform_indices = @transform_3, window_bounds = array<i64: 1, 64, 128>}]} {
    %cst = arith.constant 0.000000e+00 : f32
    %0 = vector.broadcast %cst : f32 to vector<64x128xf32>
    %c0 = arith.constant 0 : index
    %c0_0 = arith.constant 0 : index
    %c0_1 = arith.constant 0 : index
    %c0_2 = arith.constant 0 : index
    %c0_3 = arith.constant 0 : index
    %c0_4 = arith.constant 0 : index
    %1 = vector.load %arg1[%c0, %c0_0, %c0_1, %c0_2, %c0_3, %c0_4] : memref<2x2x1x9x9x8xf32, #tpu.memory_space<vmem>>, vector<1x1x1x8x8x8xf32>
    %2 = vector.shape_cast %1 : vector<1x1x1x8x8x8xf32> to vector<8x8x8xf32>
    %3 = vector.shape_cast %2 : vector<8x8x8xf32> to vector<64x8xf32>
    %4 = arith.truncf %3 : vector<64x8xf32> to vector<64x8xbf16>
    %c0_5 = arith.constant 0 : index
    %c0_6 = arith.constant 0 : index
    %c0_7 = arith.constant 0 : index
    %5 = vector.load %arg2[%c0_5, %c0_6, %c0_7] : memref<9x8x128xbf16, #tpu.memory_space<vmem>>, vector<1x8x128xbf16>
    %6 = vector.shape_cast %5 : vector<1x8x128xbf16> to vector<8x128xbf16>
    %cst_8 = arith.constant dense<0.000000e+00> : vector<64x128xf32>
    %7 = tpu.matmul %4, %6, %cst_8 {dimension_numbers = #tpu.dot_dimension_numbers<[1], [0], [0], [1], [0, 0, 1, 1], [], []>} : vector<64x8xbf16>, vector<8x128xbf16>, vector<64x128xf32> -> vector<64x128xf32>
    %8 = arith.addf %0, %7 : vector<64x128xf32>
    %c0_9 = arith.constant 0 : index
    %c1 = arith.constant 1 : index
    %c0_10 = arith.constant 0 : index
    %c0_11 = arith.constant 0 : index
    %c0_12 = arith.constant 0 : index
    %c0_13 = arith.constant 0 : index
    %9 = vector.load %arg1[%c0_9, %c1, %c0_10, %c0_11, %c0_12, %c0_13] : memref<2x2x1x9x9x8xf32, #tpu.memory_space<vmem>>, vector<1x1x1x8x8x8xf32>
    %10 = vector.shape_cast %9 : vector<1x1x1x8x8x8xf32> to vector<8x8x8xf32>
    %11 = vector.shape_cast %10 : vector<8x8x8xf32> to vector<64x8xf32>
    %12 = arith.truncf %11 : vector<64x8xf32> to vector<64x8xbf16>
    %c1_14 = arith.constant 1 : index
    %c0_15 = arith.constant 0 : index
    %c0_16 = arith.constant 0 : index
    %13 = vector.load %arg2[%c1_14, %c0_15, %c0_16] : memref<9x8x128xbf16, #tpu.memory_space<vmem>>, vector<1x8x128xbf16>
    %14 = vector.shape_cast %13 : vector<1x8x128xbf16> to vector<8x128xbf16>
    %cst_17 = arith.constant dense<0.000000e+00> : vector<64x128xf32>
    %15 = tpu.matmul %12, %14, %cst_17 {dimension_numbers = #tpu.dot_dimension_numbers<[1], [0], [0], [1], [0, 0, 1, 1], [], []>} : vector<64x8xbf16>, vector<8x128xbf16>, vector<64x128xf32> -> vector<64x128xf32>
    %16 = arith.addf %8, %15 : vector<64x128xf32>
    %c0_18 = arith.constant 0 : index
    %c0_19 = arith.constant 0 : index
    %c0_20 = arith.constant 0 : index
    %c0_21 = arith.constant 0 : index
    %c1_22 = arith.constant 1 : index
    %c0_23 = arith.constant 0 : index
    %17 = vector.load %arg1[%c0_18, %c0_19, %c0_20, %c0_21, %c1_22, %c0_23] : memref<2x2x1x9x9x8xf32, #tpu.memory_space<vmem>>, vector<1x1x1x8x8x8xf32>
    %18 = vector.shape_cast %17 : vector<1x1x1x8x8x8xf32> to vector<8x8x8xf32>
    %19 = vector.shape_cast %18 : vector<8x8x8xf32> to vector<64x8xf32>
    %20 = arith.truncf %19 : vector<64x8xf32> to vector<64x8xbf16>
    %c2 = arith.constant 2 : index
    %c0_24 = arith.constant 0 : index
    %c0_25 = arith.constant 0 : index
    %21 = vector.load %arg2[%c2, %c0_24, %c0_25] : memref<9x8x128xbf16, #tpu.memory_space<vmem>>, vector<1x8x128xbf16>
    %22 = vector.shape_cast %21 : vector<1x8x128xbf16> to vector<8x128xbf16>
    %cst_26 = arith.constant dense<0.000000e+00> : vector<64x128xf32>
    %23 = tpu.matmul %20, %22, %cst_26 {dimension_numbers = #tpu.dot_dimension_numbers<[1], [0], [0], [1], [0, 0, 1, 1], [], []>} : vector<64x8xbf16>, vector<8x128xbf16>, vector<64x128xf32> -> vector<64x128xf32>
    %24 = arith.addf %16, %23 : vector<64x128xf32>
    %c1_27 = arith.constant 1 : index
    %c0_28 = arith.constant 0 : index
    %c0_29 = arith.constant 0 : index
    %c0_30 = arith.constant 0 : index
    %c0_31 = arith.constant 0 : index
    %c0_32 = arith.constant 0 : index
    %25 = vector.load %arg1[%c1_27, %c0_28, %c0_29, %c0_30, %c0_31, %c0_32] : memref<2x2x1x9x9x8xf32, #tpu.memory_space<vmem>>, vector<1x1x1x8x8x8xf32>
    %26 = vector.shape_cast %25 : vector<1x1x1x8x8x8xf32> to vector<8x8x8xf32>
    %27 = vector.shape_cast %26 : vector<8x8x8xf32> to vector<64x8xf32>
    %28 = arith.truncf %27 : vector<64x8xf32> to vector<64x8xbf16>
    %c3 = arith.constant 3 : index
    %c0_33 = arith.constant 0 : index
    %c0_34 = arith.constant 0 : index
    %29 = vector.load %arg2[%c3, %c0_33, %c0_34] : memref<9x8x128xbf16, #tpu.memory_space<vmem>>, vector<1x8x128xbf16>
    %30 = vector.shape_cast %29 : vector<1x8x128xbf16> to vector<8x128xbf16>
    %cst_35 = arith.constant dense<0.000000e+00> : vector<64x128xf32>
    %31 = tpu.matmul %28, %30, %cst_35 {dimension_numbers = #tpu.dot_dimension_numbers<[1], [0], [0], [1], [0, 0, 1, 1], [], []>} : vector<64x8xbf16>, vector<8x128xbf16>, vector<64x128xf32> -> vector<64x128xf32>
    %32 = arith.addf %24, %31 : vector<64x128xf32>
    %c1_36 = arith.constant 1 : index
    %c1_37 = arith.constant 1 : index
    %c0_38 = arith.constant 0 : index
    %c0_39 = arith.constant 0 : index
    %c0_40 = arith.constant 0 : index
    %c0_41 = arith.constant 0 : index
    %33 = vector.load %arg1[%c1_36, %c1_37, %c0_38, %c0_39, %c0_40, %c0_41] : memref<2x2x1x9x9x8xf32, #tpu.memory_space<vmem>>, vector<1x1x1x8x8x8xf32>
    %34 = vector.shape_cast %33 : vector<1x1x1x8x8x8xf32> to vector<8x8x8xf32>
    %35 = vector.shape_cast %34 : vector<8x8x8xf32> to vector<64x8xf32>
    %36 = arith.truncf %35 : vector<64x8xf32> to vector<64x8xbf16>
    %c4 = arith.constant 4 : index
    %c0_42 = arith.constant 0 : index
    %c0_43 = arith.constant 0 : index
    %37 = vector.load %arg2[%c4, %c0_42, %c0_43] : memref<9x8x128xbf16, #tpu.memory_space<vmem>>, vector<1x8x128xbf16>
    %38 = vector.shape_cast %37 : vector<1x8x128xbf16> to vector<8x128xbf16>
    %cst_44 = arith.constant dense<0.000000e+00> : vector<64x128xf32>
    %39 = tpu.matmul %36, %38, %cst_44 {dimension_numbers = #tpu.dot_dimension_numbers<[1], [0], [0], [1], [0, 0, 1, 1], [], []>} : vector<64x8xbf16>, vector<8x128xbf16>, vector<64x128xf32> -> vector<64x128xf32>
    %40 = arith.addf %32, %39 : vector<64x128xf32>
    %c1_45 = arith.constant 1 : index
    %c0_46 = arith.constant 0 : index
    %c0_47 = arith.constant 0 : index
    %c0_48 = arith.constant 0 : index
    %c1_49 = arith.constant 1 : index
    %c0_50 = arith.constant 0 : index
    %41 = vector.load %arg1[%c1_45, %c0_46, %c0_47, %c0_48, %c1_49, %c0_50] : memref<2x2x1x9x9x8xf32, #tpu.memory_space<vmem>>, vector<1x1x1x8x8x8xf32>
    %42 = vector.shape_cast %41 : vector<1x1x1x8x8x8xf32> to vector<8x8x8xf32>
    %43 = vector.shape_cast %42 : vector<8x8x8xf32> to vector<64x8xf32>
    %44 = arith.truncf %43 : vector<64x8xf32> to vector<64x8xbf16>
    %c5 = arith.constant 5 : index
    %c0_51 = arith.constant 0 : index
    %c0_52 = arith.constant 0 : index
    %45 = vector.load %arg2[%c5, %c0_51, %c0_52] : memref<9x8x128xbf16, #tpu.memory_space<vmem>>, vector<1x8x128xbf16>
    %46 = vector.shape_cast %45 : vector<1x8x128xbf16> to vector<8x128xbf16>
    %cst_53 = arith.constant dense<0.000000e+00> : vector<64x128xf32>
    %47 = tpu.matmul %44, %46, %cst_53 {dimension_numbers = #tpu.dot_dimension_numbers<[1], [0], [0], [1], [0, 0, 1, 1], [], []>} : vector<64x8xbf16>, vector<8x128xbf16>, vector<64x128xf32> -> vector<64x128xf32>
    %48 = arith.addf %40, %47 : vector<64x128xf32>
    %c0_54 = arith.constant 0 : index
    %c0_55 = arith.constant 0 : index
    %c0_56 = arith.constant 0 : index
    %c1_57 = arith.constant 1 : index
    %c0_58 = arith.constant 0 : index
    %c0_59 = arith.constant 0 : index
    %49 = vector.load %arg1[%c0_54, %c0_55, %c0_56, %c1_57, %c0_58, %c0_59] : memref<2x2x1x9x9x8xf32, #tpu.memory_space<vmem>>, vector<1x1x1x8x8x8xf32>
    %50 = vector.shape_cast %49 : vector<1x1x1x8x8x8xf32> to vector<8x8x8xf32>
    %51 = vector.shape_cast %50 : vector<8x8x8xf32> to vector<64x8xf32>
    %52 = arith.truncf %51 : vector<64x8xf32> to vector<64x8xbf16>
    %c6 = arith.constant 6 : index
    %c0_60 = arith.constant 0 : index
    %c0_61 = arith.constant 0 : index
    %53 = vector.load %arg2[%c6, %c0_60, %c0_61] : memref<9x8x128xbf16, #tpu.memory_space<vmem>>, vector<1x8x128xbf16>
    %54 = vector.shape_cast %53 : vector<1x8x128xbf16> to vector<8x128xbf16>
    %cst_62 = arith.constant dense<0.000000e+00> : vector<64x128xf32>
    %55 = tpu.matmul %52, %54, %cst_62 {dimension_numbers = #tpu.dot_dimension_numbers<[1], [0], [0], [1], [0, 0, 1, 1], [], []>} : vector<64x8xbf16>, vector<8x128xbf16>, vector<64x128xf32> -> vector<64x128xf32>
    %56 = arith.addf %48, %55 : vector<64x128xf32>
    %c0_63 = arith.constant 0 : index
    %c1_64 = arith.constant 1 : index
    %c0_65 = arith.constant 0 : index
    %c1_66 = arith.constant 1 : index
    %c0_67 = arith.constant 0 : index
    %c0_68 = arith.constant 0 : index
    %57 = vector.load %arg1[%c0_63, %c1_64, %c0_65, %c1_66, %c0_67, %c0_68] : memref<2x2x1x9x9x8xf32, #tpu.memory_space<vmem>>, vector<1x1x1x8x8x8xf32>
    %58 = vector.shape_cast %57 : vector<1x1x1x8x8x8xf32> to vector<8x8x8xf32>
    %59 = vector.shape_cast %58 : vector<8x8x8xf32> to vector<64x8xf32>
    %60 = arith.truncf %59 : vector<64x8xf32> to vector<64x8xbf16>
    %c7 = arith.constant 7 : index
    %c0_69 = arith.constant 0 : index
    %c0_70 = arith.constant 0 : index
    %61 = vector.load %arg2[%c7, %c0_69, %c0_70] : memref<9x8x128xbf16, #tpu.memory_space<vmem>>, vector<1x8x128xbf16>
    %62 = vector.shape_cast %61 : vector<1x8x128xbf16> to vector<8x128xbf16>
    %cst_71 = arith.constant dense<0.000000e+00> : vector<64x128xf32>
    %63 = tpu.matmul %60, %62, %cst_71 {dimension_numbers = #tpu.dot_dimension_numbers<[1], [0], [0], [1], [0, 0, 1, 1], [], []>} : vector<64x8xbf16>, vector<8x128xbf16>, vector<64x128xf32> -> vector<64x128xf32>
    %64 = arith.addf %56, %63 : vector<64x128xf32>
    %c0_72 = arith.constant 0 : index
    %c0_73 = arith.constant 0 : index
    %c0_74 = arith.constant 0 : index
    %c1_75 = arith.constant 1 : index
    %c1_76 = arith.constant 1 : index
    %c0_77 = arith.constant 0 : index
    %65 = vector.load %arg1[%c0_72, %c0_73, %c0_74, %c1_75, %c1_76, %c0_77] : memref<2x2x1x9x9x8xf32, #tpu.memory_space<vmem>>, vector<1x1x1x8x8x8xf32>
    %66 = vector.shape_cast %65 : vector<1x1x1x8x8x8xf32> to vector<8x8x8xf32>
    %67 = vector.shape_cast %66 : vector<8x8x8xf32> to vector<64x8xf32>
    %68 = arith.truncf %67 : vector<64x8xf32> to vector<64x8xbf16>
    %c8 = arith.constant 8 : index
    %c0_78 = arith.constant 0 : index
    %c0_79 = arith.constant 0 : index
    %69 = vector.load %arg2[%c8, %c0_78, %c0_79] : memref<9x8x128xbf16, #tpu.memory_space<vmem>>, vector<1x8x128xbf16>
    %70 = vector.shape_cast %69 : vector<1x8x128xbf16> to vector<8x128xbf16>
    %cst_80 = arith.constant dense<0.000000e+00> : vector<64x128xf32>
    %71 = tpu.matmul %68, %70, %cst_80 {dimension_numbers = #tpu.dot_dimension_numbers<[1], [0], [0], [1], [0, 0, 1, 1], [], []>} : vector<64x8xbf16>, vector<8x128xbf16>, vector<64x128xf32> -> vector<64x128xf32>
    %72 = arith.addf %64, %71 : vector<64x128xf32>
    %c0_81 = arith.constant 0 : index
    %c0_82 = arith.constant 0 : index
    %73 = vector.load %arg3[%c0_81, %c0_82] : memref<1x128xf32, #tpu.memory_space<vmem>>, vector<1x128xf32>
    %74 = vector.broadcast %73 : vector<1x128xf32> to vector<64x128xf32>
    %75 = arith.addf %72, %74 : vector<64x128xf32>
    %cst_83 = arith.constant 0.000000e+00 : f32
    %76 = vector.broadcast %cst_83 : f32 to vector<64x128xf32>
    %77 = arith.maximumf %75, %76 : vector<64x128xf32>
    %c0_84 = arith.constant 0 : index
    %c0_85 = arith.constant 0 : index
    %c0_86 = arith.constant 0 : index
    %78 = vector.load %arg4[%c0_84, %c0_85, %c0_86] : memref<1x64x128xf32, #tpu.memory_space<vmem>>, vector<1x64x128xf32>
    %79 = vector.shape_cast %78 : vector<1x64x128xf32> to vector<64x128xf32>
    %80 = vector.shape_cast %77 : vector<64x128xf32> to vector<1x64x128xf32>
    tpu.vector_store %arg4[%c0_84, %c0_85, %c0_86], %80 {strides = array<i32>} : memref<1x64x128xf32, #tpu.memory_space<vmem>>, vector<1x64x128xf32>,
    return
  }
  func.func @transform_0(%arg0: i32) -> (i32, i32, i32, i32, i32, i32) {
    %c0_i32 = arith.constant 0 : i32
    %c0_i32_0 = arith.constant 0 : i32
    %c0_i32_1 = arith.constant 0 : i32
    %c0_i32_2 = arith.constant 0 : i32
    %c0_i32_3 = arith.constant 0 : i32
    %c0_i32_4 = arith.constant 0 : i32
    return %c0_i32, %c0_i32_0, %arg0, %c0_i32_1, %c0_i32_2, %c0_i32_3 : i32, i32, i32, i32, i32, i32
  }
  func.func @transform_1(%arg0: i32) -> (i32, i32, i32) {
    %c0_i32 = arith.constant 0 : i32
    %c0_i32_0 = arith.constant 0 : i32
    %c0_i32_1 = arith.constant 0 : i32
    %c0_i32_2 = arith.constant 0 : i32
    return %c0_i32, %c0_i32_0, %c0_i32_1 : i32, i32, i32
  }
  func.func @transform_2(%arg0: i32) -> (i32, i32) {
    %c0_i32 = arith.constant 0 : i32
    %c0_i32_0 = arith.constant 0 : i32
    %c0_i32_1 = arith.constant 0 : i32
    return %c0_i32, %c0_i32_0 : i32, i32
  }
  func.func @transform_3(%arg0: i32) -> (i32, i32, i32) {
    %c0_i32 = arith.constant 0 : i32
    %c0_i32_0 = arith.constant 0 : i32
    %c0_i32_1 = arith.constant 0 : i32
    return %arg0, %c0_i32, %c0_i32_0 : i32, i32, i32
  }
}

module attributes {stable_mosaic.version = 11 : i64} {
  func.func @_conv_kernel(%arg0: i32, %arg1: memref<2x2x1x5x9x128xf32, #tpu.memory_space<vmem>>, %arg2: memref<9x128x128xbf16, #tpu.memory_space<vmem>>, %arg3: memref<1x128xf32, #tpu.memory_space<vmem>>, %arg4: memref<1x32x128xf32, #tpu.memory_space<vmem>>) attributes {dimension_semantics = [#tpu.dimension_semantics<parallel>], iteration_bounds = array<i64: 2>, scalar_prefetch = 0 : i64, scratch_operands = 0 : i64, tpu.core_type = #tpu.core_type<tc>, window_params = [{transform_indices = @transform_0, window_bounds = array<i64: 2, 2, 1, 5, 9, 128>}, {pipeline_mode = #tpu.pipeline_mode<synchronous>, transform_indices = @transform_1, window_bounds = array<i64: 9, 128, 128>}, {pipeline_mode = #tpu.pipeline_mode<synchronous>, transform_indices = @transform_2, window_bounds = array<i64: 1, 128>}, {transform_indices = @transform_3, window_bounds = array<i64: 1, 32, 128>}]} {
    %cst = arith.constant 0.000000e+00 : f32
    %0 = vector.broadcast %cst : f32 to vector<32x128xf32>
    %c0 = arith.constant 0 : index
    %c0_0 = arith.constant 0 : index
    %c0_1 = arith.constant 0 : index
    %c0_2 = arith.constant 0 : index
    %c0_3 = arith.constant 0 : index
    %c0_4 = arith.constant 0 : index
    %1 = vector.load %arg1[%c0, %c0_0, %c0_1, %c0_2, %c0_3, %c0_4] : memref<2x2x1x5x9x128xf32, #tpu.memory_space<vmem>>, vector<1x1x1x4x8x128xf32>
    %2 = vector.shape_cast %1 : vector<1x1x1x4x8x128xf32> to vector<4x8x128xf32>
    %3 = vector.shape_cast %2 : vector<4x8x128xf32> to vector<32x128xf32>
    %4 = arith.truncf %3 : vector<32x128xf32> to vector<32x128xbf16>
    %c0_5 = arith.constant 0 : index
    %c0_6 = arith.constant 0 : index
    %c0_7 = arith.constant 0 : index
    %5 = vector.load %arg2[%c0_5, %c0_6, %c0_7] : memref<9x128x128xbf16, #tpu.memory_space<vmem>>, vector<1x128x128xbf16>
    %6 = vector.shape_cast %5 : vector<1x128x128xbf16> to vector<128x128xbf16>
    %cst_8 = arith.constant dense<0.000000e+00> : vector<32x128xf32>
    %7 = tpu.matmul %4, %6, %cst_8 {dimension_numbers = #tpu.dot_dimension_numbers<[1], [0], [0], [1], [0, 0, 1, 1], [], []>} : vector<32x128xbf16>, vector<128x128xbf16>, vector<32x128xf32> -> vector<32x128xf32>
    %8 = arith.addf %0, %7 : vector<32x128xf32>
    %c0_9 = arith.constant 0 : index
    %c1 = arith.constant 1 : index
    %c0_10 = arith.constant 0 : index
    %c0_11 = arith.constant 0 : index
    %c0_12 = arith.constant 0 : index
    %c0_13 = arith.constant 0 : index
    %9 = vector.load %arg1[%c0_9, %c1, %c0_10, %c0_11, %c0_12, %c0_13] : memref<2x2x1x5x9x128xf32, #tpu.memory_space<vmem>>, vector<1x1x1x4x8x128xf32>
    %10 = vector.shape_cast %9 : vector<1x1x1x4x8x128xf32> to vector<4x8x128xf32>
    %11 = vector.shape_cast %10 : vector<4x8x128xf32> to vector<32x128xf32>
    %12 = arith.truncf %11 : vector<32x128xf32> to vector<32x128xbf16>
    %c1_14 = arith.constant 1 : index
    %c0_15 = arith.constant 0 : index
    %c0_16 = arith.constant 0 : index
    %13 = vector.load %arg2[%c1_14, %c0_15, %c0_16] : memref<9x128x128xbf16, #tpu.memory_space<vmem>>, vector<1x128x128xbf16>
    %14 = vector.shape_cast %13 : vector<1x128x128xbf16> to vector<128x128xbf16>
    %cst_17 = arith.constant dense<0.000000e+00> : vector<32x128xf32>
    %15 = tpu.matmul %12, %14, %cst_17 {dimension_numbers = #tpu.dot_dimension_numbers<[1], [0], [0], [1], [0, 0, 1, 1], [], []>} : vector<32x128xbf16>, vector<128x128xbf16>, vector<32x128xf32> -> vector<32x128xf32>
    %16 = arith.addf %8, %15 : vector<32x128xf32>
    %c0_18 = arith.constant 0 : index
    %c0_19 = arith.constant 0 : index
    %c0_20 = arith.constant 0 : index
    %c0_21 = arith.constant 0 : index
    %c1_22 = arith.constant 1 : index
    %c0_23 = arith.constant 0 : index
    %17 = vector.load %arg1[%c0_18, %c0_19, %c0_20, %c0_21, %c1_22, %c0_23] : memref<2x2x1x5x9x128xf32, #tpu.memory_space<vmem>>, vector<1x1x1x4x8x128xf32>
    %18 = vector.shape_cast %17 : vector<1x1x1x4x8x128xf32> to vector<4x8x128xf32>
    %19 = vector.shape_cast %18 : vector<4x8x128xf32> to vector<32x128xf32>
    %20 = arith.truncf %19 : vector<32x128xf32> to vector<32x128xbf16>
    %c2 = arith.constant 2 : index
    %c0_24 = arith.constant 0 : index
    %c0_25 = arith.constant 0 : index
    %21 = vector.load %arg2[%c2, %c0_24, %c0_25] : memref<9x128x128xbf16, #tpu.memory_space<vmem>>, vector<1x128x128xbf16>
    %22 = vector.shape_cast %21 : vector<1x128x128xbf16> to vector<128x128xbf16>
    %cst_26 = arith.constant dense<0.000000e+00> : vector<32x128xf32>
    %23 = tpu.matmul %20, %22, %cst_26 {dimension_numbers = #tpu.dot_dimension_numbers<[1], [0], [0], [1], [0, 0, 1, 1], [], []>} : vector<32x128xbf16>, vector<128x128xbf16>, vector<32x128xf32> -> vector<32x128xf32>
    %24 = arith.addf %16, %23 : vector<32x128xf32>
    %c1_27 = arith.constant 1 : index
    %c0_28 = arith.constant 0 : index
    %c0_29 = arith.constant 0 : index
    %c0_30 = arith.constant 0 : index
    %c0_31 = arith.constant 0 : index
    %c0_32 = arith.constant 0 : index
    %25 = vector.load %arg1[%c1_27, %c0_28, %c0_29, %c0_30, %c0_31, %c0_32] : memref<2x2x1x5x9x128xf32, #tpu.memory_space<vmem>>, vector<1x1x1x4x8x128xf32>
    %26 = vector.shape_cast %25 : vector<1x1x1x4x8x128xf32> to vector<4x8x128xf32>
    %27 = vector.shape_cast %26 : vector<4x8x128xf32> to vector<32x128xf32>
    %28 = arith.truncf %27 : vector<32x128xf32> to vector<32x128xbf16>
    %c3 = arith.constant 3 : index
    %c0_33 = arith.constant 0 : index
    %c0_34 = arith.constant 0 : index
    %29 = vector.load %arg2[%c3, %c0_33, %c0_34] : memref<9x128x128xbf16, #tpu.memory_space<vmem>>, vector<1x128x128xbf16>
    %30 = vector.shape_cast %29 : vector<1x128x128xbf16> to vector<128x128xbf16>
    %cst_35 = arith.constant dense<0.000000e+00> : vector<32x128xf32>
    %31 = tpu.matmul %28, %30, %cst_35 {dimension_numbers = #tpu.dot_dimension_numbers<[1], [0], [0], [1], [0, 0, 1, 1], [], []>} : vector<32x128xbf16>, vector<128x128xbf16>, vector<32x128xf32> -> vector<32x128xf32>
    %32 = arith.addf %24, %31 : vector<32x128xf32>
    %c1_36 = arith.constant 1 : index
    %c1_37 = arith.constant 1 : index
    %c0_38 = arith.constant 0 : index
    %c0_39 = arith.constant 0 : index
    %c0_40 = arith.constant 0 : index
    %c0_41 = arith.constant 0 : index
    %33 = vector.load %arg1[%c1_36, %c1_37, %c0_38, %c0_39, %c0_40, %c0_41] : memref<2x2x1x5x9x128xf32, #tpu.memory_space<vmem>>, vector<1x1x1x4x8x128xf32>
    %34 = vector.shape_cast %33 : vector<1x1x1x4x8x128xf32> to vector<4x8x128xf32>
    %35 = vector.shape_cast %34 : vector<4x8x128xf32> to vector<32x128xf32>
    %36 = arith.truncf %35 : vector<32x128xf32> to vector<32x128xbf16>
    %c4 = arith.constant 4 : index
    %c0_42 = arith.constant 0 : index
    %c0_43 = arith.constant 0 : index
    %37 = vector.load %arg2[%c4, %c0_42, %c0_43] : memref<9x128x128xbf16, #tpu.memory_space<vmem>>, vector<1x128x128xbf16>
    %38 = vector.shape_cast %37 : vector<1x128x128xbf16> to vector<128x128xbf16>
    %cst_44 = arith.constant dense<0.000000e+00> : vector<32x128xf32>
    %39 = tpu.matmul %36, %38, %cst_44 {dimension_numbers = #tpu.dot_dimension_numbers<[1], [0], [0], [1], [0, 0, 1, 1], [], []>} : vector<32x128xbf16>, vector<128x128xbf16>, vector<32x128xf32> -> vector<32x128xf32>
    %40 = arith.addf %32, %39 : vector<32x128xf32>
    %c1_45 = arith.constant 1 : index
    %c0_46 = arith.constant 0 : index
    %c0_47 = arith.constant 0 : index
    %c0_48 = arith.constant 0 : index
    %c1_49 = arith.constant 1 : index
    %c0_50 = arith.constant 0 : index
    %41 = vector.load %arg1[%c1_45, %c0_46, %c0_47, %c0_48, %c1_49, %c0_50] : memref<2x2x1x5x9x128xf32, #tpu.memory_space<vmem>>, vector<1x1x1x4x8x128xf32>
    %42 = vector.shape_cast %41 : vector<1x1x1x4x8x128xf32> to vector<4x8x128xf32>
    %43 = vector.shape_cast %42 : vector<4x8x128xf32> to vector<32x128xf32>
    %44 = arith.truncf %43 : vector<32x128xf32> to vector<32x128xbf16>
    %c5 = arith.constant 5 : index
    %c0_51 = arith.constant 0 : index
    %c0_52 = arith.constant 0 : index
    %45 = vector.load %arg2[%c5, %c0_51, %c0_52] : memref<9x128x128xbf16, #tpu.memory_space<vmem>>, vector<1x128x128xbf16>
    %46 = vector.shape_cast %45 : vector<1x128x128xbf16> to vector<128x128xbf16>
    %cst_53 = arith.constant dense<0.000000e+00> : vector<32x128xf32>
    %47 = tpu.matmul %44, %46, %cst_53 {dimension_numbers = #tpu.dot_dimension_numbers<[1], [0], [0], [1], [0, 0, 1, 1], [], []>} : vector<32x128xbf16>, vector<128x128xbf16>, vector<32x128xf32> -> vector<32x128xf32>
    %48 = arith.addf %40, %47 : vector<32x128xf32>
    %c0_54 = arith.constant 0 : index
    %c0_55 = arith.constant 0 : index
    %c0_56 = arith.constant 0 : index
    %c1_57 = arith.constant 1 : index
    %c0_58 = arith.constant 0 : index
    %c0_59 = arith.constant 0 : index
    %49 = vector.load %arg1[%c0_54, %c0_55, %c0_56, %c1_57, %c0_58, %c0_59] : memref<2x2x1x5x9x128xf32, #tpu.memory_space<vmem>>, vector<1x1x1x4x8x128xf32>
    %50 = vector.shape_cast %49 : vector<1x1x1x4x8x128xf32> to vector<4x8x128xf32>
    %51 = vector.shape_cast %50 : vector<4x8x128xf32> to vector<32x128xf32>
    %52 = arith.truncf %51 : vector<32x128xf32> to vector<32x128xbf16>
    %c6 = arith.constant 6 : index
    %c0_60 = arith.constant 0 : index
    %c0_61 = arith.constant 0 : index
    %53 = vector.load %arg2[%c6, %c0_60, %c0_61] : memref<9x128x128xbf16, #tpu.memory_space<vmem>>, vector<1x128x128xbf16>
    %54 = vector.shape_cast %53 : vector<1x128x128xbf16> to vector<128x128xbf16>
    %cst_62 = arith.constant dense<0.000000e+00> : vector<32x128xf32>
    %55 = tpu.matmul %52, %54, %cst_62 {dimension_numbers = #tpu.dot_dimension_numbers<[1], [0], [0], [1], [0, 0, 1, 1], [], []>} : vector<32x128xbf16>, vector<128x128xbf16>, vector<32x128xf32> -> vector<32x128xf32>
    %56 = arith.addf %48, %55 : vector<32x128xf32>
    %c0_63 = arith.constant 0 : index
    %c1_64 = arith.constant 1 : index
    %c0_65 = arith.constant 0 : index
    %c1_66 = arith.constant 1 : index
    %c0_67 = arith.constant 0 : index
    %c0_68 = arith.constant 0 : index
    %57 = vector.load %arg1[%c0_63, %c1_64, %c0_65, %c1_66, %c0_67, %c0_68] : memref<2x2x1x5x9x128xf32, #tpu.memory_space<vmem>>, vector<1x1x1x4x8x128xf32>
    %58 = vector.shape_cast %57 : vector<1x1x1x4x8x128xf32> to vector<4x8x128xf32>
    %59 = vector.shape_cast %58 : vector<4x8x128xf32> to vector<32x128xf32>
    %60 = arith.truncf %59 : vector<32x128xf32> to vector<32x128xbf16>
    %c7 = arith.constant 7 : index
    %c0_69 = arith.constant 0 : index
    %c0_70 = arith.constant 0 : index
    %61 = vector.load %arg2[%c7, %c0_69, %c0_70] : memref<9x128x128xbf16, #tpu.memory_space<vmem>>, vector<1x128x128xbf16>
    %62 = vector.shape_cast %61 : vector<1x128x128xbf16> to vector<128x128xbf16>
    %cst_71 = arith.constant dense<0.000000e+00> : vector<32x128xf32>
    %63 = tpu.matmul %60, %62, %cst_71 {dimension_numbers = #tpu.dot_dimension_numbers<[1], [0], [0], [1], [0, 0, 1, 1], [], []>} : vector<32x128xbf16>, vector<128x128xbf16>, vector<32x128xf32> -> vector<32x128xf32>
    %64 = arith.addf %56, %63 : vector<32x128xf32>
    %c0_72 = arith.constant 0 : index
    %c0_73 = arith.constant 0 : index
    %c0_74 = arith.constant 0 : index
    %c1_75 = arith.constant 1 : index
    %c1_76 = arith.constant 1 : index
    %c0_77 = arith.constant 0 : index
    %65 = vector.load %arg1[%c0_72, %c0_73, %c0_74, %c1_75, %c1_76, %c0_77] : memref<2x2x1x5x9x128xf32, #tpu.memory_space<vmem>>, vector<1x1x1x4x8x128xf32>
    %66 = vector.shape_cast %65 : vector<1x1x1x4x8x128xf32> to vector<4x8x128xf32>
    %67 = vector.shape_cast %66 : vector<4x8x128xf32> to vector<32x128xf32>
    %68 = arith.truncf %67 : vector<32x128xf32> to vector<32x128xbf16>
    %c8 = arith.constant 8 : index
    %c0_78 = arith.constant 0 : index
    %c0_79 = arith.constant 0 : index
    %69 = vector.load %arg2[%c8, %c0_78, %c0_79] : memref<9x128x128xbf16, #tpu.memory_space<vmem>>, vector<1x128x128xbf16>
    %70 = vector.shape_cast %69 : vector<1x128x128xbf16> to vector<128x128xbf16>
    %cst_80 = arith.constant dense<0.000000e+00> : vector<32x128xf32>
    %71 = tpu.matmul %68, %70, %cst_80 {dimension_numbers = #tpu.dot_dimension_numbers<[1], [0], [0], [1], [0, 0, 1, 1], [], []>} : vector<32x128xbf16>, vector<128x128xbf16>, vector<32x128xf32> -> vector<32x128xf32>
    %72 = arith.addf %64, %71 : vector<32x128xf32>
    %c0_81 = arith.constant 0 : index
    %c0_82 = arith.constant 0 : index
    %73 = vector.load %arg3[%c0_81, %c0_82] : memref<1x128xf32, #tpu.memory_space<vmem>>, vector<1x128xf32>
    %74 = vector.broadcast %73 : vector<1x128xf32> to vector<32x128xf32>
    %75 = arith.addf %72, %74 : vector<32x128xf32>
    %cst_83 = arith.constant 0.000000e+00 : f32
    %76 = vector.broadcast %cst_83 : f32 to vector<32x128xf32>
    %77 = arith.maximumf %75, %76 : vector<32x128xf32>
    %c0_84 = arith.constant 0 : index
    %c0_85 = arith.constant 0 : index
    %c0_86 = arith.constant 0 : index
    %78 = vector.load %arg4[%c0_84, %c0_85, %c0_86] : memref<1x32x128xf32, #tpu.memory_space<vmem>>, vector<1x32x128xf32>
    %79 = vector.shape_cast %78 : vector<1x32x128xf32> to vector<32x128xf32>
    %80 = vector.shape_cast %77 : vector<32x128xf32> to vector<1x32x128xf32>
    tpu.vector_store %arg4[%c0_84, %c0_85, %c0_86], %80 {strides = array<i32>} : memref<1x32x128xf32, #tpu.memory_space<vmem>>, vector<1x32x128xf32>,
    return
  }
  func.func @transform_0(%arg0: i32) -> (i32, i32, i32, i32, i32, i32) {
    %c0_i32 = arith.constant 0 : i32
    %c0_i32_0 = arith.constant 0 : i32
    %c0_i32_1 = arith.constant 0 : i32
    %c0_i32_2 = arith.constant 0 : i32
    %c0_i32_3 = arith.constant 0 : i32
    %c0_i32_4 = arith.constant 0 : i32
    return %c0_i32, %c0_i32_0, %arg0, %c0_i32_1, %c0_i32_2, %c0_i32_3 : i32, i32, i32, i32, i32, i32
  }
  func.func @transform_1(%arg0: i32) -> (i32, i32, i32) {
    %c0_i32 = arith.constant 0 : i32
    %c0_i32_0 = arith.constant 0 : i32
    %c0_i32_1 = arith.constant 0 : i32
    %c0_i32_2 = arith.constant 0 : i32
    return %c0_i32, %c0_i32_0, %c0_i32_1 : i32, i32, i32
  }
  func.func @transform_2(%arg0: i32) -> (i32, i32) {
    %c0_i32 = arith.constant 0 : i32
    %c0_i32_0 = arith.constant 0 : i32
    %c0_i32_1 = arith.constant 0 : i32
    return %c0_i32, %c0_i32_0 : i32, i32
  }
  func.func @transform_3(%arg0: i32) -> (i32, i32, i32) {
    %c0_i32 = arith.constant 0 : i32
    %c0_i32_0 = arith.constant 0 : i32
    %c0_i32_1 = arith.constant 0 : i32
    return %arg0, %c0_i32, %c0_i32_0 : i32, i32, i32
  }
}

module attributes {stable_mosaic.version = 11 : i64} {
  func.func @_conv_kernel(%arg0: i32, %arg1: memref<1x1x1x6x10x128xf32, #tpu.memory_space<vmem>>, %arg2: memref<9x128x128xbf16, #tpu.memory_space<vmem>>, %arg3: memref<1x128xf32, #tpu.memory_space<vmem>>, %arg4: memref<1x32x128xf32, #tpu.memory_space<vmem>>) attributes {dimension_semantics = [#tpu.dimension_semantics<parallel>], iteration_bounds = array<i64: 2>, scalar_prefetch = 0 : i64, scratch_operands = 0 : i64, tpu.core_type = #tpu.core_type<tc>, window_params = [{transform_indices = @transform_0, window_bounds = array<i64: 1, 1, 1, 6, 10, 128>}, {pipeline_mode = #tpu.pipeline_mode<synchronous>, transform_indices = @transform_1, window_bounds = array<i64: 9, 128, 128>}, {pipeline_mode = #tpu.pipeline_mode<synchronous>, transform_indices = @transform_2, window_bounds = array<i64: 1, 128>}, {transform_indices = @transform_3, window_bounds = array<i64: 1, 32, 128>}]} {
    %cst = arith.constant 0.000000e+00 : f32
    %0 = vector.broadcast %cst : f32 to vector<32x128xf32>
    %c0 = arith.constant 0 : index
    %c0_0 = arith.constant 0 : index
    %c0_1 = arith.constant 0 : index
    %c0_2 = arith.constant 0 : index
    %c0_3 = arith.constant 0 : index
    %c0_4 = arith.constant 0 : index
    %1 = vector.load %arg1[%c0, %c0_0, %c0_1, %c0_2, %c0_3, %c0_4] : memref<1x1x1x6x10x128xf32, #tpu.memory_space<vmem>>, vector<1x1x1x4x8x128xf32>
    %2 = vector.shape_cast %1 : vector<1x1x1x4x8x128xf32> to vector<4x8x128xf32>
    %3 = vector.shape_cast %2 : vector<4x8x128xf32> to vector<32x128xf32>
    %4 = arith.truncf %3 : vector<32x128xf32> to vector<32x128xbf16>
    %c0_5 = arith.constant 0 : index
    %c0_6 = arith.constant 0 : index
    %c0_7 = arith.constant 0 : index
    %5 = vector.load %arg2[%c0_5, %c0_6, %c0_7] : memref<9x128x128xbf16, #tpu.memory_space<vmem>>, vector<1x128x128xbf16>
    %6 = vector.shape_cast %5 : vector<1x128x128xbf16> to vector<128x128xbf16>
    %cst_8 = arith.constant dense<0.000000e+00> : vector<32x128xf32>
    %7 = tpu.matmul %4, %6, %cst_8 {dimension_numbers = #tpu.dot_dimension_numbers<[1], [0], [0], [1], [0, 0, 1, 1], [], []>} : vector<32x128xbf16>, vector<128x128xbf16>, vector<32x128xf32> -> vector<32x128xf32>
    %8 = arith.addf %0, %7 : vector<32x128xf32>
    %c0_9 = arith.constant 0 : index
    %c0_10 = arith.constant 0 : index
    %c0_11 = arith.constant 0 : index
    %c0_12 = arith.constant 0 : index
    %c1 = arith.constant 1 : index
    %c0_13 = arith.constant 0 : index
    %9 = vector.load %arg1[%c0_9, %c0_10, %c0_11, %c0_12, %c1, %c0_13] : memref<1x1x1x6x10x128xf32, #tpu.memory_space<vmem>>, vector<1x1x1x4x8x128xf32>
    %10 = vector.shape_cast %9 : vector<1x1x1x4x8x128xf32> to vector<4x8x128xf32>
    %11 = vector.shape_cast %10 : vector<4x8x128xf32> to vector<32x128xf32>
    %12 = arith.truncf %11 : vector<32x128xf32> to vector<32x128xbf16>
    %c1_14 = arith.constant 1 : index
    %c0_15 = arith.constant 0 : index
    %c0_16 = arith.constant 0 : index
    %13 = vector.load %arg2[%c1_14, %c0_15, %c0_16] : memref<9x128x128xbf16, #tpu.memory_space<vmem>>, vector<1x128x128xbf16>
    %14 = vector.shape_cast %13 : vector<1x128x128xbf16> to vector<128x128xbf16>
    %cst_17 = arith.constant dense<0.000000e+00> : vector<32x128xf32>
    %15 = tpu.matmul %12, %14, %cst_17 {dimension_numbers = #tpu.dot_dimension_numbers<[1], [0], [0], [1], [0, 0, 1, 1], [], []>} : vector<32x128xbf16>, vector<128x128xbf16>, vector<32x128xf32> -> vector<32x128xf32>
    %16 = arith.addf %8, %15 : vector<32x128xf32>
    %c0_18 = arith.constant 0 : index
    %c0_19 = arith.constant 0 : index
    %c0_20 = arith.constant 0 : index
    %c0_21 = arith.constant 0 : index
    %c2 = arith.constant 2 : index
    %c0_22 = arith.constant 0 : index
    %17 = vector.load %arg1[%c0_18, %c0_19, %c0_20, %c0_21, %c2, %c0_22] : memref<1x1x1x6x10x128xf32, #tpu.memory_space<vmem>>, vector<1x1x1x4x8x128xf32>
    %18 = vector.shape_cast %17 : vector<1x1x1x4x8x128xf32> to vector<4x8x128xf32>
    %19 = vector.shape_cast %18 : vector<4x8x128xf32> to vector<32x128xf32>
    %20 = arith.truncf %19 : vector<32x128xf32> to vector<32x128xbf16>
    %c2_23 = arith.constant 2 : index
    %c0_24 = arith.constant 0 : index
    %c0_25 = arith.constant 0 : index
    %21 = vector.load %arg2[%c2_23, %c0_24, %c0_25] : memref<9x128x128xbf16, #tpu.memory_space<vmem>>, vector<1x128x128xbf16>
    %22 = vector.shape_cast %21 : vector<1x128x128xbf16> to vector<128x128xbf16>
    %cst_26 = arith.constant dense<0.000000e+00> : vector<32x128xf32>
    %23 = tpu.matmul %20, %22, %cst_26 {dimension_numbers = #tpu.dot_dimension_numbers<[1], [0], [0], [1], [0, 0, 1, 1], [], []>} : vector<32x128xbf16>, vector<128x128xbf16>, vector<32x128xf32> -> vector<32x128xf32>
    %24 = arith.addf %16, %23 : vector<32x128xf32>
    %c0_27 = arith.constant 0 : index
    %c0_28 = arith.constant 0 : index
    %c0_29 = arith.constant 0 : index
    %c1_30 = arith.constant 1 : index
    %c0_31 = arith.constant 0 : index
    %c0_32 = arith.constant 0 : index
    %25 = vector.load %arg1[%c0_27, %c0_28, %c0_29, %c1_30, %c0_31, %c0_32] : memref<1x1x1x6x10x128xf32, #tpu.memory_space<vmem>>, vector<1x1x1x4x8x128xf32>
    %26 = vector.shape_cast %25 : vector<1x1x1x4x8x128xf32> to vector<4x8x128xf32>
    %27 = vector.shape_cast %26 : vector<4x8x128xf32> to vector<32x128xf32>
    %28 = arith.truncf %27 : vector<32x128xf32> to vector<32x128xbf16>
    %c3 = arith.constant 3 : index
    %c0_33 = arith.constant 0 : index
    %c0_34 = arith.constant 0 : index
    %29 = vector.load %arg2[%c3, %c0_33, %c0_34] : memref<9x128x128xbf16, #tpu.memory_space<vmem>>, vector<1x128x128xbf16>
    %30 = vector.shape_cast %29 : vector<1x128x128xbf16> to vector<128x128xbf16>
    %cst_35 = arith.constant dense<0.000000e+00> : vector<32x128xf32>
    %31 = tpu.matmul %28, %30, %cst_35 {dimension_numbers = #tpu.dot_dimension_numbers<[1], [0], [0], [1], [0, 0, 1, 1], [], []>} : vector<32x128xbf16>, vector<128x128xbf16>, vector<32x128xf32> -> vector<32x128xf32>
    %32 = arith.addf %24, %31 : vector<32x128xf32>
    %c0_36 = arith.constant 0 : index
    %c0_37 = arith.constant 0 : index
    %c0_38 = arith.constant 0 : index
    %c1_39 = arith.constant 1 : index
    %c1_40 = arith.constant 1 : index
    %c0_41 = arith.constant 0 : index
    %33 = vector.load %arg1[%c0_36, %c0_37, %c0_38, %c1_39, %c1_40, %c0_41] : memref<1x1x1x6x10x128xf32, #tpu.memory_space<vmem>>, vector<1x1x1x4x8x128xf32>
    %34 = vector.shape_cast %33 : vector<1x1x1x4x8x128xf32> to vector<4x8x128xf32>
    %35 = vector.shape_cast %34 : vector<4x8x128xf32> to vector<32x128xf32>
    %36 = arith.truncf %35 : vector<32x128xf32> to vector<32x128xbf16>
    %c4 = arith.constant 4 : index
    %c0_42 = arith.constant 0 : index
    %c0_43 = arith.constant 0 : index
    %37 = vector.load %arg2[%c4, %c0_42, %c0_43] : memref<9x128x128xbf16, #tpu.memory_space<vmem>>, vector<1x128x128xbf16>
    %38 = vector.shape_cast %37 : vector<1x128x128xbf16> to vector<128x128xbf16>
    %cst_44 = arith.constant dense<0.000000e+00> : vector<32x128xf32>
    %39 = tpu.matmul %36, %38, %cst_44 {dimension_numbers = #tpu.dot_dimension_numbers<[1], [0], [0], [1], [0, 0, 1, 1], [], []>} : vector<32x128xbf16>, vector<128x128xbf16>, vector<32x128xf32> -> vector<32x128xf32>
    %40 = arith.addf %32, %39 : vector<32x128xf32>
    %c0_45 = arith.constant 0 : index
    %c0_46 = arith.constant 0 : index
    %c0_47 = arith.constant 0 : index
    %c1_48 = arith.constant 1 : index
    %c2_49 = arith.constant 2 : index
    %c0_50 = arith.constant 0 : index
    %41 = vector.load %arg1[%c0_45, %c0_46, %c0_47, %c1_48, %c2_49, %c0_50] : memref<1x1x1x6x10x128xf32, #tpu.memory_space<vmem>>, vector<1x1x1x4x8x128xf32>
    %42 = vector.shape_cast %41 : vector<1x1x1x4x8x128xf32> to vector<4x8x128xf32>
    %43 = vector.shape_cast %42 : vector<4x8x128xf32> to vector<32x128xf32>
    %44 = arith.truncf %43 : vector<32x128xf32> to vector<32x128xbf16>
    %c5 = arith.constant 5 : index
    %c0_51 = arith.constant 0 : index
    %c0_52 = arith.constant 0 : index
    %45 = vector.load %arg2[%c5, %c0_51, %c0_52] : memref<9x128x128xbf16, #tpu.memory_space<vmem>>, vector<1x128x128xbf16>
    %46 = vector.shape_cast %45 : vector<1x128x128xbf16> to vector<128x128xbf16>
    %cst_53 = arith.constant dense<0.000000e+00> : vector<32x128xf32>
    %47 = tpu.matmul %44, %46, %cst_53 {dimension_numbers = #tpu.dot_dimension_numbers<[1], [0], [0], [1], [0, 0, 1, 1], [], []>} : vector<32x128xbf16>, vector<128x128xbf16>, vector<32x128xf32> -> vector<32x128xf32>
    %48 = arith.addf %40, %47 : vector<32x128xf32>
    %c0_54 = arith.constant 0 : index
    %c0_55 = arith.constant 0 : index
    %c0_56 = arith.constant 0 : index
    %c2_57 = arith.constant 2 : index
    %c0_58 = arith.constant 0 : index
    %c0_59 = arith.constant 0 : index
    %49 = vector.load %arg1[%c0_54, %c0_55, %c0_56, %c2_57, %c0_58, %c0_59] : memref<1x1x1x6x10x128xf32, #tpu.memory_space<vmem>>, vector<1x1x1x4x8x128xf32>
    %50 = vector.shape_cast %49 : vector<1x1x1x4x8x128xf32> to vector<4x8x128xf32>
    %51 = vector.shape_cast %50 : vector<4x8x128xf32> to vector<32x128xf32>
    %52 = arith.truncf %51 : vector<32x128xf32> to vector<32x128xbf16>
    %c6 = arith.constant 6 : index
    %c0_60 = arith.constant 0 : index
    %c0_61 = arith.constant 0 : index
    %53 = vector.load %arg2[%c6, %c0_60, %c0_61] : memref<9x128x128xbf16, #tpu.memory_space<vmem>>, vector<1x128x128xbf16>
    %54 = vector.shape_cast %53 : vector<1x128x128xbf16> to vector<128x128xbf16>
    %cst_62 = arith.constant dense<0.000000e+00> : vector<32x128xf32>
    %55 = tpu.matmul %52, %54, %cst_62 {dimension_numbers = #tpu.dot_dimension_numbers<[1], [0], [0], [1], [0, 0, 1, 1], [], []>} : vector<32x128xbf16>, vector<128x128xbf16>, vector<32x128xf32> -> vector<32x128xf32>
    %56 = arith.addf %48, %55 : vector<32x128xf32>
    %c0_63 = arith.constant 0 : index
    %c0_64 = arith.constant 0 : index
    %c0_65 = arith.constant 0 : index
    %c2_66 = arith.constant 2 : index
    %c1_67 = arith.constant 1 : index
    %c0_68 = arith.constant 0 : index
    %57 = vector.load %arg1[%c0_63, %c0_64, %c0_65, %c2_66, %c1_67, %c0_68] : memref<1x1x1x6x10x128xf32, #tpu.memory_space<vmem>>, vector<1x1x1x4x8x128xf32>
    %58 = vector.shape_cast %57 : vector<1x1x1x4x8x128xf32> to vector<4x8x128xf32>
    %59 = vector.shape_cast %58 : vector<4x8x128xf32> to vector<32x128xf32>
    %60 = arith.truncf %59 : vector<32x128xf32> to vector<32x128xbf16>
    %c7 = arith.constant 7 : index
    %c0_69 = arith.constant 0 : index
    %c0_70 = arith.constant 0 : index
    %61 = vector.load %arg2[%c7, %c0_69, %c0_70] : memref<9x128x128xbf16, #tpu.memory_space<vmem>>, vector<1x128x128xbf16>
    %62 = vector.shape_cast %61 : vector<1x128x128xbf16> to vector<128x128xbf16>
    %cst_71 = arith.constant dense<0.000000e+00> : vector<32x128xf32>
    %63 = tpu.matmul %60, %62, %cst_71 {dimension_numbers = #tpu.dot_dimension_numbers<[1], [0], [0], [1], [0, 0, 1, 1], [], []>} : vector<32x128xbf16>, vector<128x128xbf16>, vector<32x128xf32> -> vector<32x128xf32>
    %64 = arith.addf %56, %63 : vector<32x128xf32>
    %c0_72 = arith.constant 0 : index
    %c0_73 = arith.constant 0 : index
    %c0_74 = arith.constant 0 : index
    %c2_75 = arith.constant 2 : index
    %c2_76 = arith.constant 2 : index
    %c0_77 = arith.constant 0 : index
    %65 = vector.load %arg1[%c0_72, %c0_73, %c0_74, %c2_75, %c2_76, %c0_77] : memref<1x1x1x6x10x128xf32, #tpu.memory_space<vmem>>, vector<1x1x1x4x8x128xf32>
    %66 = vector.shape_cast %65 : vector<1x1x1x4x8x128xf32> to vector<4x8x128xf32>
    %67 = vector.shape_cast %66 : vector<4x8x128xf32> to vector<32x128xf32>
    %68 = arith.truncf %67 : vector<32x128xf32> to vector<32x128xbf16>
    %c8 = arith.constant 8 : index
    %c0_78 = arith.constant 0 : index
    %c0_79 = arith.constant 0 : index
    %69 = vector.load %arg2[%c8, %c0_78, %c0_79] : memref<9x128x128xbf16, #tpu.memory_space<vmem>>, vector<1x128x128xbf16>
    %70 = vector.shape_cast %69 : vector<1x128x128xbf16> to vector<128x128xbf16>
    %cst_80 = arith.constant dense<0.000000e+00> : vector<32x128xf32>
    %71 = tpu.matmul %68, %70, %cst_80 {dimension_numbers = #tpu.dot_dimension_numbers<[1], [0], [0], [1], [0, 0, 1, 1], [], []>} : vector<32x128xbf16>, vector<128x128xbf16>, vector<32x128xf32> -> vector<32x128xf32>
    %72 = arith.addf %64, %71 : vector<32x128xf32>
    %c0_81 = arith.constant 0 : index
    %c0_82 = arith.constant 0 : index
    %73 = vector.load %arg3[%c0_81, %c0_82] : memref<1x128xf32, #tpu.memory_space<vmem>>, vector<1x128xf32>
    %74 = vector.broadcast %73 : vector<1x128xf32> to vector<32x128xf32>
    %75 = arith.addf %72, %74 : vector<32x128xf32>
    %cst_83 = arith.constant 0.000000e+00 : f32
    %76 = vector.broadcast %cst_83 : f32 to vector<32x128xf32>
    %77 = arith.maximumf %75, %76 : vector<32x128xf32>
    %c0_84 = arith.constant 0 : index
    %c0_85 = arith.constant 0 : index
    %c0_86 = arith.constant 0 : index
    %78 = vector.load %arg4[%c0_84, %c0_85, %c0_86] : memref<1x32x128xf32, #tpu.memory_space<vmem>>, vector<1x32x128xf32>
    %79 = vector.shape_cast %78 : vector<1x32x128xf32> to vector<32x128xf32>
    %80 = vector.shape_cast %77 : vector<32x128xf32> to vector<1x32x128xf32>
    tpu.vector_store %arg4[%c0_84, %c0_85, %c0_86], %80 {strides = array<i32>} : memref<1x32x128xf32, #tpu.memory_space<vmem>>, vector<1x32x128xf32>,
    return
  }
  func.func @transform_0(%arg0: i32) -> (i32, i32, i32, i32, i32, i32) {
    %c0_i32 = arith.constant 0 : i32
    %c0_i32_0 = arith.constant 0 : i32
    %c0_i32_1 = arith.constant 0 : i32
    %c0_i32_2 = arith.constant 0 : i32
    %c0_i32_3 = arith.constant 0 : i32
    %c0_i32_4 = arith.constant 0 : i32
    return %c0_i32, %c0_i32_0, %arg0, %c0_i32_1, %c0_i32_2, %c0_i32_3 : i32, i32, i32, i32, i32, i32
  }
  func.func @transform_1(%arg0: i32) -> (i32, i32, i32) {
    %c0_i32 = arith.constant 0 : i32
    %c0_i32_0 = arith.constant 0 : i32
    %c0_i32_1 = arith.constant 0 : i32
    %c0_i32_2 = arith.constant 0 : i32
    return %c0_i32, %c0_i32_0, %c0_i32_1 : i32, i32, i32
  }
  func.func @transform_2(%arg0: i32) -> (i32, i32) {
    %c0_i32 = arith.constant 0 : i32
    %c0_i32_0 = arith.constant 0 : i32
    %c0_i32_1 = arith.constant 0 : i32
    return %c0_i32, %c0_i32_0 : i32, i32
  }
  func.func @transform_3(%arg0: i32) -> (i32, i32, i32) {
    %c0_i32 = arith.constant 0 : i32
    %c0_i32_0 = arith.constant 0 : i32
    %c0_i32_1 = arith.constant 0 : i32
    return %arg0, %c0_i32, %c0_i32_0 : i32, i32, i32
  }
}

module attributes {stable_mosaic.version = 11 : i64} {
  func.func @_matmul_bias_kernel(%arg0: i32, %arg1: i32, %arg2: i32, %arg3: memref<2x512xf32, #tpu.memory_space<vmem>>, %arg4: memref<512x128xbf16, #tpu.memory_space<vmem>>, %arg5: memref<1x128xf32, #tpu.memory_space<vmem>>, %arg6: memref<2x128xf32, #tpu.memory_space<vmem>>, %arg7: memref<2x128xf32, #tpu.memory_space<vmem>>) attributes {dimension_semantics = [#tpu.dimension_semantics<parallel>, #tpu.dimension_semantics<parallel>, #tpu.dimension_semantics<arbitrary>], iteration_bounds = array<i64: 1, 1, 4>, scalar_prefetch = 0 : i64, scratch_operands = 1 : i64, tpu.core_type = #tpu.core_type<tc>, window_params = [{transform_indices = @transform_0, window_bounds = array<i64: 2, 512>}, {transform_indices = @transform_1, window_bounds = array<i64: 512, 128>}, {transform_indices = @transform_2, window_bounds = array<i64: 1, 128>}, {transform_indices = @transform_3, window_bounds = array<i64: 2, 128>}]} {
    %c0_i32 = arith.constant 0 : i32
    %0 = arith.cmpi eq, %arg2, %c0_i32 : i32
    %1 = arith.extui %0 : i1 to i32
    %c0_i32_0 = arith.constant 0 : i32
    %2 = arith.cmpi ne, %1, %c0_i32_0 : i32
    scf.if %2 {
      %cst_9 = arith.constant 0.000000e+00 : f32
      %13 = vector.broadcast %cst_9 : f32 to vector<2x128xf32>
      %c0_10 = arith.constant 0 : index
      %c0_11 = arith.constant 0 : index
      %14 = vector.load %arg7[%c0_10, %c0_11] : memref<2x128xf32, #tpu.memory_space<vmem>>, vector<2x128xf32>
      tpu.vector_store %arg7[%c0_10, %c0_11], %13 {strides = array<i32>} : memref<2x128xf32, #tpu.memory_space<vmem>>, vector<2x128xf32>,
    } else {
    }
    %c0 = arith.constant 0 : index
    %c0_1 = arith.constant 0 : index
    %3 = vector.load %arg3[%c0, %c0_1] : memref<2x512xf32, #tpu.memory_space<vmem>>, vector<2x512xf32>
    %4 = arith.truncf %3 : vector<2x512xf32> to vector<2x512xbf16>
    %c0_2 = arith.constant 0 : index
    %c0_3 = arith.constant 0 : index
    %5 = vector.load %arg7[%c0_2, %c0_3] : memref<2x128xf32, #tpu.memory_space<vmem>>, vector<2x128xf32>
    %c0_4 = arith.constant 0 : index
    %c0_5 = arith.constant 0 : index
    %6 = vector.load %arg4[%c0_4, %c0_5] : memref<512x128xbf16, #tpu.memory_space<vmem>>, vector<512x128xbf16>
    %cst = arith.constant dense<0.000000e+00> : vector<2x128xf32>
    %7 = tpu.matmul %4, %6, %cst {dimension_numbers = #tpu.dot_dimension_numbers<[1], [0], [0], [1], [0, 0, 1, 1], [], []>} : vector<2x512xbf16>, vector<512x128xbf16>, vector<2x128xf32> -> vector<2x128xf32>
    %8 = arith.addf %5, %7 : vector<2x128xf32>
    %c0_6 = arith.constant 0 : index
    %c0_7 = arith.constant 0 : index
    %9 = vector.load %arg7[%c0_6, %c0_7] : memref<2x128xf32, #tpu.memory_space<vmem>>, vector<2x128xf32>
    tpu.vector_store %arg7[%c0_6, %c0_7], %8 {strides = array<i32>} : memref<2x128xf32, #tpu.memory_space<vmem>>, vector<2x128xf32>,
    %c3_i32 = arith.constant 3 : i32
    %10 = arith.cmpi eq, %arg2, %c3_i32 : i32
    %11 = arith.extui %10 : i1 to i32
    %c0_i32_8 = arith.constant 0 : i32
    %12 = arith.cmpi ne, %11, %c0_i32_8 : i32
    scf.if %12 {
      %c0_9 = arith.constant 0 : index
      %c0_10 = arith.constant 0 : index
      %13 = vector.load %arg7[%c0_9, %c0_10] : memref<2x128xf32, #tpu.memory_space<vmem>>, vector<2x128xf32>
      %c0_11 = arith.constant 0 : index
      %c0_12 = arith.constant 0 : index
      %14 = vector.load %arg5[%c0_11, %c0_12] : memref<1x128xf32, #tpu.memory_space<vmem>>, vector<1x128xf32>
      %15 = vector.broadcast %14 : vector<1x128xf32> to vector<2x128xf32>
      %16 = arith.addf %13, %15 : vector<2x128xf32>
      %c0_13 = arith.constant 0 : index
      %c0_14 = arith.constant 0 : index
      %17 = vector.load %arg6[%c0_13, %c0_14] : memref<2x128xf32, #tpu.memory_space<vmem>>, vector<2x128xf32>
      tpu.vector_store %arg6[%c0_13, %c0_14], %16 {strides = array<i32>} : memref<2x128xf32, #tpu.memory_space<vmem>>, vector<2x128xf32>,
    } else {
    }
    return
  }
  func.func @transform_0(%arg0: i32, %arg1: i32, %arg2: i32) -> (i32, i32) {
    %c0_i32 = arith.constant 0 : i32
    return %arg0, %arg2 : i32, i32
  }
  func.func @transform_1(%arg0: i32, %arg1: i32, %arg2: i32) -> (i32, i32) {
    %c0_i32 = arith.constant 0 : i32
    return %arg2, %arg1 : i32, i32
  }
  func.func @transform_2(%arg0: i32, %arg1: i32, %arg2: i32) -> (i32, i32) {
    %c0_i32 = arith.constant 0 : i32
    %c0_i32_0 = arith.constant 0 : i32
    return %c0_i32, %arg1 : i32, i32
  }
  func.func @transform_3(%arg0: i32, %arg1: i32, %arg2: i32) -> (i32, i32) {
    %c0_i32 = arith.constant 0 : i32
    return %arg0, %arg1 : i32, i32
  }
}

</mosaic_0001>

<llo_original>
// kernel: var_encoder_forward.4
$region0: #{var_encoder_forward.4}
  #allocation0 [shape = 'u32[]', space=smem, size = 0x4, offset = 0x4, fixed_abs, tag = 'smem constant byte address 0x4 - core index']
  #allocation1 [shape = 'u32[144,128]{1,0:T(1,128)}', space=vmem, size = 0x12000, scoped, tag = 'internal scratch']
  %s0 = inlined_call_operand.vmem [shape: f32[2,2,2,9,9,8], index: 0, kind: input, shape index: {}]
  %s1 = inlined_call_operand.vmem [shape: bf16[9,8,128], index: 1, kind: input, shape index: {}]
  %s2 = inlined_call_operand.vmem [shape: f32[1,128], index: 2, kind: input, shape index: {}]
  %s3 = inlined_call_operand.vmem [shape: f32[2,64,128], index: 3, kind: output, shape index: {}]
  %s4 = sld [smem:[#allocation0]]
  $region83: #{var_encoder_forward.4} parent=0
    _
  %s6 = ssub.s32 1, %s4
  %s7 = scalar_select 0, %s6, %s4
  $region1: #{var_encoder_forward.4} parent=0
    #allocation2 [shape = 'u8[589824]{0}', space=vmem, size = 0x90000, scoped, tag = 'input window, operand 0']
    loop: start=0, step=1, limit=4
    $region2: #{var_encoder_forward.4} parent=1 // loop_pre_header
      _
    $region3: #{var_encoder_forward.4} parent=1 // loop_header
      %s9 = sphi 0, %s13
      %p10 = scmp.ge.s32.totalorder %s9, 4
      %s19 = sphi 0, %s21
      %s22 = sphi 0, %s19
      %s23 = sphi 0, %s22
      %s39 = sphi 0, %s23
      %s43 = sphi 0, %s43
      %s45 = sphi 0, %s43
      %s46 = sphi 0, %s45
      %s60 = sphi 0, %s46
      %s64 = sphi 0, %s64
      %s66 = sphi 0, %s64
      %s67 = sphi 0, %s66
      %s81 = sphi 0, %s67
      %s87 = sphi 0, %s89
      %s90 = sphi 0, %s87
      %s91 = sphi 0, %s90
      %s107 = sphi 0, %s91
    $region4: #{var_encoder_forward.4} parent=1 // loop_header_branch
      %12 = sbr.rel (%p10) target = $region8
    $region5: #{var_encoder_forward.4} parent=1 // loop_body
      %s14 = ssub.s32 %s9, 1
      %s15 = ssub.s32 %s9, 2
      %s16 = sadd.s32 %s9, 1
      %s17 = ssub.s32 %s9, %s16
      %p18 = scmp.eq.s32.totalorder %s17, 0
      %s20 = sadd.s32 %s19, 1
      %s21 = scalar_select %p18, %s19, %s20
      %p24 = pneg %p18
      %p25 = scmp.eq.s32.totalorder %s9, 1
      %p26 = por %p24, %p25
      %p27 = scmp.ne.s32.totalorder %s19, %s22
      %p28 = scmp.eq.s32.totalorder %s9, 0
      %p29 = por %p27, %p28
      %p30 = scmp.ne.s32.totalorder %s19, %s22
      %p31 = scmp.eq.s32.totalorder %s14, 1
      %p32 = por %p30, %p31
      %p33 = scmp.ne.s32.totalorder %s22, %s23
      %p34 = scmp.eq.s32.totalorder %s14, 0
      %p35 = por %p33, %p34
      %p36 = scmp.ne.s32.totalorder %s22, %s23
      %p37 = scmp.eq.s32.totalorder %s15, 1
      %p38 = por %p36, %p37
      %p40 = scmp.ne.s32.totalorder %s23, %s39
      %p41 = scmp.eq.s32.totalorder %s15, 0
      %p42 = por %p40, %p41
      %s44 = sadd.s32 %s43, 1
      %p47 = scmp.eq.s32.totalorder %s9, 1
      %p48 = scmp.ne.s32.totalorder %s43, %s45
      %p49 = scmp.eq.s32.totalorder %s9, 0
      %p50 = por %p48, %p49
      %p51 = scmp.ne.s32.totalorder %s43, %s45
      %p52 = scmp.eq.s32.totalorder %s14, 1
      %p53 = por %p51, %p52
      %p54 = scmp.ne.s32.totalorder %s45, %s46
      %p55 = scmp.eq.s32.totalorder %s14, 0
      %p56 = por %p54, %p55
      %p57 = scmp.ne.s32.totalorder %s45, %s46
      %p58 = scmp.eq.s32.totalorder %s15, 1
      %p59 = por %p57, %p58
      %p61 = scmp.ne.s32.totalorder %s46, %s60
      %p62 = scmp.eq.s32.totalorder %s15, 0
      %p63 = por %p61, %p62
      %s65 = sadd.s32 %s64, 1
      %p68 = scmp.eq.s32.totalorder %s9, 1
      %p69 = scmp.ne.s32.totalorder %s64, %s66
      %p70 = scmp.eq.s32.totalorder %s9, 0
      %p71 = por %p69, %p70
      %p72 = scmp.ne.s32.totalorder %s64, %s66
      %p73 = scmp.eq.s32.totalorder %s14, 1
      %p74 = por %p72, %p73
      %p75 = scmp.ne.s32.totalorder %s66, %s67
      %p76 = scmp.eq.s32.totalorder %s14, 0
      %p77 = por %p75, %p76
      %p78 = scmp.ne.s32.totalorder %s66, %s67
      %p79 = scmp.eq.s32.totalorder %s15, 1
      %p80 = por %p78, %p79
      %p82 = scmp.ne.s32.totalorder %s67, %s81
      %p83 = scmp.eq.s32.totalorder %s15, 0
      %p84 = por %p82, %p83
      %s85 = ssub.s32 %s9, %s16
      %p86 = scmp.eq.s32.totalorder %s85, 0
      %s88 = sadd.s32 %s87, 1
      %s89 = scalar_select %p86, %s87, %s88
      %p92 = pneg %p86
      %p93 = scmp.eq.s32.totalorder %s9, 1
      %p94 = por %p92, %p93
      %p95 = scmp.ne.s32.totalorder %s87, %s90
      %p96 = scmp.eq.s32.totalorder %s9, 0
      %p97 = por %p95, %p96
      %p98 = scmp.ne.s32.totalorder %s87, %s90
      %p99 = scmp.eq.s32.totalorder %s14, 1
      %p100 = por %p98, %p99
      %p101 = scmp.ne.s32.totalorder %s90, %s91
      %p102 = scmp.eq.s32.totalorder %s14, 0
      %p103 = por %p101, %p102
      %p104 = scmp.ne.s32.totalorder %s90, %s91
      %p105 = scmp.eq.s32.totalorder %s15, 1
      %p106 = por %p104, %p105
      %p108 = scmp.ne.s32.totalorder %s91, %s107
      %p109 = scmp.eq.s32.totalorder %s15, 0
      %p110 = por %p108, %p109
      %p111 = scmp.le.s32.totalorder 1, %s9
      %p112 = scmp.lt.s32.totalorder %s9, 3
      %p113 = pnand %p111, %p112
      %p114 = pneg %p113
      // Predicated region
      $region9: #{var_encoder_forward.4} parent=5 // pred_check
        _
      $region10: #{var_encoder_forward.4} parent=5 // pred_check_branch
        %116 = sbr.rel (%p113) target = $region12
      $region11: #{var_encoder_forward.4} parent=5 // pred_region
        %s117 = ssub.s32 %s9, 1
        // Predicated region
        $region13: #{var_encoder_forward.4} parent=11 // pred_check
          %p118 = pneg %p56
        $region14: #{var_encoder_forward.4} parent=11 // pred_check_branch
          %120 = sbr.rel (%p118) target = $region16
        $region15: #{var_encoder_forward.4} parent=11 // pred_region
          _
        $region16: #{var_encoder_forward.4} parent=11 // pred_fallthru
          _
        // Predicated region
        $region17: #{var_encoder_forward.4} parent=11 // pred_check
          %p121 = pneg %p77
        $region18: #{var_encoder_forward.4} parent=11 // pred_check_branch
          %123 = sbr.rel (%p121) target = $region20
        $region19: #{var_encoder_forward.4} parent=11 // pred_region
          _
        $region20: #{var_encoder_forward.4} parent=11 // pred_fallthru
          _
      $region12: #{var_encoder_forward.4} parent=5 // pred_fallthru
        _
      %p124 = scmp.lt.s32.totalorder %s9, 2
      // Predicated region
      $region21: #{var_encoder_forward.4} parent=5 // pred_check
        %p125 = pneg %p124
      $region22: #{var_encoder_forward.4} parent=5 // pred_check_branch
        %127 = sbr.rel (%p125) target = $region24
      $region23: #{var_encoder_forward.4} parent=5 // pred_region
        // Predicated region
        $region25: #{var_encoder_forward.4} parent=23 // pred_check
          %p128 = pneg %p29
        $region26: #{var_encoder_forward.4} parent=23 // pred_check_branch
          %130 = sbr.rel (%p128) target = $region28
        $region27: #{var_encoder_forward.4} parent=23 // pred_region
          %s131 = sand.u32 %s19, 1
          %s132 = sand.u32 %s19, 1
          %s133 = smul.addr %s132, 576
          %s134 = scalar_lea.vmem [#allocation2], %s133
          %s135 = smul.addr %s9, 18
          %s136 = smul.addr %s135, 8
          %s137 = scalar_lea.vmem %s0, %s136
          // Predicated region
          $region29: #{var_encoder_forward.4} parent=27 // pred_check
            _
          $region30: #{var_encoder_forward.4} parent=27 // pred_check_branch
            %139 = sbr.rel (0) target = $region32
          $region31: #{var_encoder_forward.4} parent=27 // pred_region
            // Predicated region
            $region33: #{var_encoder_forward.4} parent=31 // pred_check
              _
            $region34: #{var_encoder_forward.4} parent=31 // pred_check_branch
              %141 = sbr.rel (0) target = $region36
            $region35: #{var_encoder_forward.4} parent=31 // pred_region
              // Predicated region
              $region48: #{var_encoder_forward.4} parent=35 // pred_check
                _
              $region49: #{var_encoder_forward.4} parent=35 // pred_check_branch
                %298 = sbr.rel (0) target = $region51
              $region50: #{var_encoder_forward.4} parent=35 // pred_region
                loop: start=0, step=1, limit=1
                $region52: #{var_encoder_forward.4} parent=50 // loop_pre_header
                  _
                $region53: #{var_encoder_forward.4} parent=50 // loop_header
                  %s300 = sphi 0, %s304
                  %p301 = scmp.ge.s32.totalorder %s300, 1
                  %s305 = sphi %s137, %s137
                  %s306 = sphi %s134, %s134
                $region54: #{var_encoder_forward.4} parent=50 // loop_header_branch
                  %303 = sbr.rel (%p301) target = $region58
                $region55: #{var_encoder_forward.4} parent=50 // loop_body
                  %v307 = vld [vmem:[%s305] sm:$0xff]
                  %308 = vst [vmem:[%s306] sm:$0xff] %v307
                  %v309 = vld [vmem:[%s305 + $0x8] sm:$0xff]
                  %310 = vst [vmem:[%s306 + $0x8] sm:$0xff] %v309
                  %v311 = vld [vmem:[%s305 + $0x10] sm:$0xff]
                  %312 = vst [vmem:[%s306 + $0x10] sm:$0xff] %v311
                  %v313 = vld [vmem:[%s305 + $0x18] sm:$0xff]
                  %314 = vst [vmem:[%s306 + $0x18] sm:$0xff] %v313
                  %v315 = vld [vmem:[%s305 + $0x20] sm:$0xff]
                  %316 = vst [vmem:[%s306 + $0x20] sm:$0xff] %v315
                  %v317 = vld [vmem:[%s305 + $0x28] sm:$0xff]
                  %318 = vst [vmem:[%s306 + $0x28] sm:$0xff] %v317
                  %v319 = vld [vmem:[%s305 + $0x30] sm:$0xff]
                  %320 = vst [vmem:[%s306 + $0x30] sm:$0xff] %v319
                  %v321 = vld [vmem:[%s305 + $0x38] sm:$0xff]
                  %322 = vst [vmem:[%s306 + $0x38] sm:$0xff] %v321
                  %v323 = vld [vmem:[%s305 + $0x40] sm:$0xff]
                  %324 = vst [vmem:[%s306 + $0x40] sm:$0xff] %v323
                  %v325 = vld [vmem:[%s305 + $0x48] sm:$0xff]
                  %326 = vst [vmem:[%s306 + $0x48] sm:$0xff] %v325
                  %v327 = vld [vmem:[%s305 + $0x50] sm:$0xff]
                  %328 = vst [vmem:[%s306 + $0x50] sm:$0xff] %v327
                  %v329 = vld [vmem:[%s305 + $0x58] sm:$0xff]
                  %330 = vst [vmem:[%s306 + $0x58] sm:$0xff] %v329
                  %v331 = vld [vmem:[%s305 + $0x60] sm:$0xff]
                  %332 = vst [vmem:[%s306 + $0x60] sm:$0xff] %v331
                  %v333 = vld [vmem:[%s305 + $0x68] sm:$0xff]
                  %334 = vst [vmem:[%s306 + $0x68] sm:$0xff] %v333
                  %v335 = vld [vmem:[%s305 + $0x70] sm:$0xff]
                  %336 = vst [vmem:[%s306 + $0x70] sm:$0xff] %v335
                  %v337 = vld [vmem:[%s305 + $0x78] sm:$0xff]
                  %338 = vst [vmem:[%s306 + $0x78] sm:$0xff] %v337
                  %v339 = vld [vmem:[%s305 + $0x80] sm:$0xff]
                  %340 = vst [vmem:[%s306 + $0x80] sm:$0xff] %v339
                  %v341 = vld [vmem:[%s305 + $0x88] sm:$0xff]
                  %342 = vst [vmem:[%s306 + $0x88] sm:$0xff] %v341
                  %v343 = vld [vmem:[%s305 + $0x120] sm:$0xff]
                  %344 = vst [vmem:[%s306 + $0x90] sm:$0xff] %v343
                  %v345 = vld [vmem:[%s305 + $0x128] sm:$0xff]
                  %346 = vst [vmem:[%s306 + $0x98] sm:$0xff] %v345
                  %v347 = vld [vmem:[%s305 + $0x130] sm:$0xff]
                  %348 = vst [vmem:[%s306 + $0xa0] sm:$0xff] %v347
                  %v349 = vld [vmem:[%s305 + $0x138] sm:$0xff]
                  %350 = vst [vmem:[%s306 + $0xa8] sm:$0xff] %v349
                  %v351 = vld [vmem:[%s305 + $0x140] sm:$0xff]
                  %352 = vst [vmem:[%s306 + $0xb0] sm:$0xff] %v351
                  %v353 = vld [vmem:[%s305 + $0x148] sm:$0xff]
                  %354 = vst [vmem:[%s306 + $0xb8] sm:$0xff] %v353
                  %v355 = vld [vmem:[%s305 + $0x150] sm:$0xff]
                  %356 = vst [vmem:[%s306 + $0xc0] sm:$0xff] %v355
                  %v357 = vld [vmem:[%s305 + $0x158] sm:$0xff]
                  %358 = vst [vmem:[%s306 + $0xc8] sm:$0xff] %v357
                  %v359 = vld [vmem:[%s305 + $0x160] sm:$0xff]
                  %360 = vst [vmem:[%s306 + $0xd0] sm:$0xff] %v359
                  %v361 = vld [vmem:[%s305 + $0x168] sm:$0xff]
                  %362 = vst [vmem:[%s306 + $0xd8] sm:$0xff] %v361
                  %v363 = vld [vmem:[%s305 + $0x170] sm:$0xff]
                  %364 = vst [vmem:[%s306 + $0xe0] sm:$0xff] %v363
                  %v365 = vld [vmem:[%s305 + $0x178] sm:$0xff]
                  %366 = vst [vmem:[%s306 + $0xe8] sm:$0xff] %v365
                  %v367 = vld [vmem:[%s305 + $0x180] sm:$0xff]
                  %368 = vst [vmem:[%s306 + $0xf0] sm:$0xff] %v367
                  %v369 = vld [vmem:[%s305 + $0x188] sm:$0xff]
                  %370 = vst [vmem:[%s306 + $0xf8] sm:$0xff] %v369
                  %v371 = vld [vmem:[%s305 + $0x190] sm:$0xff]
                  %372 = vst [vmem:[%s306 + $0x100] sm:$0xff] %v371
                  %v373 = vld [vmem:[%s305 + $0x198] sm:$0xff]
                  %374 = vst [vmem:[%s306 + $0x108] sm:$0xff] %v373
                  %v375 = vld [vmem:[%s305 + $0x1a0] sm:$0xff]
                  %376 = vst [vmem:[%s306 + $0x110] sm:$0xff] %v375
                  %v377 = vld [vmem:[%s305 + $0x1a8] sm:$0xff]
                  %378 = vst [vmem:[%s306 + $0x118] sm:$0xff] %v377
                  %v379 = vld [vmem:[%s305 + $0x240] sm:$0xff]
                  %380 = vst [vmem:[%s306 + $0x120] sm:$0xff] %v379
                  %v381 = vld [vmem:[%s305 + $0x248] sm:$0xff]
                  %382 = vst [vmem:[%s306 + $0x128] sm:$0xff] %v381
                  %v383 = vld [vmem:[%s305 + $0x250] sm:$0xff]
                  %384 = vst [vmem:[%s306 + $0x130] sm:$0xff] %v383
                  %v385 = vld [vmem:[%s305 + $0x258] sm:$0xff]
                  %386 = vst [vmem:[%s306 + $0x138] sm:$0xff] %v385
                  %v387 = vld [vmem:[%s305 + $0x260] sm:$0xff]
                  %388 = vst [vmem:[%s306 + $0x140] sm:$0xff] %v387
                  %v389 = vld [vmem:[%s305 + $0x268] sm:$0xff]
                  %390 = vst [vmem:[%s306 + $0x148] sm:$0xff] %v389
                  %v391 = vld [vmem:[%s305 + $0x270] sm:$0xff]
                  %392 = vst [vmem:[%s306 + $0x150] sm:$0xff] %v391
                  %v393 = vld [vmem:[%s305 + $0x278] sm:$0xff]
                  %394 = vst [vmem:[%s306 + $0x158] sm:$0xff] %v393
                  %v395 = vld [vmem:[%s305 + $0x280] sm:$0xff]
                  %396 = vst [vmem:[%s306 + $0x160] sm:$0xff] %v395
                  %v397 = vld [vmem:[%s305 + $0x288] sm:$0xff]
                  %398 = vst [vmem:[%s306 + $0x168] sm:$0xff] %v397
                  %v399 = vld [vmem:[%s305 + $0x290] sm:$0xff]
                  %400 = vst [vmem:[%s306 + $0x170] sm:$0xff] %v399
                  %v401 = vld [vmem:[%s305 + $0x298] sm:$0xff]
                  %402 = vst [vmem:[%s306 + $0x178] sm:$0xff] %v401
                  %v403 = vld [vmem:[%s305 + $0x2a0] sm:$0xff]
                  %404 = vst [vmem:[%s306 + $0x180] sm:$0xff] %v403
                  %v405 = vld [vmem:[%s305 + $0x2a8] sm:$0xff]
                  %406 = vst [vmem:[%s306 + $0x188] sm:$0xff] %v405
                  %v407 = vld [vmem:[%s305 + $0x2b0] sm:$0xff]
                  %408 = vst [vmem:[%s306 + $0x190] sm:$0xff] %v407
                  %v409 = vld [vmem:[%s305 + $0x2b8] sm:$0xff]
                  %410 = vst [vmem:[%s306 + $0x198] sm:$0xff] %v409
                  %v411 = vld [vmem:[%s305 + $0x2c0] sm:$0xff]
                  %412 = vst [vmem:[%s306 + $0x1a0] sm:$0xff] %v411
                  %v413 = vld [vmem:[%s305 + $0x2c8] sm:$0xff]
                  %414 = vst [vmem:[%s306 + $0x1a8] sm:$0xff] %v413
                  %v415 = vld [vmem:[%s305 + $0x360] sm:$0xff]
                  %416 = vst [vmem:[%s306 + $0x1b0] sm:$0xff] %v415
                  %v417 = vld [vmem:[%s305 + $0x368] sm:$0xff]
                  %418 = vst [vmem:[%s306 + $0x1b8] sm:$0xff] %v417
                  %v419 = vld [vmem:[%s305 + $0x370] sm:$0xff]
                  %420 = vst [vmem:[%s306 + $0x1c0] sm:$0xff] %v419
                  %v421 = vld [vmem:[%s305 + $0x378] sm:$0xff]
                  %422 = vst [vmem:[%s306 + $0x1c8] sm:$0xff] %v421
                  %v423 = vld [vmem:[%s305 + $0x380] sm:$0xff]
                  %424 = vst [vmem:[%s306 + $0x1d0] sm:$0xff] %v423
                  %v425 = vld [vmem:[%s305 + $0x388] sm:$0xff]
                  %426 = vst [vmem:[%s306 + $0x1d8] sm:$0xff] %v425
                  %v427 = vld [vmem:[%s305 + $0x390] sm:$0xff]
                  %428 = vst [vmem:[%s306 + $0x1e0] sm:$0xff] %v427
                  %v429 = vld [vmem:[%s305 + $0x398] sm:$0xff]
                  %430 = vst [vmem:[%s306 + $0x1e8] sm:$0xff] %v429
                  %v431 = vld [vmem:[%s305 + $0x3a0] sm:$0xff]
                  %432 = vst [vmem:[%s306 + $0x1f0] sm:$0xff] %v431
                  %v433 = vld [vmem:[%s305 + $0x3a8] sm:$0xff]
                  %434 = vst [vmem:[%s306 + $0x1f8] sm:$0xff] %v433
                  %v435 = vld [vmem:[%s305 + $0x3b0] sm:$0xff]
                  %436 = vst [vmem:[%s306 + $0x200] sm:$0xff] %v435
                  %v437 = vld [vmem:[%s305 + $0x3b8] sm:$0xff]
                  %438 = vst [vmem:[%s306 + $0x208] sm:$0xff] %v437
                  %v439 = vld [vmem:[%s305 + $0x3c0] sm:$0xff]
                  %440 = vst [vmem:[%s306 + $0x210] sm:$0xff] %v439
                  %v441 = vld [vmem:[%s305 + $0x3c8] sm:$0xff]
                  %442 = vst [vmem:[%s306 + $0x218] sm:$0xff] %v441
                  %v443 = vld [vmem:[%s305 + $0x3d0] sm:$0xff]
                  %444 = vst [vmem:[%s306 + $0x220] sm:$0xff] %v443
                  %v445 = vld [vmem:[%s305 + $0x3d8] sm:$0xff]
                  %446 = vst [vmem:[%s306 + $0x228] sm:$0xff] %v445
                  %v447 = vld [vmem:[%s305 + $0x3e0] sm:$0xff]
                  %448 = vst [vmem:[%s306 + $0x230] sm:$0xff] %v447
                  %v449 = vld [vmem:[%s305 + $0x3e8] sm:$0xff]
                  %450 = vst [vmem:[%s306 + $0x238] sm:$0xff] %v449
                $region56: #{var_encoder_forward.4} parent=50 // loop_footer
                  %s304 = sadd.s32 1, %s300
                $region57: #{var_encoder_forward.4} parent=50 // loop_footer_branch
                  %299 = sbr.rel target = $region53
                $region58: #{var_encoder_forward.4} parent=50 // loop_exit
                  _
              $region51: #{var_encoder_forward.4} parent=35 // pred_fallthru
                _
              // Predicated region
              $region59: #{var_encoder_forward.4} parent=35 // pred_check
                _
              $region60: #{var_encoder_forward.4} parent=35 // pred_check_branch
                %452 = sbr.rel target = $region62
              $region61: #{var_encoder_forward.4} parent=35 // pred_region
                _
              $region62: #{var_encoder_forward.4} parent=35 // pred_fallthru
                _
            $region36: #{var_encoder_forward.4} parent=31 // pred_fallthru
              _
            // Predicated region
            $region37: #{var_encoder_forward.4} parent=31 // pred_check
              _
            $region38: #{var_encoder_forward.4} parent=31 // pred_check_branch
              %143 = sbr.rel target = $region40
            $region39: #{var_encoder_forward.4} parent=31 // pred_region
              loop: start=0, step=1, limit=1
              $region41: #{var_encoder_forward.4} parent=39 // loop_pre_header
                _
              $region42: #{var_encoder_forward.4} parent=39 // loop_header
                %s146 = sphi 0, %s150
                %p147 = scmp.ge.s32.totalorder %s146, 1
                %s151 = sphi %s137, %s137
                %s152 = sphi %s134, %s134
              $region43: #{var_encoder_forward.4} parent=39 // loop_header_branch
                %149 = sbr.rel (%p147) target = $region47
              $region44: #{var_encoder_forward.4} parent=39 // loop_body
                %v153 = vld [vmem:[%s151] sm:$0xff]
                %154 = vst [vmem:[%s152] sm:$0xff] %v153
                %v155 = vld [vmem:[%s151 + $0x8] sm:$0xff]
                %156 = vst [vmem:[%s152 + $0x8] sm:$0xff] %v155
                %v157 = vld [vmem:[%s151 + $0x10] sm:$0xff]
                %158 = vst [vmem:[%s152 + $0x10] sm:$0xff] %v157
                %v159 = vld [vmem:[%s151 + $0x18] sm:$0xff]
                %160 = vst [vmem:[%s152 + $0x18] sm:$0xff] %v159
                %v161 = vld [vmem:[%s151 + $0x20] sm:$0xff]
                %162 = vst [vmem:[%s152 + $0x20] sm:$0xff] %v161
                %v163 = vld [vmem:[%s151 + $0x28] sm:$0xff]
                %164 = vst [vmem:[%s152 + $0x28] sm:$0xff] %v163
                %v165 = vld [vmem:[%s151 + $0x30] sm:$0xff]
                %166 = vst [vmem:[%s152 + $0x30] sm:$0xff] %v165
                %v167 = vld [vmem:[%s151 + $0x38] sm:$0xff]
                %168 = vst [vmem:[%s152 + $0x38] sm:$0xff] %v167
                %v169 = vld [vmem:[%s151 + $0x40] sm:$0xff]
                %170 = vst [vmem:[%s152 + $0x40] sm:$0xff] %v169
                %v171 = vld [vmem:[%s151 + $0x48] sm:$0xff]
                %172 = vst [vmem:[%s152 + $0x48] sm:$0xff] %v171
                %v173 = vld [vmem:[%s151 + $0x50] sm:$0xff]
                %174 = vst [vmem:[%s152 + $0x50] sm:$0xff] %v173
                %v175 = vld [vmem:[%s151 + $0x58] sm:$0xff]
                %176 = vst [vmem:[%s152 + $0x58] sm:$0xff] %v175
                %v177 = vld [vmem:[%s151 + $0x60] sm:$0xff]
                %178 = vst [vmem:[%s152 + $0x60] sm:$0xff] %v177
                %v179 = vld [vmem:[%s151 + $0x68] sm:$0xff]
                %180 = vst [vmem:[%s152 + $0x68] sm:$0xff] %v179
                %v181 = vld [vmem:[%s151 + $0x70] sm:$0xff]
                %182 = vst [vmem:[%s152 + $0x70] sm:$0xff] %v181
                %v183 = vld [vmem:[%s151 + $0x78] sm:$0xff]
                %184 = vst [vmem:[%s152 + $0x78] sm:$0xff] %v183
                %v185 = vld [vmem:[%s151 + $0x80] sm:$0xff]
                %186 = vst [vmem:[%s152 + $0x80] sm:$0xff] %v185
                %v187 = vld [vmem:[%s151 + $0x88] sm:$0xff]
                %188 = vst [vmem:[%s152 + $0x88] sm:$0xff] %v187
                %v189 = vld [vmem:[%s151 + $0x120] sm:$0xff]
                %190 = vst [vmem:[%s152 + $0x90] sm:$0xff] %v189
                %v191 = vld [vmem:[%s151 + $0x128] sm:$0xff]
                %192 = vst [vmem:[%s152 + $0x98] sm:$0xff] %v191
                %v193 = vld [vmem:[%s151 + $0x130] sm:$0xff]
                %194 = vst [vmem:[%s152 + $0xa0] sm:$0xff] %v193
                %v195 = vld [vmem:[%s151 + $0x138] sm:$0xff]
                %196 = vst [vmem:[%s152 + $0xa8] sm:$0xff] %v195
                %v197 = vld [vmem:[%s151 + $0x140] sm:$0xff]
                %198 = vst [vmem:[%s152 + $0xb0] sm:$0xff] %v197
                %v199 = vld [vmem:[%s151 + $0x148] sm:$0xff]
                %200 = vst [vmem:[%s152 + $0xb8] sm:$0xff] %v199
                %v201 = vld [vmem:[%s151 + $0x150] sm:$0xff]
                %202 = vst [vmem:[%s152 + $0xc0] sm:$0xff] %v201
                %v203 = vld [vmem:[%s151 + $0x158] sm:$0xff]
                %204 = vst [vmem:[%s152 + $0xc8] sm:$0xff] %v203
                %v205 = vld [vmem:[%s151 + $0x160] sm:$0xff]
                %206 = vst [vmem:[%s152 + $0xd0] sm:$0xff] %v205
                %v207 = vld [vmem:[%s151 + $0x168] sm:$0xff]
                %208 = vst [vmem:[%s152 + $0xd8] sm:$0xff] %v207
                %v209 = vld [vmem:[%s151 + $0x170] sm:$0xff]
                %210 = vst [vmem:[%s152 + $0xe0] sm:$0xff] %v209
                %v211 = vld [vmem:[%s151 + $0x178] sm:$0xff]
                %212 = vst [vmem:[%s152 + $0xe8] sm:$0xff] %v211
                %v213 = vld [vmem:[%s151 + $0x180] sm:$0xff]
                %214 = vst [vmem:[%s152 + $0xf0] sm:$0xff] %v213
                %v215 = vld [vmem:[%s151 + $0x188] sm:$0xff]
                %216 = vst [vmem:[%s152 + $0xf8] sm:$0xff] %v215
                %v217 = vld [vmem:[%s151 + $0x190] sm:$0xff]
                %218 = vst [vmem:[%s152 + $0x100] sm:$0xff] %v217
                %v219 = vld [vmem:[%s151 + $0x198] sm:$0xff]
                %220 = vst [vmem:[%s152 + $0x108] sm:$0xff] %v219
                %v221 = vld [vmem:[%s151 + $0x1a0] sm:$0xff]
                %222 = vst [vmem:[%s152 + $0x110] sm:$0xff] %v221
                %v223 = vld [vmem:[%s151 + $0x1a8] sm:$0xff]
                %224 = vst [vmem:[%s152 + $0x118] sm:$0xff] %v223
                %v225 = vld [vmem:[%s151 + $0x240] sm:$0xff]
                %226 = vst [vmem:[%s152 + $0x120] sm:$0xff] %v225
                %v227 = vld [vmem:[%s151 + $0x248] sm:$0xff]
                %228 = vst [vmem:[%s152 + $0x128] sm:$0xff] %v227
                %v229 = vld [vmem:[%s151 + $0x250] sm:$0xff]
                %230 = vst [vmem:[%s152 + $0x130] sm:$0xff] %v229
                %v231 = vld [vmem:[%s151 + $0x258] sm:$0xff]
                %232 = vst [vmem:[%s152 + $0x138] sm:$0xff] %v231
                %v233 = vld [vmem:[%s151 + $0x260] sm:$0xff]
                %234 = vst [vmem:[%s152 + $0x140] sm:$0xff] %v233
                %v235 = vld [vmem:[%s151 + $0x268] sm:$0xff]
                %236 = vst [vmem:[%s152 + $0x148] sm:$0xff] %v235
                %v237 = vld [vmem:[%s151 + $0x270] sm:$0xff]
                %238 = vst [vmem:[%s152 + $0x150] sm:$0xff] %v237
                %v239 = vld [vmem:[%s151 + $0x278] sm:$0xff]
                %240 = vst [vmem:[%s152 + $0x158] sm:$0xff] %v239
                %v241 = vld [vmem:[%s151 + $0x280] sm:$0xff]
                %242 = vst [vmem:[%s152 + $0x160] sm:$0xff] %v241
                %v243 = vld [vmem:[%s151 + $0x288] sm:$0xff]
                %244 = vst [vmem:[%s152 + $0x168] sm:$0xff] %v243
                %v245 = vld [vmem:[%s151 + $0x290] sm:$0xff]
                %246 = vst [vmem:[%s152 + $0x170] sm:$0xff] %v245
                %v247 = vld [vmem:[%s151 + $0x298] sm:$0xff]
                %248 = vst [vmem:[%s152 + $0x178] sm:$0xff] %v247
                %v249 = vld [vmem:[%s151 + $0x2a0] sm:$0xff]
                %250 = vst [vmem:[%s152 + $0x180] sm:$0xff] %v249
                %v251 = vld [vmem:[%s151 + $0x2a8] sm:$0xff]
                %252 = vst [vmem:[%s152 + $0x188] sm:$0xff] %v251
                %v253 = vld [vmem:[%s151 + $0x2b0] sm:$0xff]
                %254 = vst [vmem:[%s152 + $0x190] sm:$0xff] %v253
                %v255 = vld [vmem:[%s151 + $0x2b8] sm:$0xff]
                %256 = vst [vmem:[%s152 + $0x198] sm:$0xff] %v255
                %v257 = vld [vmem:[%s151 + $0x2c0] sm:$0xff]
                %258 = vst [vmem:[%s152 + $0x1a0] sm:$0xff] %v257
                %v259 = vld [vmem:[%s151 + $0x2c8] sm:$0xff]
                %260 = vst [vmem:[%s152 + $0x1a8] sm:$0xff] %v259
                %v261 = vld [vmem:[%s151 + $0x360] sm:$0xff]
                %262 = vst [vmem:[%s152 + $0x1b0] sm:$0xff] %v261
                %v263 = vld [vmem:[%s151 + $0x368] sm:$0xff]
                %264 = vst [vmem:[%s152 + $0x1b8] sm:$0xff] %v263
                %v265 = vld [vmem:[%s151 + $0x370] sm:$0xff]
                %266 = vst [vmem:[%s152 + $0x1c0] sm:$0xff] %v265
                %v267 = vld [vmem:[%s151 + $0x378] sm:$0xff]
                %268 = vst [vmem:[%s152 + $0x1c8] sm:$0xff] %v267
                %v269 = vld [vmem:[%s151 + $0x380] sm:$0xff]
                %270 = vst [vmem:[%s152 + $0x1d0] sm:$0xff] %v269
                %v271 = vld [vmem:[%s151 + $0x388] sm:$0xff]
                %272 = vst [vmem:[%s152 + $0x1d8] sm:$0xff] %v271
                %v273 = vld [vmem:[%s151 + $0x390] sm:$0xff]
                %274 = vst [vmem:[%s152 + $0x1e0] sm:$0xff] %v273
                %v275 = vld [vmem:[%s151 + $0x398] sm:$0xff]
                %276 = vst [vmem:[%s152 + $0x1e8] sm:$0xff] %v275
                %v277 = vld [vmem:[%s151 + $0x3a0] sm:$0xff]
                %278 = vst [vmem:[%s152 + $0x1f0] sm:$0xff] %v277
                %v279 = vld [vmem:[%s151 + $0x3a8] sm:$0xff]
                %280 = vst [vmem:[%s152 + $0x1f8] sm:$0xff] %v279
                %v281 = vld [vmem:[%s151 + $0x3b0] sm:$0xff]
                %282 = vst [vmem:[%s152 + $0x200] sm:$0xff] %v281
                %v283 = vld [vmem:[%s151 + $0x3b8] sm:$0xff]
                %284 = vst [vmem:[%s152 + $0x208] sm:$0xff] %v283
                %v285 = vld [vmem:[%s151 + $0x3c0] sm:$0xff]
                %286 = vst [vmem:[%s152 + $0x210] sm:$0xff] %v285
                %v287 = vld [vmem:[%s151 + $0x3c8] sm:$0xff]
                %288 = vst [vmem:[%s152 + $0x218] sm:$0xff] %v287
                %v289 = vld [vmem:[%s151 + $0x3d0] sm:$0xff]
                %290 = vst [vmem:[%s152 + $0x220] sm:$0xff] %v289
                %v291 = vld [vmem:[%s151 + $0x3d8] sm:$0xff]
                %292 = vst [vmem:[%s152 + $0x228] sm:$0xff] %v291
                %v293 = vld [vmem:[%s151 + $0x3e0] sm:$0xff]
                %294 = vst [vmem:[%s152 + $0x230] sm:$0xff] %v293
                %v295 = vld [vmem:[%s151 + $0x3e8] sm:$0xff]
                %296 = vst [vmem:[%s152 + $0x238] sm:$0xff] %v295
              $region45: #{var_encoder_forward.4} parent=39 // loop_footer
                %s150 = sadd.s32 1, %s146
              $region46: #{var_encoder_forward.4} parent=39 // loop_footer_branch
                %145 = sbr.rel target = $region42
              $region47: #{var_encoder_forward.4} parent=39 // loop_exit
                _
            $region40: #{var_encoder_forward.4} parent=31 // pred_fallthru
              _
          $region32: #{var_encoder_forward.4} parent=27 // pred_fallthru
            _
          %453 = vnop
        $region28: #{var_encoder_forward.4} parent=23 // pred_fallthru
          _
      $region24: #{var_encoder_forward.4} parent=5 // pred_fallthru
        _
      %p454 = scmp.le.s32.totalorder 1, %s9
      %p455 = scmp.lt.s32.totalorder %s9, 3
      %p456 = pnand %p454, %p455
      %p457 = pneg %p456
      // Predicated region
      $region63: #{var_encoder_forward.4} parent=5 // pred_check
        _
      $region64: #{var_encoder_forward.4} parent=5 // pred_check_branch
        %459 = sbr.rel (%p456) target = $region66
      $region65: #{var_encoder_forward.4} parent=5 // pred_region
        %s460 = ssub.s32 %s9, 1
        %s461 = sand.u32 %s22, 1
        %s462 = sand.u32 %s22, 1
        %s463 = smul.addr %s462, 576
        %s464 = scalar_lea.vmem [#allocation2], %s463
        // Predicated region
        $region67: #{var_encoder_forward.4} parent=65 // pred_check
          %p465 = pneg %p35
        $region68: #{var_encoder_forward.4} parent=65 // pred_check_branch
          %467 = sbr.rel (%p465) target = $region70
        $region69: #{var_encoder_forward.4} parent=65 // pred_region
          _
        $region70: #{var_encoder_forward.4} parent=65 // pred_fallthru
          _
        %s468 = sand.u32 %s22, 1
        %s469 = sand.u32 %s22, 1
        %s470 = smul.addr %s469, 576
        %s471 = scalar_lea.vmem [#allocation2], %s470
        %p472 = pneg %p35
        %p473 = pneg %p32
        %p474 = pneg %p56
        %p475 = pneg %p53
        %p476 = pneg %p77
        %p477 = pneg %p74
        %p478 = pneg %p103
        %p479 = pneg %p100
        %p480 = scmp.lt.s32.totalorder %s14, 1
        %s481 = scalar_select %p480, %s14, 1
        %s482 = smul.addr %s481, 8
        %s483 = smul.addr %s482, 8
        %s484 = scalar_lea.vmem %s3, %s483
        %p485 = scmp.lt.s32.totalorder %s14, 1
        %s486 = scalar_select %p485, %s14, 1
        %s487 = smul.addr %s486, 8
        %s488 = smul.addr %s487, 8
        %s489 = scalar_lea.vmem %s3, %s488
        %v491 = vld [vmem:[%s464] sm:$0xff]
        %v492 = vld [vmem:[%s464 + $0x10] sm:$0xff]
        %v493 = vld [vmem:[%s464 + $0x20] sm:$0xff]
        %v494 = vld [vmem:[%s464 + $0x30] sm:$0xff]
        %v495 = vld [vmem:[%s464 + $0x40] sm:$0xff]
        %v496 = vld [vmem:[%s464 + $0x50] sm:$0xff]
        %v497 = vld [vmem:[%s464 + $0x60] sm:$0xff]
        %v498 = vld [vmem:[%s464 + $0x70] sm:$0xff]
        %v499 = vpack.c.bf16 %v492, %v491
        %v500 = vpack.c.bf16 %v494, %v493
        %v501 = vpack.c.bf16 %v496, %v495
        %v502 = vpack.c.bf16 %v498, %v497
        %v503 = vld [vmem:[%s1] sm:$0xf]
        %s504 = scalar_lea.vmem %s464, 144 [#allocation2]
        %v505 = vld [vmem:[%s504] sm:$0xff]
        %v506 = vld [vmem:[%s504 + $0x10] sm:$0xff]
        %v507 = vld [vmem:[%s504 + $0x20] sm:$0xff]
        %v508 = vld [vmem:[%s504 + $0x30] sm:$0xff]
        %v509 = vld [vmem:[%s504 + $0x40] sm:$0xff]
        %v510 = vld [vmem:[%s504 + $0x50] sm:$0xff]
        %v511 = vld [vmem:[%s504 + $0x60] sm:$0xff]
        %v512 = vld [vmem:[%s504 + $0x70] sm:$0xff]
        %v513 = vpack.c.bf16 %v506, %v505
        %v514 = vpack.c.bf16 %v508, %v507
        %v515 = vpack.c.bf16 %v510, %v509
        %v516 = vpack.c.bf16 %v512, %v511
        %s517 = scalar_lea.vmem %s1, 4
        %v518 = vld [vmem:[%s517] sm:$0xf]
        %vm519 = vcmask 64512
        %v521 = vsel %vm519, %v513, 0
        %v524 = vsel %vm519, %v514, 0
        %v527 = vsel %vm519, %v515, 0
        %v530 = vsel %vm519, %v516, 0
        %vm532 = vcmask 1043456
        %v534 = vsel %vm532, %v518, 0
        %536 = vmatprep.subr.bf16.mxu0 0
        %537 = vmatpush1.bf16.msra.mxu0 %v534
        %538 = vmatprep.subr.bf16.mxu0 0
        %539 = vmatpush1.bf16.msra.mxu0 0
        %540 = vmatprep.subr.bf16.mxu0 0
        %541 = vmatpush1.bf16.msra.mxu0 0
        %542 = vmatprep.subr.bf16.mxu0 0
        %543 = vmatpush1.bf16.msra.mxu0 0
        %544 = vmatprep.subr.bf16.mxu0 0
        %545 = vmatpush1.bf16.msra.mxu0 0
        %546 = vmatprep.subr.bf16.mxu0 0
        %547 = vmatpush1.bf16.msra.mxu0 0
        %548 = vmatprep.subr.bf16.mxu0 0
        %549 = vmatpush1.bf16.msra.mxu0 0
        %550 = vmatprep.subr.bf16.mxu0 0
        %551 = vmatpush1.bf16.msra.mxu0 0
        %552 = vmatprep.subr.bf16.mxu0 0
        %553 = vmatpush1.bf16.msra.mxu0 0
        %554 = vmatprep.subr.bf16.mxu0 0
        %555 = vmatpush1.bf16.msra.mxu0 0
        %556 = vmatprep.subr.bf16.mxu0 0
        %557 = vmatpush1.bf16.msra.mxu0 0
        %558 = vmatprep.subr.bf16.mxu0 0
        %559 = vmatpush1.bf16.msra.mxu0 0
        %560 = vmatprep.subr.bf16.mxu0 0
        %561 = vmatpush1.bf16.msra.mxu0 0
        %562 = vmatprep.subr.bf16.mxu0 0
        %563 = vmatpush1.bf16.msra.mxu0 0
        %564 = vmatprep.subr.bf16.mxu0 0
        %565 = vmatpush1.bf16.msra.mxu0 0
        %566 = vmatprep.subr.bf16.mxu0 0
        %567 = vmatpush1.bf16.msra.mxu0 0
        %568 = vmatprep.mubr.bf16.mxu0 0
        %569 = vmatmul.mubr.bf16.gmra.mrb[0].mxu0 %v521
        %v570 = vpop.f32.mrb[0].mxu0
        %v571 = vadd.f32 0.0, %v570
        %v572 = vpop.f32.mrb[0].mxu0
        %v573 = vpop.f32.mrb[0].mxu0
        %v574 = vadd.f32 0.0, %v573
        %v575 = vpop.f32.mrb[0].mxu0
        %576 = vmatprep.mubr.bf16.mxu0 0
        %577 = vmatmul.mubr.bf16.gmra.mrb[0].mxu0 %v524
        %v578 = vpop.f32.mrb[0].mxu0
        %v579 = vadd.f32 0.0, %v578
        %v580 = vpop.f32.mrb[0].mxu0
        %v581 = vpop.f32.mrb[0].mxu0
        %v582 = vadd.f32 0.0, %v581
        %v583 = vpop.f32.mrb[0].mxu0
        %584 = vmatprep.mubr.bf16.mxu0 0
        %585 = vmatmul.mubr.bf16.gmra.mrb[0].mxu0 %v527
        %v586 = vpop.f32.mrb[0].mxu0
        %v587 = vadd.f32 0.0, %v586
        %v588 = vpop.f32.mrb[0].mxu0
        %v589 = vpop.f32.mrb[0].mxu0
        %v590 = vadd.f32 0.0, %v589
        %v591 = vpop.f32.mrb[0].mxu0
        %592 = vmatprep.mubr.bf16.mxu0 0
        %593 = vmatmul.mubr.bf16.gmra.mrb[0].mxu0 %v530
        %v594 = vpop.f32.mrb[0].mxu0
        %v595 = vadd.f32 0.0, %v594
        %v596 = vpop.f32.mrb[0].mxu0
        %v597 = vpop.f32.mrb[0].mxu0
        %v598 = vadd.f32 0.0, %v597
        %v599 = vpop.f32.mrb[0].mxu0
        %600 = vdwg.mxu0
        %v602 = vsel %vm519, %v499, 0
        %v605 = vsel %vm519, %v500, 0
        %v608 = vsel %vm519, %v501, 0
        %v611 = vsel %vm519, %v502, 0
        %v614 = vsel %vm532, %v503, 0
        %616 = vmatprep.subr.bf16.mxu0 0
        %617 = vmatpush1.bf16.msra.mxu0 %v614
        %618 = vmatprep.subr.bf16.mxu0 0
        %619 = vmatpush1.bf16.msra.mxu0 0
        %620 = vmatprep.subr.bf16.mxu0 0
        %621 = vmatpush1.bf16.msra.mxu0 0
        %622 = vmatprep.subr.bf16.mxu0 0
        %623 = vmatpush1.bf16.msra.mxu0 0
        %624 = vmatprep.subr.bf16.mxu0 0
        %625 = vmatpush1.bf16.msra.mxu0 0
        %626 = vmatprep.subr.bf16.mxu0 0
        %627 = vmatpush1.bf16.msra.mxu0 0
        %628 = vmatprep.subr.bf16.mxu0 0
        %629 = vmatpush1.bf16.msra.mxu0 0
        %630 = vmatprep.subr.bf16.mxu0 0
        %631 = vmatpush1.bf16.msra.mxu0 0
        %632 = vmatprep.subr.bf16.mxu0 0
        %633 = vmatpush1.bf16.msra.mxu0 0
        %634 = vmatprep.subr.bf16.mxu0 0
        %635 = vmatpush1.bf16.msra.mxu0 0
        %636 = vmatprep.subr.bf16.mxu0 0
        %637 = vmatpush1.bf16.msra.mxu0 0
        %638 = vmatprep.subr.bf16.mxu0 0
        %639 = vmatpush1.bf16.msra.mxu0 0
        %640 = vmatprep.subr.bf16.mxu0 0
        %641 = vmatpush1.bf16.msra.mxu0 0
        %642 = vmatprep.subr.bf16.mxu0 0
        %643 = vmatpush1.bf16.msra.mxu0 0
        %644 = vmatprep.subr.bf16.mxu0 0
        %645 = vmatpush1.bf16.msra.mxu0 0
        %646 = vmatprep.subr.bf16.mxu0 0
        %647 = vmatpush1.bf16.msra.mxu0 0
        %648 = vmatprep.mubr.bf16.mxu0 0
        %649 = vmatmul.mubr.bf16.gmra.mrb[0].mxu0 %v602
        %v650 = vpop.f32.mrb[0].mxu0
        %v651 = vadd.f32 %v571, %v650
        %v652 = vpop.f32.mrb[0].mxu0
        %v653 = vpop.f32.mrb[0].mxu0
        %v654 = vadd.f32 %v574, %v653
        %v655 = vpop.f32.mrb[0].mxu0
        %656 = vmatprep.mubr.bf16.mxu0 0
        %657 = vmatmul.mubr.bf16.gmra.mrb[0].mxu0 %v605
        %v658 = vpop.f32.mrb[0].mxu0
        %v659 = vadd.f32 %v579, %v658
        %v660 = vpop.f32.mrb[0].mxu0
        %v661 = vpop.f32.mrb[0].mxu0
        %v662 = vadd.f32 %v582, %v661
        %v663 = vpop.f32.mrb[0].mxu0
        %664 = vmatprep.mubr.bf16.mxu0 0
        %665 = vmatmul.mubr.bf16.gmra.mrb[0].mxu0 %v608
        %v666 = vpop.f32.mrb[0].mxu0
        %v667 = vadd.f32 %v587, %v666
        %v668 = vpop.f32.mrb[0].mxu0
        %v669 = vpop.f32.mrb[0].mxu0
        %v670 = vadd.f32 %v590, %v669
        %v671 = vpop.f32.mrb[0].mxu0
        %672 = vmatprep.mubr.bf16.mxu0 0
        %673 = vmatmul.mubr.bf16.gmra.mrb[0].mxu0 %v611
        %v674 = vpop.f32.mrb[0].mxu0
        %v675 = vadd.f32 %v595, %v674
        %v676 = vpop.f32.mrb[0].mxu0
        %v677 = vpop.f32.mrb[0].mxu0
        %v678 = vadd.f32 %v598, %v677
        %v679 = vpop.f32.mrb[0].mxu0
        %680 = vdwg.mxu0
        %v681 = vld [vmem:[%s464 + $0x1] sm:$0xff]
        %v682 = vld [vmem:[%s464 + $0x11] sm:$0xff]
        %v683 = vld [vmem:[%s464 + $0x21] sm:$0xff]
        %v684 = vld [vmem:[%s464 + $0x31] sm:$0xff]
        %v685 = vld [vmem:[%s464 + $0x41] sm:$0xff]
        %v686 = vld [vmem:[%s464 + $0x51] sm:$0xff]
        %v687 = vld [vmem:[%s464 + $0x61] sm:$0xff]
        %v688 = vld [vmem:[%s464 + $0x71] sm:$0xff]
        %v689 = vpack.c.bf16 %v682, %v681
        %v690 = vpack.c.bf16 %v684, %v683
        %v691 = vpack.c.bf16 %v686, %v685
        %v692 = vpack.c.bf16 %v688, %v687
        %s693 = scalar_lea.vmem %s1, 8
        %v694 = vld [vmem:[%s693] sm:$0xf]
        %v696 = vsel %vm519, %v689, 0
        %v699 = vsel %vm519, %v690, 0
        %v702 = vsel %vm519, %v691, 0
        %v705 = vsel %vm519, %v692, 0
        %v708 = vsel %vm532, %v694, 0
        %710 = vmatprep.subr.bf16.mxu0 0
        %711 = vmatpush1.bf16.msra.mxu0 %v708
        %712 = vmatprep.subr.bf16.mxu0 0
        %713 = vmatpush1.bf16.msra.mxu0 0
        %714 = vmatprep.subr.bf16.mxu0 0
        %715 = vmatpush1.bf16.msra.mxu0 0
        %716 = vmatprep.subr.bf16.mxu0 0
        %717 = vmatpush1.bf16.msra.mxu0 0
        %718 = vmatprep.subr.bf16.mxu0 0
        %719 = vmatpush1.bf16.msra.mxu0 0
        %720 = vmatprep.subr.bf16.mxu0 0
        %721 = vmatpush1.bf16.msra.mxu0 0
        %722 = vmatprep.subr.bf16.mxu0 0
        %723 = vmatpush1.bf16.msra.mxu0 0
        %724 = vmatprep.subr.bf16.mxu0 0
        %725 = vmatpush1.bf16.msra.mxu0 0
        %726 = vmatprep.subr.bf16.mxu0 0
        %727 = vmatpush1.bf16.msra.mxu0 0
        %728 = vmatprep.subr.bf16.mxu0 0
        %729 = vmatpush1.bf16.msra.mxu0 0
        %730 = vmatprep.subr.bf16.mxu0 0
        %731 = vmatpush1.bf16.msra.mxu0 0
        %732 = vmatprep.subr.bf16.mxu0 0
        %733 = vmatpush1.bf16.msra.mxu0 0
        %734 = vmatprep.subr.bf16.mxu0 0
        %735 = vmatpush1.bf16.msra.mxu0 0
        %736 = vmatprep.subr.bf16.mxu0 0
        %737 = vmatpush1.bf16.msra.mxu0 0
        %738 = vmatprep.subr.bf16.mxu0 0
        %739 = vmatpush1.bf16.msra.mxu0 0
        %740 = vmatprep.subr.bf16.mxu0 0
        %741 = vmatpush1.bf16.msra.mxu0 0
        %742 = vmatprep.mubr.bf16.mxu0 0
        %743 = vmatmul.mubr.bf16.gmra.mrb[0].mxu0 %v696
        %v744 = vpop.f32.mrb[0].mxu0
        %v745 = vadd.f32 0.0, %v744
        %v746 = vpop.f32.mrb[0].mxu0
        %v747 = vpop.f32.mrb[0].mxu0
        %v748 = vadd.f32 0.0, %v747
        %v749 = vpop.f32.mrb[0].mxu0
        %750 = vmatprep.mubr.bf16.mxu0 0
        %751 = vmatmul.mubr.bf16.gmra.mrb[0].mxu0 %v699
        %v752 = vpop.f32.mrb[0].mxu0
        %v753 = vadd.f32 0.0, %v752
        %v754 = vpop.f32.mrb[0].mxu0
        %v755 = vpop.f32.mrb[0].mxu0
        %v756 = vadd.f32 0.0, %v755
        %v757 = vpop.f32.mrb[0].mxu0
        %758 = vmatprep.mubr.bf16.mxu0 0
        %759 = vmatmul.mubr.bf16.gmra.mrb[0].mxu0 %v702
        %v760 = vpop.f32.mrb[0].mxu0
        %v761 = vadd.f32 0.0, %v760
        %v762 = vpop.f32.mrb[0].mxu0
        %v763 = vpop.f32.mrb[0].mxu0
        %v764 = vadd.f32 0.0, %v763
        %v765 = vpop.f32.mrb[0].mxu0
        %766 = vmatprep.mubr.bf16.mxu0 0
        %767 = vmatmul.mubr.bf16.gmra.mrb[0].mxu0 %v705
        %v768 = vpop.f32.mrb[0].mxu0
        %v769 = vadd.f32 0.0, %v768
        %v770 = vpop.f32.mrb[0].mxu0
        %v771 = vpop.f32.mrb[0].mxu0
        %v772 = vadd.f32 0.0, %v771
        %v773 = vpop.f32.mrb[0].mxu0
        %774 = vdwg.mxu0
        %v775 = vadd.f32 %v651, %v745
        %v776 = vadd.f32 %v654, %v748
        %v777 = vadd.f32 %v659, %v753
        %v778 = vadd.f32 %v662, %v756
        %v779 = vadd.f32 %v667, %v761
        %v780 = vadd.f32 %v670, %v764
        %v781 = vadd.f32 %v675, %v769
        %v782 = vadd.f32 %v678, %v772
        %s783 = scalar_lea.vmem %s464, 288 [#allocation2]
        %v784 = vld [vmem:[%s783] sm:$0xff]
        %v785 = vld [vmem:[%s783 + $0x10] sm:$0xff]
        %v786 = vld [vmem:[%s783 + $0x20] sm:$0xff]
        %v787 = vld [vmem:[%s783 + $0x30] sm:$0xff]
        %v788 = vld [vmem:[%s783 + $0x40] sm:$0xff]
        %v789 = vld [vmem:[%s783 + $0x50] sm:$0xff]
        %v790 = vld [vmem:[%s783 + $0x60] sm:$0xff]
        %v791 = vld [vmem:[%s783 + $0x70] sm:$0xff]
        %v792 = vpack.c.bf16 %v785, %v784
        %v793 = vpack.c.bf16 %v787, %v786
        %v794 = vpack.c.bf16 %v789, %v788
        %v795 = vpack.c.bf16 %v791, %v790
        %s796 = scalar_lea.vmem %s1, 12
        %v797 = vld [vmem:[%s796] sm:$0xf]
        %v799 = vsel %vm519, %v792, 0
        %v802 = vsel %vm519, %v793, 0
        %v805 = vsel %vm519, %v794, 0
        %v808 = vsel %vm519, %v795, 0
        %v811 = vsel %vm532, %v797, 0
        %813 = vmatprep.subr.bf16.mxu0 0
        %814 = vmatpush1.bf16.msra.mxu0 %v811
        %815 = vmatprep.subr.bf16.mxu0 0
        %816 = vmatpush1.bf16.msra.mxu0 0
        %817 = vmatprep.subr.bf16.mxu0 0
        %818 = vmatpush1.bf16.msra.mxu0 0
        %819 = vmatprep.subr.bf16.mxu0 0
        %820 = vmatpush1.bf16.msra.mxu0 0
        %821 = vmatprep.subr.bf16.mxu0 0
        %822 = vmatpush1.bf16.msra.mxu0 0
        %823 = vmatprep.subr.bf16.mxu0 0
        %824 = vmatpush1.bf16.msra.mxu0 0
        %825 = vmatprep.subr.bf16.mxu0 0
        %826 = vmatpush1.bf16.msra.mxu0 0
        %827 = vmatprep.subr.bf16.mxu0 0
        %828 = vmatpush1.bf16.msra.mxu0 0
        %829 = vmatprep.subr.bf16.mxu0 0
        %830 = vmatpush1.bf16.msra.mxu0 0
        %831 = vmatprep.subr.bf16.mxu0 0
        %832 = vmatpush1.bf16.msra.mxu0 0
        %833 = vmatprep.subr.bf16.mxu0 0
        %834 = vmatpush1.bf16.msra.mxu0 0
        %835 = vmatprep.subr.bf16.mxu0 0
        %836 = vmatpush1.bf16.msra.mxu0 0
        %837 = vmatprep.subr.bf16.mxu0 0
        %838 = vmatpush1.bf16.msra.mxu0 0
        %839 = vmatprep.subr.bf16.mxu0 0
        %840 = vmatpush1.bf16.msra.mxu0 0
        %841 = vmatprep.subr.bf16.mxu0 0
        %842 = vmatpush1.bf16.msra.mxu0 0
        %843 = vmatprep.subr.bf16.mxu0 0
        %844 = vmatpush1.bf16.msra.mxu0 0
        %845 = vmatprep.mubr.bf16.mxu0 0
        %846 = vmatmul.mubr.bf16.gmra.mrb[0].mxu0 %v799
        %v847 = vpop.f32.mrb[0].mxu0
        %v848 = vadd.f32 0.0, %v847
        %v849 = vpop.f32.mrb[0].mxu0
        %v850 = vpop.f32.mrb[0].mxu0
        %v851 = vadd.f32 0.0, %v850
        %v852 = vpop.f32.mrb[0].mxu0
        %853 = vmatprep.mubr.bf16.mxu0 0
        %854 = vmatmul.mubr.bf16.gmra.mrb[0].mxu0 %v802
        %v855 = vpop.f32.mrb[0].mxu0
        %v856 = vadd.f32 0.0, %v855
        %v857 = vpop.f32.mrb[0].mxu0
        %v858 = vpop.f32.mrb[0].mxu0
        %v859 = vadd.f32 0.0, %v858
        %v860 = vpop.f32.mrb[0].mxu0
        %861 = vmatprep.mubr.bf16.mxu0 0
        %862 = vmatmul.mubr.bf16.gmra.mrb[0].mxu0 %v805
        %v863 = vpop.f32.mrb[0].mxu0
        %v864 = vadd.f32 0.0, %v863
        %v865 = vpop.f32.mrb[0].mxu0
        %v866 = vpop.f32.mrb[0].mxu0
        %v867 = vadd.f32 0.0, %v866
        %v868 = vpop.f32.mrb[0].mxu0
        %869 = vmatprep.mubr.bf16.mxu0 0
        %870 = vmatmul.mubr.bf16.gmra.mrb[0].mxu0 %v808
        %v871 = vpop.f32.mrb[0].mxu0
        %v872 = vadd.f32 0.0, %v871
        %v873 = vpop.f32.mrb[0].mxu0
        %v874 = vpop.f32.mrb[0].mxu0
        %v875 = vadd.f32 0.0, %v874
        %v876 = vpop.f32.mrb[0].mxu0
        %877 = vdwg.mxu0
        %v878 = vadd.f32 %v775, %v848
        %v879 = vadd.f32 %v776, %v851
        %v880 = vadd.f32 %v777, %v856
        %v881 = vadd.f32 %v778, %v859
        %v882 = vadd.f32 %v779, %v864
        %v883 = vadd.f32 %v780, %v867
        %v884 = vadd.f32 %v781, %v872
        %v885 = vadd.f32 %v782, %v875
        %s886 = scalar_lea.vmem %s464, 432 [#allocation2]
        %v887 = vld [vmem:[%s886] sm:$0xff]
        %v888 = vld [vmem:[%s886 + $0x10] sm:$0xff]
        %v889 = vld [vmem:[%s886 + $0x20] sm:$0xff]
        %v890 = vld [vmem:[%s886 + $0x30] sm:$0xff]
        %v891 = vld [vmem:[%s886 + $0x40] sm:$0xff]
        %v892 = vld [vmem:[%s886 + $0x50] sm:$0xff]
        %v893 = vld [vmem:[%s886 + $0x60] sm:$0xff]
        %v894 = vld [vmem:[%s886 + $0x70] sm:$0xff]
        %v895 = vpack.c.bf16 %v888, %v887
        %v896 = vpack.c.bf16 %v890, %v889
        %v897 = vpack.c.bf16 %v892, %v891
        %v898 = vpack.c.bf16 %v894, %v893
        %s899 = scalar_lea.vmem %s1, 16
        %v900 = vld [vmem:[%s899] sm:$0xf]
        %v902 = vsel %vm519, %v895, 0
        %v905 = vsel %vm519, %v896, 0
        %v908 = vsel %vm519, %v897, 0
        %v911 = vsel %vm519, %v898, 0
        %v914 = vsel %vm532, %v900, 0
        %916 = vmatprep.subr.bf16.mxu0 0
        %917 = vmatpush1.bf16.msra.mxu0 %v914
        %918 = vmatprep.subr.bf16.mxu0 0
        %919 = vmatpush1.bf16.msra.mxu0 0
        %920 = vmatprep.subr.bf16.mxu0 0
        %921 = vmatpush1.bf16.msra.mxu0 0
        %922 = vmatprep.subr.bf16.mxu0 0
        %923 = vmatpush1.bf16.msra.mxu0 0
        %924 = vmatprep.subr.bf16.mxu0 0
        %925 = vmatpush1.bf16.msra.mxu0 0
        %926 = vmatprep.subr.bf16.mxu0 0
        %927 = vmatpush1.bf16.msra.mxu0 0
        %928 = vmatprep.subr.bf16.mxu0 0
        %929 = vmatpush1.bf16.msra.mxu0 0
        %930 = vmatprep.subr.bf16.mxu0 0
        %931 = vmatpush1.bf16.msra.mxu0 0
        %932 = vmatprep.subr.bf16.mxu0 0
        %933 = vmatpush1.bf16.msra.mxu0 0
        %934 = vmatprep.subr.bf16.mxu0 0
        %935 = vmatpush1.bf16.msra.mxu0 0
        %936 = vmatprep.subr.bf16.mxu0 0
        %937 = vmatpush1.bf16.msra.mxu0 0
        %938 = vmatprep.subr.bf16.mxu0 0
        %939 = vmatpush1.bf16.msra.mxu0 0
        %940 = vmatprep.subr.bf16.mxu0 0
        %941 = vmatpush1.bf16.msra.mxu0 0
        %942 = vmatprep.subr.bf16.mxu0 0
        %943 = vmatpush1.bf16.msra.mxu0 0
        %944 = vmatprep.subr.bf16.mxu0 0
        %945 = vmatpush1.bf16.msra.mxu0 0
        %946 = vmatprep.subr.bf16.mxu0 0
        %947 = vmatpush1.bf16.msra.mxu0 0
        %948 = vmatprep.mubr.bf16.mxu0 0
        %949 = vmatmul.mubr.bf16.gmra.mrb[0].mxu0 %v902
        %v950 = vpop.f32.mrb[0].mxu0
        %v951 = vadd.f32 0.0, %v950
        %v952 = vpop.f32.mrb[0].mxu0
        %v953 = vpop.f32.mrb[0].mxu0
        %v954 = vadd.f32 0.0, %v953
        %v955 = vpop.f32.mrb[0].mxu0
        %956 = vmatprep.mubr.bf16.mxu0 0
        %957 = vmatmul.mubr.bf16.gmra.mrb[0].mxu0 %v905
        %v958 = vpop.f32.mrb[0].mxu0
        %v959 = vadd.f32 0.0, %v958
        %v960 = vpop.f32.mrb[0].mxu0
        %v961 = vpop.f32.mrb[0].mxu0
        %v962 = vadd.f32 0.0, %v961
        %v963 = vpop.f32.mrb[0].mxu0
        %964 = vmatprep.mubr.bf16.mxu0 0
        %965 = vmatmul.mubr.bf16.gmra.mrb[0].mxu0 %v908
        %v966 = vpop.f32.mrb[0].mxu0
        %v967 = vadd.f32 0.0, %v966
        %v968 = vpop.f32.mrb[0].mxu0
        %v969 = vpop.f32.mrb[0].mxu0
        %v970 = vadd.f32 0.0, %v969
        %v971 = vpop.f32.mrb[0].mxu0
        %972 = vmatprep.mubr.bf16.mxu0 0
        %973 = vmatmul.mubr.bf16.gmra.mrb[0].mxu0 %v911
        %v974 = vpop.f32.mrb[0].mxu0
        %v975 = vadd.f32 0.0, %v974
        %v976 = vpop.f32.mrb[0].mxu0
        %v977 = vpop.f32.mrb[0].mxu0
        %v978 = vadd.f32 0.0, %v977
        %v979 = vpop.f32.mrb[0].mxu0
        %980 = vdwg.mxu0
        %v981 = vadd.f32 %v878, %v951
        %v982 = vadd.f32 %v879, %v954
        %v983 = vadd.f32 %v880, %v959
        %v984 = vadd.f32 %v881, %v962
        %v985 = vadd.f32 %v882, %v967
        %v986 = vadd.f32 %v883, %v970
        %v987 = vadd.f32 %v884, %v975
        %v988 = vadd.f32 %v885, %v978
        %v989 = vld [vmem:[%s783 + $0x1] sm:$0xff]
        %v990 = vld [vmem:[%s783 + $0x11] sm:$0xff]
        %v991 = vld [vmem:[%s783 + $0x21] sm:$0xff]
        %v992 = vld [vmem:[%s783 + $0x31] sm:$0xff]
        %v993 = vld [vmem:[%s783 + $0x41] sm:$0xff]
        %v994 = vld [vmem:[%s783 + $0x51] sm:$0xff]
        %v995 = vld [vmem:[%s783 + $0x61] sm:$0xff]
        %v996 = vld [vmem:[%s783 + $0x71] sm:$0xff]
        %v997 = vpack.c.bf16 %v990, %v989
        %v998 = vpack.c.bf16 %v992, %v991
        %v999 = vpack.c.bf16 %v994, %v993
        %v1000 = vpack.c.bf16 %v996, %v995
        %s1001 = scalar_lea.vmem %s1, 20
        %v1002 = vld [vmem:[%s1001] sm:$0xf]
        %v1004 = vsel %vm519, %v997, 0
        %v1007 = vsel %vm519, %v998, 0
        %v1010 = vsel %vm519, %v999, 0
        %v1013 = vsel %vm519, %v1000, 0
        %v1016 = vsel %vm532, %v1002, 0
        %1018 = vmatprep.subr.bf16.mxu0 0
        %1019 = vmatpush1.bf16.msra.mxu0 %v1016
        %1020 = vmatprep.subr.bf16.mxu0 0
        %1021 = vmatpush1.bf16.msra.mxu0 0
        %1022 = vmatprep.subr.bf16.mxu0 0
        %1023 = vmatpush1.bf16.msra.mxu0 0
        %1024 = vmatprep.subr.bf16.mxu0 0
        %1025 = vmatpush1.bf16.msra.mxu0 0
        %1026 = vmatprep.subr.bf16.mxu0 0
        %1027 = vmatpush1.bf16.msra.mxu0 0
        %1028 = vmatprep.subr.bf16.mxu0 0
        %1029 = vmatpush1.bf16.msra.mxu0 0
        %1030 = vmatprep.subr.bf16.mxu0 0
        %1031 = vmatpush1.bf16.msra.mxu0 0
        %1032 = vmatprep.subr.bf16.mxu0 0
        %1033 = vmatpush1.bf16.msra.mxu0 0
        %1034 = vmatprep.subr.bf16.mxu0 0
        %1035 = vmatpush1.bf16.msra.mxu0 0
        %1036 = vmatprep.subr.bf16.mxu0 0
        %1037 = vmatpush1.bf16.msra.mxu0 0
        %1038 = vmatprep.subr.bf16.mxu0 0
        %1039 = vmatpush1.bf16.msra.mxu0 0
        %1040 = vmatprep.subr.bf16.mxu0 0
        %1041 = vmatpush1.bf16.msra.mxu0 0
        %1042 = vmatprep.subr.bf16.mxu0 0
        %1043 = vmatpush1.bf16.msra.mxu0 0
        %1044 = vmatprep.subr.bf16.mxu0 0
        %1045 = vmatpush1.bf16.msra.mxu0 0
        %1046 = vmatprep.subr.bf16.mxu0 0
        %1047 = vmatpush1.bf16.msra.mxu0 0
        %1048 = vmatprep.subr.bf16.mxu0 0
        %1049 = vmatpush1.bf16.msra.mxu0 0
        %1050 = vmatprep.mubr.bf16.mxu0 0
        %1051 = vmatmul.mubr.bf16.gmra.mrb[0].mxu0 %v1004
        %v1052 = vpop.f32.mrb[0].mxu0
        %v1053 = vadd.f32 0.0, %v1052
        %v1054 = vpop.f32.mrb[0].mxu0
        %v1055 = vpop.f32.mrb[0].mxu0
        %v1056 = vadd.f32 0.0, %v1055
        %v1057 = vpop.f32.mrb[0].mxu0
        %1058 = vmatprep.mubr.bf16.mxu0 0
        %1059 = vmatmul.mubr.bf16.gmra.mrb[0].mxu0 %v1007
        %v1060 = vpop.f32.mrb[0].mxu0
        %v1061 = vadd.f32 0.0, %v1060
        %v1062 = vpop.f32.mrb[0].mxu0
        %v1063 = vpop.f32.mrb[0].mxu0
        %v1064 = vadd.f32 0.0, %v1063
        %v1065 = vpop.f32.mrb[0].mxu0
        %1066 = vmatprep.mubr.bf16.mxu0 0
        %1067 = vmatmul.mubr.bf16.gmra.mrb[0].mxu0 %v1010
        %v1068 = vpop.f32.mrb[0].mxu0
        %v1069 = vadd.f32 0.0, %v1068
        %v1070 = vpop.f32.mrb[0].mxu0
        %v1071 = vpop.f32.mrb[0].mxu0
        %v1072 = vadd.f32 0.0, %v1071
        %v1073 = vpop.f32.mrb[0].mxu0
        %1074 = vmatprep.mubr.bf16.mxu0 0
        %1075 = vmatmul.mubr.bf16.gmra.mrb[0].mxu0 %v1013
        %v1076 = vpop.f32.mrb[0].mxu0
        %v1077 = vadd.f32 0.0, %v1076
        %v1078 = vpop.f32.mrb[0].mxu0
        %v1079 = vpop.f32.mrb[0].mxu0
        %v1080 = vadd.f32 0.0, %v1079
        %v1081 = vpop.f32.mrb[0].mxu0
        %1082 = vdwg.mxu0
        %v1083 = vadd.f32 %v981, %v1053
        %v1084 = vadd.f32 %v982, %v1056
        %v1085 = vadd.f32 %v983, %v1061
        %v1086 = vadd.f32 %v984, %v1064
        %v1087 = vadd.f32 %v985, %v1069
        %v1088 = vadd.f32 %v986, %v1072
        %v1089 = vadd.f32 %v987, %v1077
        %v1090 = vadd.f32 %v988, %v1080
        %s1091 = scalar_lea.vmem %s464, 16 [#allocation2]
        %v1092 = vld [vmem:[%s1091] sm:$0xff]
        %v1093 = vld [vmem:[%s1091 + $0x10] sm:$0xff]
        %v1094 = vld [vmem:[%s1091 + $0x20] sm:$0xff]
        %v1095 = vld [vmem:[%s1091 + $0x30] sm:$0xff]
        %v1096 = vld [vmem:[%s1091 + $0x40] sm:$0xff]
        %v1097 = vld [vmem:[%s1091 + $0x50] sm:$0xff]
        %v1098 = vld [vmem:[%s1091 + $0x60] sm:$0xff]
        %v1099 = vld [vmem:[%s1091 + $0x70] sm:$0xff]
        %v1100 = vpack.c.bf16 %v1093, %v1092
        %v1101 = vpack.c.bf16 %v1095, %v1094
        %v1102 = vpack.c.bf16 %v1097, %v1096
        %v1103 = vpack.c.bf16 %v1099, %v1098
        %s1104 = scalar_lea.vmem %s1, 24
        %v1105 = vld [vmem:[%s1104] sm:$0xf]
        %v1107 = vsel %vm519, %v1100, 0
        %v1110 = vsel %vm519, %v1101, 0
        %v1113 = vsel %vm519, %v1102, 0
        %v1116 = vsel %vm519, %v1103, 0
        %v1119 = vsel %vm532, %v1105, 0
        %1121 = vmatprep.subr.bf16.mxu0 0
        %1122 = vmatpush1.bf16.msra.mxu0 %v1119
        %1123 = vmatprep.subr.bf16.mxu0 0
        %1124 = vmatpush1.bf16.msra.mxu0 0
        %1125 = vmatprep.subr.bf16.mxu0 0
        %1126 = vmatpush1.bf16.msra.mxu0 0
        %1127 = vmatprep.subr.bf16.mxu0 0
        %1128 = vmatpush1.bf16.msra.mxu0 0
        %1129 = vmatprep.subr.bf16.mxu0 0
        %1130 = vmatpush1.bf16.msra.mxu0 0
        %1131 = vmatprep.subr.bf16.mxu0 0
        %1132 = vmatpush1.bf16.msra.mxu0 0
        %1133 = vmatprep.subr.bf16.mxu0 0
        %1134 = vmatpush1.bf16.msra.mxu0 0
        %1135 = vmatprep.subr.bf16.mxu0 0
        %1136 = vmatpush1.bf16.msra.mxu0 0
        %1137 = vmatprep.subr.bf16.mxu0 0
        %1138 = vmatpush1.bf16.msra.mxu0 0
        %1139 = vmatprep.subr.bf16.mxu0 0
        %1140 = vmatpush1.bf16.msra.mxu0 0
        %1141 = vmatprep.subr.bf16.mxu0 0
        %1142 = vmatpush1.bf16.msra.mxu0 0
        %1143 = vmatprep.subr.bf16.mxu0 0
        %1144 = vmatpush1.bf16.msra.mxu0 0
        %1145 = vmatprep.subr.bf16.mxu0 0
        %1146 = vmatpush1.bf16.msra.mxu0 0
        %1147 = vmatprep.subr.bf16.mxu0 0
        %1148 = vmatpush1.bf16.msra.mxu0 0
        %1149 = vmatprep.subr.bf16.mxu0 0
        %1150 = vmatpush1.bf16.msra.mxu0 0
        %1151 = vmatprep.subr.bf16.mxu0 0
        %1152 = vmatpush1.bf16.msra.mxu0 0
        %1153 = vmatprep.mubr.bf16.mxu0 0
        %1154 = vmatmul.mubr.bf16.gmra.mrb[0].mxu0 %v1107
        %v1155 = vpop.f32.mrb[0].mxu0
        %v1156 = vadd.f32 0.0, %v1155
        %v1157 = vpop.f32.mrb[0].mxu0
        %v1158 = vpop.f32.mrb[0].mxu0
        %v1159 = vadd.f32 0.0, %v1158
        %v1160 = vpop.f32.mrb[0].mxu0
        %1161 = vmatprep.mubr.bf16.mxu0 0
        %1162 = vmatmul.mubr.bf16.gmra.mrb[0].mxu0 %v1110
        %v1163 = vpop.f32.mrb[0].mxu0
        %v1164 = vadd.f32 0.0, %v1163
        %v1165 = vpop.f32.mrb[0].mxu0
        %v1166 = vpop.f32.mrb[0].mxu0
        %v1167 = vadd.f32 0.0, %v1166
        %v1168 = vpop.f32.mrb[0].mxu0
        %1169 = vmatprep.mubr.bf16.mxu0 0
        %1170 = vmatmul.mubr.bf16.gmra.mrb[0].mxu0 %v1113
        %v1171 = vpop.f32.mrb[0].mxu0
        %v1172 = vadd.f32 0.0, %v1171
        %v1173 = vpop.f32.mrb[0].mxu0
        %v1174 = vpop.f32.mrb[0].mxu0
        %v1175 = vadd.f32 0.0, %v1174
        %v1176 = vpop.f32.mrb[0].mxu0
        %1177 = vmatprep.mubr.bf16.mxu0 0
        %1178 = vmatmul.mubr.bf16.gmra.mrb[0].mxu0 %v1116
        %v1179 = vpop.f32.mrb[0].mxu0
        %v1180 = vadd.f32 0.0, %v1179
        %v1181 = vpop.f32.mrb[0].mxu0
        %v1182 = vpop.f32.mrb[0].mxu0
        %v1183 = vadd.f32 0.0, %v1182
        %v1184 = vpop.f32.mrb[0].mxu0
        %1185 = vdwg.mxu0
        %v1186 = vadd.f32 %v1083, %v1156
        %v1187 = vadd.f32 %v1084, %v1159
        %v1188 = vadd.f32 %v1085, %v1164
        %v1189 = vadd.f32 %v1086, %v1167
        %v1190 = vadd.f32 %v1087, %v1172
        %v1191 = vadd.f32 %v1088, %v1175
        %v1192 = vadd.f32 %v1089, %v1180
        %v1193 = vadd.f32 %v1090, %v1183
        %s1194 = scalar_lea.vmem %s464, 160 [#allocation2]
        %v1195 = vld [vmem:[%s1194] sm:$0xff]
        %v1196 = vld [vmem:[%s1194 + $0x10] sm:$0xff]
        %v1197 = vld [vmem:[%s1194 + $0x20] sm:$0xff]
        %v1198 = vld [vmem:[%s1194 + $0x30] sm:$0xff]
        %v1199 = vld [vmem:[%s1194 + $0x40] sm:$0xff]
        %v1200 = vld [vmem:[%s1194 + $0x50] sm:$0xff]
        %v1201 = vld [vmem:[%s1194 + $0x60] sm:$0xff]
        %v1202 = vld [vmem:[%s1194 + $0x70] sm:$0xff]
        %v1203 = vpack.c.bf16 %v1196, %v1195
        %v1204 = vpack.c.bf16 %v1198, %v1197
        %v1205 = vpack.c.bf16 %v1200, %v1199
        %v1206 = vpack.c.bf16 %v1202, %v1201
        %s1207 = scalar_lea.vmem %s1, 28
        %v1208 = vld [vmem:[%s1207] sm:$0xf]
        %v1210 = vsel %vm519, %v1203, 0
        %v1213 = vsel %vm519, %v1204, 0
        %v1216 = vsel %vm519, %v1205, 0
        %v1219 = vsel %vm519, %v1206, 0
        %v1222 = vsel %vm532, %v1208, 0
        %1224 = vmatprep.subr.bf16.mxu0 0
        %1225 = vmatpush1.bf16.msra.mxu0 %v1222
        %1226 = vmatprep.subr.bf16.mxu0 0
        %1227 = vmatpush1.bf16.msra.mxu0 0
        %1228 = vmatprep.subr.bf16.mxu0 0
        %1229 = vmatpush1.bf16.msra.mxu0 0
        %1230 = vmatprep.subr.bf16.mxu0 0
        %1231 = vmatpush1.bf16.msra.mxu0 0
        %1232 = vmatprep.subr.bf16.mxu0 0
        %1233 = vmatpush1.bf16.msra.mxu0 0
        %1234 = vmatprep.subr.bf16.mxu0 0
        %1235 = vmatpush1.bf16.msra.mxu0 0
        %1236 = vmatprep.subr.bf16.mxu0 0
        %1237 = vmatpush1.bf16.msra.mxu0 0
        %1238 = vmatprep.subr.bf16.mxu0 0
        %1239 = vmatpush1.bf16.msra.mxu0 0
        %1240 = vmatprep.subr.bf16.mxu0 0
        %1241 = vmatpush1.bf16.msra.mxu0 0
        %1242 = vmatprep.subr.bf16.mxu0 0
        %1243 = vmatpush1.bf16.msra.mxu0 0
        %1244 = vmatprep.subr.bf16.mxu0 0
        %1245 = vmatpush1.bf16.msra.mxu0 0
        %1246 = vmatprep.subr.bf16.mxu0 0
        %1247 = vmatpush1.bf16.msra.mxu0 0
        %1248 = vmatprep.subr.bf16.mxu0 0
        %1249 = vmatpush1.bf16.msra.mxu0 0
        %1250 = vmatprep.subr.bf16.mxu0 0
        %1251 = vmatpush1.bf16.msra.mxu0 0
        %1252 = vmatprep.subr.bf16.mxu0 0
        %1253 = vmatpush1.bf16.msra.mxu0 0
        %1254 = vmatprep.subr.bf16.mxu0 0
        %1255 = vmatpush1.bf16.msra.mxu0 0
        %1256 = vmatprep.mubr.bf16.mxu0 0
        %1257 = vmatmul.mubr.bf16.gmra.mrb[0].mxu0 %v1210
        %v1258 = vpop.f32.mrb[0].mxu0
        %v1259 = vadd.f32 0.0, %v1258
        %v1260 = vpop.f32.mrb[0].mxu0
        %v1261 = vpop.f32.mrb[0].mxu0
        %v1262 = vadd.f32 0.0, %v1261
        %v1263 = vpop.f32.mrb[0].mxu0
        %1264 = vmatprep.mubr.bf16.mxu0 0
        %1265 = vmatmul.mubr.bf16.gmra.mrb[0].mxu0 %v1213
        %v1266 = vpop.f32.mrb[0].mxu0
        %v1267 = vadd.f32 0.0, %v1266
        %v1268 = vpop.f32.mrb[0].mxu0
        %v1269 = vpop.f32.mrb[0].mxu0
        %v1270 = vadd.f32 0.0, %v1269
        %v1271 = vpop.f32.mrb[0].mxu0
        %1272 = vmatprep.mubr.bf16.mxu0 0
        %1273 = vmatmul.mubr.bf16.gmra.mrb[0].mxu0 %v1216
        %v1274 = vpop.f32.mrb[0].mxu0
        %v1275 = vadd.f32 0.0, %v1274
        %v1276 = vpop.f32.mrb[0].mxu0
        %v1277 = vpop.f32.mrb[0].mxu0
        %v1278 = vadd.f32 0.0, %v1277
        %v1279 = vpop.f32.mrb[0].mxu0
        %1280 = vmatprep.mubr.bf16.mxu0 0
        %1281 = vmatmul.mubr.bf16.gmra.mrb[0].mxu0 %v1219
        %v1282 = vpop.f32.mrb[0].mxu0
        %v1283 = vadd.f32 0.0, %v1282
        %v1284 = vpop.f32.mrb[0].mxu0
        %v1285 = vpop.f32.mrb[0].mxu0
        %v1286 = vadd.f32 0.0, %v1285
        %v1287 = vpop.f32.mrb[0].mxu0
        %1288 = vdwg.mxu0
        %v1289 = vadd.f32 %v1186, %v1259
        %v1290 = vadd.f32 %v1187, %v1262
        %v1291 = vadd.f32 %v1188, %v1267
        %v1292 = vadd.f32 %v1189, %v1270
        %v1293 = vadd.f32 %v1190, %v1275
        %v1294 = vadd.f32 %v1191, %v1278
        %v1295 = vadd.f32 %v1192, %v1283
        %v1296 = vadd.f32 %v1193, %v1286
        %v1297 = vld [vmem:[%s1091 + $0x1] sm:$0xff]
        %v1298 = vld [vmem:[%s1091 + $0x11] sm:$0xff]
        %v1299 = vld [vmem:[%s1091 + $0x21] sm:$0xff]
        %v1300 = vld [vmem:[%s1091 + $0x31] sm:$0xff]
        %v1301 = vld [vmem:[%s1091 + $0x41] sm:$0xff]
        %v1302 = vld [vmem:[%s1091 + $0x51] sm:$0xff]
        %v1303 = vld [vmem:[%s1091 + $0x61] sm:$0xff]
        %v1304 = vld [vmem:[%s1091 + $0x71] sm:$0xff]
        %v1305 = vpack.c.bf16 %v1298, %v1297
        %v1306 = vpack.c.bf16 %v1300, %v1299
        %v1307 = vpack.c.bf16 %v1302, %v1301
        %v1308 = vpack.c.bf16 %v1304, %v1303
        %s1309 = scalar_lea.vmem %s1, 32
        %v1310 = vld [vmem:[%s1309] sm:$0xf]
        %v1312 = vsel %vm519, %v1305, 0
        %v1315 = vsel %vm519, %v1306, 0
        %v1318 = vsel %vm519, %v1307, 0
        %v1321 = vsel %vm519, %v1308, 0
        %v1324 = vsel %vm532, %v1310, 0
        %1326 = vmatprep.subr.bf16.mxu0 0
        %1327 = vmatpush1.bf16.msra.mxu0 %v1324
        %1328 = vmatprep.subr.bf16.mxu0 0
        %1329 = vmatpush1.bf16.msra.mxu0 0
        %1330 = vmatprep.subr.bf16.mxu0 0
        %1331 = vmatpush1.bf16.msra.mxu0 0
        %1332 = vmatprep.subr.bf16.mxu0 0
        %1333 = vmatpush1.bf16.msra.mxu0 0
        %1334 = vmatprep.subr.bf16.mxu0 0
        %1335 = vmatpush1.bf16.msra.mxu0 0
        %1336 = vmatprep.subr.bf16.mxu0 0
        %1337 = vmatpush1.bf16.msra.mxu0 0
        %1338 = vmatprep.subr.bf16.mxu0 0
        %1339 = vmatpush1.bf16.msra.mxu0 0
        %1340 = vmatprep.subr.bf16.mxu0 0
        %1341 = vmatpush1.bf16.msra.mxu0 0
        %1342 = vmatprep.subr.bf16.mxu0 0
        %1343 = vmatpush1.bf16.msra.mxu0 0
        %1344 = vmatprep.subr.bf16.mxu0 0
        %1345 = vmatpush1.bf16.msra.mxu0 0
        %1346 = vmatprep.subr.bf16.mxu0 0
        %1347 = vmatpush1.bf16.msra.mxu0 0
        %1348 = vmatprep.subr.bf16.mxu0 0
        %1349 = vmatpush1.bf16.msra.mxu0 0
        %1350 = vmatprep.subr.bf16.mxu0 0
        %1351 = vmatpush1.bf16.msra.mxu0 0
        %1352 = vmatprep.subr.bf16.mxu0 0
        %1353 = vmatpush1.bf16.msra.mxu0 0
        %1354 = vmatprep.subr.bf16.mxu0 0
        %1355 = vmatpush1.bf16.msra.mxu0 0
        %1356 = vmatprep.subr.bf16.mxu0 0
        %1357 = vmatpush1.bf16.msra.mxu0 0
        %1358 = vmatprep.mubr.bf16.mxu0 0
        %1359 = vmatmul.mubr.bf16.gmra.mrb[0].mxu0 %v1312
        %v1360 = vpop.f32.mrb[0].mxu0
        %v1361 = vadd.f32 0.0, %v1360
        %v1362 = vpop.f32.mrb[0].mxu0
        %v1363 = vpop.f32.mrb[0].mxu0
        %v1364 = vadd.f32 0.0, %v1363
        %v1365 = vpop.f32.mrb[0].mxu0
        %1366 = vmatprep.mubr.bf16.mxu0 0
        %1367 = vmatmul.mubr.bf16.gmra.mrb[0].mxu0 %v1315
        %v1368 = vpop.f32.mrb[0].mxu0
        %v1369 = vadd.f32 0.0, %v1368
        %v1370 = vpop.f32.mrb[0].mxu0
        %v1371 = vpop.f32.mrb[0].mxu0
        %v1372 = vadd.f32 0.0, %v1371
        %v1373 = vpop.f32.mrb[0].mxu0
        %1374 = vmatprep.mubr.bf16.mxu0 0
        %1375 = vmatmul.mubr.bf16.gmra.mrb[0].mxu0 %v1318
        %v1376 = vpop.f32.mrb[0].mxu0
        %v1377 = vadd.f32 0.0, %v1376
        %v1378 = vpop.f32.mrb[0].mxu0
        %v1379 = vpop.f32.mrb[0].mxu0
        %v1380 = vadd.f32 0.0, %v1379
        %v1381 = vpop.f32.mrb[0].mxu0
        %1382 = vmatprep.mubr.bf16.mxu0 0
        %1383 = vmatmul.mubr.bf16.gmra.mrb[0].mxu0 %v1321
        %v1384 = vpop.f32.mrb[0].mxu0
        %v1385 = vadd.f32 0.0, %v1384
        %v1386 = vpop.f32.mrb[0].mxu0
        %v1387 = vpop.f32.mrb[0].mxu0
        %v1388 = vadd.f32 0.0, %v1387
        %v1389 = vpop.f32.mrb[0].mxu0
        %1390 = vdwg.mxu0
        %v1391 = vadd.f32 %v1289, %v1361
        %v1392 = vadd.f32 %v1290, %v1364
        %v1393 = vadd.f32 %v1291, %v1369
        %v1394 = vadd.f32 %v1292, %v1372
        %v1395 = vadd.f32 %v1293, %v1377
        %v1396 = vadd.f32 %v1294, %v1380
        %v1397 = vadd.f32 %v1295, %v1385
        %v1398 = vadd.f32 %v1296, %v1388
        %v1399 = vld [vmem:[%s2] sm:$0x1]
        %v1401 = vlaneseq
        %v1402 = vshrl.u32 %v1401, 7
        %v1403 = vsub.s32 0, %v1402
        %v1404 = vrot.slane %v1399, %v1403
        %v1406 = vadd.f32 %v1391, %v1404
        %v1407 = vadd.f32 %v1392, %v1404
        %v1408 = vadd.f32 %v1393, %v1404
        %v1409 = vadd.f32 %v1394, %v1404
        %v1410 = vadd.f32 %v1395, %v1404
        %v1411 = vadd.f32 %v1396, %v1404
        %v1412 = vadd.f32 %v1397, %v1404
        %v1413 = vadd.f32 %v1398, %v1404
        %v1414 = vmax.f32 %v1406, 0.0
        %v1415 = vmax.f32 %v1407, 0.0
        %v1416 = vmax.f32 %v1408, 0.0
        %v1417 = vmax.f32 %v1409, 0.0
        %v1418 = vmax.f32 %v1410, 0.0
        %v1419 = vmax.f32 %v1411, 0.0
        %v1420 = vmax.f32 %v1412, 0.0
        %v1421 = vmax.f32 %v1413, 0.0
        %1422 = vst [vmem:[%s489] sm:$0xff] %v1414
        %1423 = vst [vmem:[%s489 + $0x8] sm:$0xff] %v1415
        %1424 = vst [vmem:[%s489 + $0x10] sm:$0xff] %v1416
        %1425 = vst [vmem:[%s489 + $0x18] sm:$0xff] %v1417
        %1426 = vst [vmem:[%s489 + $0x20] sm:$0xff] %v1418
        %1427 = vst [vmem:[%s489 + $0x28] sm:$0xff] %v1419
        %1428 = vst [vmem:[%s489 + $0x30] sm:$0xff] %v1420
        %1429 = vst [vmem:[%s489 + $0x38] sm:$0xff] %v1421
        %p1430 = scmp.lt.s32.totalorder %s14, 1
        %s1431 = scalar_select %p1430, %s14, 1
        %s1432 = smul.addr %s1431, 8
        %s1433 = smul.addr %s1432, 8
        %s1434 = scalar_lea.vmem %s3, %s1433
        // Predicated region
        $region71: #{var_encoder_forward.4} parent=65 // pred_check
          %p1435 = pneg %p100
        $region72: #{var_encoder_forward.4} parent=65 // pred_check_branch
          %1437 = sbr.rel (%p1435) target = $region74
        $region73: #{var_encoder_forward.4} parent=65 // pred_region
          _
        $region74: #{var_encoder_forward.4} parent=65 // pred_fallthru
          _
      $region66: #{var_encoder_forward.4} parent=5 // pred_fallthru
        _
      %p1438 = scmp.le.s32.totalorder 2, %s9
      // Predicated region
      $region75: #{var_encoder_forward.4} parent=5 // pred_check
        %p1439 = pneg %p1438
      $region76: #{var_encoder_forward.4} parent=5 // pred_check_branch
        %1441 = sbr.rel (%p1439) target = $region78
      $region77: #{var_encoder_forward.4} parent=5 // pred_region
        %s1442 = ssub.s32 %s9, 2
        // Predicated region
        $region79: #{var_encoder_forward.4} parent=77 // pred_check
          %p1443 = pneg %p106
        $region80: #{var_encoder_forward.4} parent=77 // pred_check_branch
          %1445 = sbr.rel (%p1443) target = $region82
        $region81: #{var_encoder_forward.4} parent=77 // pred_region
          %p1446 = scmp.lt.s32.totalorder %s15, 1
          %s1447 = scalar_select %p1446, %s15, 1
          %s1448 = smul.addr %s1447, 8
          %s1449 = smul.addr %s1448, 8
          %s1450 = scalar_lea.vmem %s3, %s1449
        $region82: #{var_encoder_forward.4} parent=77 // pred_fallthru
          _
      $region78: #{var_encoder_forward.4} parent=5 // pred_fallthru
        _
    $region6: #{var_encoder_forward.4} parent=1 // loop_footer
      %s13 = sadd.s32 1, %s9
    $region7: #{var_encoder_forward.4} parent=1 // loop_footer_branch
      %8 = sbr.rel target = $region3
    $region8: #{var_encoder_forward.4} parent=1 // loop_exit
      _

// kernel: var_encoder_forward.7
$region0: #{var_encoder_forward.7}
  #allocation0 [shape = 'u32[]', space=smem, size = 0x4, offset = 0x4, fixed_abs, tag = 'smem constant byte address 0x4 - core index']
  #allocation1 [shape = 'u32[144,128]{1,0:T(1,128)}', space=vmem, size = 0x12000, scoped, tag = 'internal scratch']
  #allocation2 [shape = 'f32[2,128]{1,0:T(2,128)}', space=vmem, size = 0x400, scoped, tag = 'scratch operand']
  %s0 = inlined_call_operand.vmem [shape: f32[2,2048], index: 0, kind: input, shape index: {}]
  %s1 = inlined_call_operand.vmem [shape: bf16[2048,128], index: 1, kind: input, shape index: {}]
  %s2 = inlined_call_operand.vmem [shape: f32[1,128], index: 2, kind: input, shape index: {}]
  %s3 = inlined_call_operand.vmem [shape: f32[2,128], index: 3, kind: output, shape index: {}]
  %s4 = sld [smem:[#allocation0]]
  $region53: #{var_encoder_forward.7} parent=0
    _
  %s6 = ssub.s32 1, %s4
  %s7 = scalar_select 0, %s6, %s4
  loop: start=0, step=1, limit=6
  $region2: #{var_encoder_forward.7} parent=0 // loop_pre_header
    _
  $region3: #{var_encoder_forward.7} parent=0 // loop_header
    %s9 = sphi 0, %s13
    %p10 = scmp.ge.s32.totalorder %s9, 6
    %s16 = sphi 0, %s35
    %s17 = sphi 0, %s31
    %s18 = sphi 0, %s27
    %s19 = sphi 0, %s16
    %s20 = sphi 0, %s17
    %s21 = sphi 0, %s18
    %s22 = sphi 0, %s19
    %s23 = sphi 0, %s20
    %s24 = sphi 0, %s21
    %s40 = sphi 0, %s42
    %s43 = sphi 0, %s40
    %s44 = sphi 0, %s43
    %s60 = sphi 0, %s44
    %s68 = sphi 0, %s70
    %s71 = sphi 0, %s68
    %s72 = sphi 0, %s71
    %s88 = sphi 0, %s72
    %s94 = sphi 0, %s96
    %s97 = sphi 0, %s94
    %s98 = sphi 0, %s97
    %s114 = sphi 0, %s98
    %s122 = sphi 0, %s124
    %s125 = sphi 0, %s122
    %s126 = sphi 0, %s125
    %s142 = sphi 0, %s126
  $region4: #{var_encoder_forward.7} parent=0 // loop_header_branch
    %12 = sbr.rel (%p10) target = $region8
  $region5: #{var_encoder_forward.7} parent=0 // loop_body
    %s14 = ssub.s32 %s9, 1
    %s15 = ssub.s32 %s9, 2
    %s25 = sadd.s32 1, %s18
    %p26 = scmp.ge.s32.totalorder %s25, 4
    %s27 = scalar_select %p26, 0, %s25
    %s28 = sadd.s32 1, %s17
    %s29 = scalar_select %p26, %s28, %s17
    %p30 = scmp.ge.s32.totalorder %s29, 1
    %s31 = scalar_select %p30, 0, %s29
    %s32 = sadd.s32 1, %s16
    %s33 = scalar_select %p30, %s32, %s16
    %p34 = scmp.ge.s32.totalorder %s33, 1
    %s35 = scalar_select %p34, 0, %s33
    %s36 = ssub.s32 %s16, %s35
    %s37 = ssub.s32 %s18, %s27
    %s38 = sor.u32 %s36, %s37
    %p39 = scmp.eq.s32.totalorder %s38, 0
    %s41 = sadd.s32 %s40, 1
    %s42 = scalar_select %p39, %s40, %s41
    %p45 = pneg %p39
    %p46 = scmp.eq.s32.totalorder %s9, 3
    %p47 = por %p45, %p46
    %p48 = scmp.ne.s32.totalorder %s40, %s43
    %p49 = scmp.eq.s32.totalorder %s9, 0
    %p50 = por %p48, %p49
    %p51 = scmp.ne.s32.totalorder %s40, %s43
    %p52 = scmp.eq.s32.totalorder %s14, 3
    %p53 = por %p51, %p52
    %p54 = scmp.ne.s32.totalorder %s43, %s44
    %p55 = scmp.eq.s32.totalorder %s14, 0
    %p56 = por %p54, %p55
    %p57 = scmp.ne.s32.totalorder %s43, %s44
    %p58 = scmp.eq.s32.totalorder %s15, 3
    %p59 = por %p57, %p58
    %p61 = scmp.ne.s32.totalorder %s44, %s60
    %p62 = scmp.eq.s32.totalorder %s15, 0
    %p63 = por %p61, %p62
    %s64 = ssub.s32 %s18, %s27
    %s65 = ssub.s32 %s17, %s31
    %s66 = sor.u32 %s64, %s65
    %p67 = scmp.eq.s32.totalorder %s66, 0
    %s69 = sadd.s32 %s68, 1
    %s70 = scalar_select %p67, %s68, %s69
    %p73 = pneg %p67
    %p74 = scmp.eq.s32.totalorder %s9, 3
    %p75 = por %p73, %p74
    %p76 = scmp.ne.s32.totalorder %s68, %s71
    %p77 = scmp.eq.s32.totalorder %s9, 0
    %p78 = por %p76, %p77
    %p79 = scmp.ne.s32.totalorder %s68, %s71
    %p80 = scmp.eq.s32.totalorder %s14, 3
    %p81 = por %p79, %p80
    %p82 = scmp.ne.s32.totalorder %s71, %s72
    %p83 = scmp.eq.s32.totalorder %s14, 0
    %p84 = por %p82, %p83
    %p85 = scmp.ne.s32.totalorder %s71, %s72
    %p86 = scmp.eq.s32.totalorder %s15, 3
    %p87 = por %p85, %p86
    %p89 = scmp.ne.s32.totalorder %s72, %s88
    %p90 = scmp.eq.s32.totalorder %s15, 0
    %p91 = por %p89, %p90
    %s92 = ssub.s32 %s17, %s31
    %p93 = scmp.eq.s32.totalorder %s92, 0
    %s95 = sadd.s32 %s94, 1
    %s96 = scalar_select %p93, %s94, %s95
    %p99 = pneg %p93
    %p100 = scmp.eq.s32.totalorder %s9, 3
    %p101 = por %p99, %p100
    %p102 = scmp.ne.s32.totalorder %s94, %s97
    %p103 = scmp.eq.s32.totalorder %s9, 0
    %p104 = por %p102, %p103
    %p105 = scmp.ne.s32.totalorder %s94, %s97
    %p106 = scmp.eq.s32.totalorder %s14, 3
    %p107 = por %p105, %p106
    %p108 = scmp.ne.s32.totalorder %s97, %s98
    %p109 = scmp.eq.s32.totalorder %s14, 0
    %p110 = por %p108, %p109
    %p111 = scmp.ne.s32.totalorder %s97, %s98
    %p112 = scmp.eq.s32.totalorder %s15, 3
    %p113 = por %p111, %p112
    %p115 = scmp.ne.s32.totalorder %s98, %s114
    %p116 = scmp.eq.s32.totalorder %s15, 0
    %p117 = por %p115, %p116
    %s118 = ssub.s32 %s16, %s35
    %s119 = ssub.s32 %s17, %s31
    %s120 = sor.u32 %s118, %s119
    %p121 = scmp.eq.s32.totalorder %s120, 0
    %s123 = sadd.s32 %s122, 1
    %s124 = scalar_select %p121, %s122, %s123
    %p127 = pneg %p121
    %p128 = scmp.eq.s32.totalorder %s9, 3
    %p129 = por %p127, %p128
    %p130 = scmp.ne.s32.totalorder %s122, %s125
    %p131 = scmp.eq.s32.totalorder %s9, 0
    %p132 = por %p130, %p131
    %p133 = scmp.ne.s32.totalorder %s122, %s125
    %p134 = scmp.eq.s32.totalorder %s14, 3
    %p135 = por %p133, %p134
    %p136 = scmp.ne.s32.totalorder %s125, %s126
    %p137 = scmp.eq.s32.totalorder %s14, 0
    %p138 = por %p136, %p137
    %p139 = scmp.ne.s32.totalorder %s125, %s126
    %p140 = scmp.eq.s32.totalorder %s15, 3
    %p141 = por %p139, %p140
    %p143 = scmp.ne.s32.totalorder %s126, %s142
    %p144 = scmp.eq.s32.totalorder %s15, 0
    %p145 = por %p143, %p144
    %p146 = scmp.le.s32.totalorder 1, %s9
    %p147 = scmp.lt.s32.totalorder %s9, 5
    %p148 = pnand %p146, %p147
    %p149 = pneg %p148
    // Predicated region
    $region9: #{var_encoder_forward.7} parent=5 // pred_check
      _
    $region10: #{var_encoder_forward.7} parent=5 // pred_check_branch
      %151 = sbr.rel (%p148) target = $region12
    $region11: #{var_encoder_forward.7} parent=5 // pred_region
      %s152 = ssub.s32 %s9, 1
      // Predicated region
      $region13: #{var_encoder_forward.7} parent=11 // pred_check
        %p153 = pneg %p110
      $region14: #{var_encoder_forward.7} parent=11 // pred_check_branch
        %155 = sbr.rel (%p153) target = $region16
      $region15: #{var_encoder_forward.7} parent=11 // pred_region
        %p156 = scmp.lt.s32.totalorder %s20, 0
        %s157 = scalar_select %p156, %s20, 0
        %s158 = scalar_lea.vmem %s2, %s157
      $region16: #{var_encoder_forward.7} parent=11 // pred_fallthru
        _
    $region12: #{var_encoder_forward.7} parent=5 // pred_fallthru
      _
    %p159 = scmp.lt.s32.totalorder %s9, 4
    // Predicated region
    $region17: #{var_encoder_forward.7} parent=5 // pred_check
      %p160 = pneg %p159
    $region18: #{var_encoder_forward.7} parent=5 // pred_check_branch
      %162 = sbr.rel (%p160) target = $region20
    $region19: #{var_encoder_forward.7} parent=5 // pred_region
      // Predicated region
      $region21: #{var_encoder_forward.7} parent=19 // pred_check
        %p163 = pneg %p50
      $region22: #{var_encoder_forward.7} parent=19 // pred_check_branch
        %165 = sbr.rel (%p163) target = $region24
      $region23: #{var_encoder_forward.7} parent=19 // pred_region
        %s166 = smul.u32 4, %s18
        %p167 = scmp.lt.s32.totalorder %s16, 0
        %s168 = scalar_select %p167, %s16, 0
        %p169 = scmp.lt.s32.totalorder %s166, 15
        %s170 = scalar_select %p169, %s166, 15
        %s171 = smul.addr %s168, 16
        %s172 = sadd.s32 %s170, %s171
        %s173 = smul.addr %s172, 2
        %s174 = scalar_lea.vmem %s0, %s173
        %s175 = smul.u32 4, %s18
      $region24: #{var_encoder_forward.7} parent=19 // pred_fallthru
        _
      // Predicated region
      $region25: #{var_encoder_forward.7} parent=19 // pred_check
        %p176 = pneg %p78
      $region26: #{var_encoder_forward.7} parent=19 // pred_check_branch
        %178 = sbr.rel (%p176) target = $region28
      $region27: #{var_encoder_forward.7} parent=19 // pred_region
        %s179 = smul.u32 64, %s18
        %p180 = scmp.lt.s32.totalorder %s179, 255
        %s181 = scalar_select %p180, %s179, 255
        %p182 = scmp.lt.s32.totalorder %s17, 0
        %s183 = scalar_select %p182, %s17, 0
        %s184 = sadd.s32 %s183, %s181
        %s185 = smul.addr %s184, 4
        %s186 = scalar_lea.vmem %s1, %s185
        %s187 = smul.u32 64, %s18
      $region28: #{var_encoder_forward.7} parent=19 // pred_fallthru
        _
    $region20: #{var_encoder_forward.7} parent=5 // pred_fallthru
      _
    %p188 = scmp.le.s32.totalorder 1, %s9
    %p189 = scmp.lt.s32.totalorder %s9, 5
    %p190 = pnand %p188, %p189
    %p191 = pneg %p190
    // Predicated region
    $region29: #{var_encoder_forward.7} parent=5 // pred_check
      _
    $region30: #{var_encoder_forward.7} parent=5 // pred_check_branch
      %193 = sbr.rel (%p190) target = $region32
    $region31: #{var_encoder_forward.7} parent=5 // pred_region
      %s194 = ssub.s32 %s9, 1
      %s195 = smul.u32 4, %s21
      %p196 = scmp.lt.s32.totalorder %s19, 0
      %s197 = scalar_select %p196, %s19, 0
      %p198 = scmp.lt.s32.totalorder %s195, 15
      %s199 = scalar_select %p198, %s195, 15
      %s200 = smul.addr %s197, 16
      %s201 = sadd.s32 %s199, %s200
      %s202 = smul.addr %s201, 2
      %s203 = scalar_lea.vmem %s0, %s202
      %p204 = pneg %p56
      %p205 = pneg %p53
      %s206 = smul.u32 64, %s21
      %p207 = scmp.lt.s32.totalorder %s206, 255
      %s208 = scalar_select %p207, %s206, 255
      %p209 = scmp.lt.s32.totalorder %s20, 0
      %s210 = scalar_select %p209, %s20, 0
      %s211 = sadd.s32 %s210, %s208
      %s212 = smul.addr %s211, 4
      %s213 = scalar_lea.vmem %s1, %s212
      %p214 = pneg %p84
      %p215 = pneg %p81
      %p216 = scmp.lt.s32.totalorder %s20, 0
      %s217 = scalar_select %p216, %s20, 0
      %s218 = scalar_lea.vmem %s2, %s217
      %p219 = pneg %p110
      %p220 = pneg %p107
      %p221 = pneg %p138
      %p222 = pneg %p135
      %p223 = scmp.lt.s32.totalorder %s19, 0
      %s224 = scalar_select %p223, %s19, 0
      %p225 = scmp.lt.s32.totalorder %s20, 0
      %s226 = scalar_select %p225, %s20, 0
      %s227 = sadd.s32 %s226, %s224
      %s228 = smul.addr %s227, 2
      %s229 = scalar_lea.vmem %s3, %s228
      %s230 = smul.u32 4, %s21
      %p231 = scmp.lt.s32.totalorder %s19, 0
      %s232 = scalar_select %p231, %s19, 0
      %p233 = scmp.lt.s32.totalorder %s230, 15
      %s234 = scalar_select %p233, %s230, 15
      %s235 = smul.addr %s232, 16
      %s236 = sadd.s32 %s234, %s235
      %s237 = smul.addr %s236, 2
      %s238 = scalar_lea.vmem %s0, %s237
      %s239 = smul.u32 4, %s21
      %s240 = smul.u32 64, %s21
      %p241 = scmp.lt.s32.totalorder %s240, 255
      %s242 = scalar_select %p241, %s240, 255
      %p243 = scmp.lt.s32.totalorder %s20, 0
      %s244 = scalar_select %p243, %s20, 0
      %s245 = sadd.s32 %s244, %s242
      %s246 = smul.addr %s245, 4
      %s247 = scalar_lea.vmem %s1, %s246
      %s248 = smul.u32 64, %s21
      %p249 = scmp.lt.s32.totalorder %s20, 0
      %s250 = scalar_select %p249, %s20, 0
      %s251 = scalar_lea.vmem %s2, %s250
      %p252 = scmp.lt.s32.totalorder %s19, 0
      %s253 = scalar_select %p252, %s19, 0
      %p254 = scmp.lt.s32.totalorder %s20, 0
      %s255 = scalar_select %p254, %s20, 0
      %s256 = sadd.s32 %s255, %s253
      %s257 = smul.addr %s256, 2
      %s258 = scalar_lea.vmem %s3, %s257
      %p260 = scmp.eq.s32.totalorder %s21, 0
      // Predicated region
      $region33: #{var_encoder_forward.7} parent=31 // pred_check
        %p261 = pneg %p260
      $region34: #{var_encoder_forward.7} parent=31 // pred_check_branch
        %263 = sbr.rel (%p261) target = $region36
      $region35: #{var_encoder_forward.7} parent=31 // pred_region
        %264 = vst [vmem:[#allocation2] sm:$0x3] 0.0
      $region36: #{var_encoder_forward.7} parent=31 // pred_fallthru
        _
      %v265 = vld [vmem:[%s238] sm:$0xff]
      %v267 = vcombine.high %v265, %v265
      %v269 = vunpack.c.l.s4 1983009808
      %v270 = vunpack.c.0.s8 %v269
      %v271 = vlaneseq
      %v272 = vshrl.u32 %v271, 7
      %v273 = vsub.s32 %v270, %v272
      %v274 = vrot.slane %v265, %v273
      %v276 = vunpack.c.l.s4 1983009808
      %v277 = vunpack.c.0.s8 %v276
      %v278 = vlaneseq
      %v279 = vshrl.u32 %v278, 7
      %v280 = vsub.s32 %v277, %v279
      %v281 = vrot.slane %v267, %v280
      %v282 = vcombine.high %v274, %v274
      %v283 = vcombine.high %v281, %v281
      %v288 = vpack.c.bf16 %v274, %v274
      %v289 = vpack.c.bf16 %v282, %v282
      %v290 = vpack.c.bf16 %v281, %v281
      %v291 = vpack.c.bf16 %v283, %v283
      %v292 = vld [vmem:[#allocation2] sm:$0x3]
      %v293 = vld [vmem:[%s247] sm:$0xf]
      %v294 = vld [vmem:[%s247 + $0x4] sm:$0xf]
      %v295 = vld [vmem:[%s247 + $0x8] sm:$0xf]
      %v296 = vld [vmem:[%s247 + $0xc] sm:$0xf]
      %v297 = vld [vmem:[%s247 + $0x10] sm:$0xf]
      %v298 = vld [vmem:[%s247 + $0x14] sm:$0xf]
      %v299 = vld [vmem:[%s247 + $0x18] sm:$0xf]
      %v300 = vld [vmem:[%s247 + $0x1c] sm:$0xf]
      %v301 = vld [vmem:[%s247 + $0x20] sm:$0xf]
      %v302 = vld [vmem:[%s247 + $0x24] sm:$0xf]
      %v303 = vld [vmem:[%s247 + $0x28] sm:$0xf]
      %v304 = vld [vmem:[%s247 + $0x2c] sm:$0xf]
      %v305 = vld [vmem:[%s247 + $0x30] sm:$0xf]
      %v306 = vld [vmem:[%s247 + $0x34] sm:$0xf]
      %v307 = vld [vmem:[%s247 + $0x38] sm:$0xf]
      %v308 = vld [vmem:[%s247 + $0x3c] sm:$0xf]
      %v309 = vld [vmem:[%s247 + $0x40] sm:$0xf]
      %v310 = vld [vmem:[%s247 + $0x44] sm:$0xf]
      %v311 = vld [vmem:[%s247 + $0x48] sm:$0xf]
      %v312 = vld [vmem:[%s247 + $0x4c] sm:$0xf]
      %v313 = vld [vmem:[%s247 + $0x50] sm:$0xf]
      %v314 = vld [vmem:[%s247 + $0x54] sm:$0xf]
      %v315 = vld [vmem:[%s247 + $0x58] sm:$0xf]
      %v316 = vld [vmem:[%s247 + $0x5c] sm:$0xf]
      %v317 = vld [vmem:[%s247 + $0x60] sm:$0xf]
      %v318 = vld [vmem:[%s247 + $0x64] sm:$0xf]
      %v319 = vld [vmem:[%s247 + $0x68] sm:$0xf]
      %v320 = vld [vmem:[%s247 + $0x6c] sm:$0xf]
      %v321 = vld [vmem:[%s247 + $0x70] sm:$0xf]
      %v322 = vld [vmem:[%s247 + $0x74] sm:$0xf]
      %v323 = vld [vmem:[%s247 + $0x78] sm:$0xf]
      %v324 = vld [vmem:[%s247 + $0x7c] sm:$0xf]
      %v325 = vld [vmem:[%s247 + $0x80] sm:$0xf]
      %v326 = vld [vmem:[%s247 + $0x84] sm:$0xf]
      %v327 = vld [vmem:[%s247 + $0x88] sm:$0xf]
      %v328 = vld [vmem:[%s247 + $0x8c] sm:$0xf]
      %v329 = vld [vmem:[%s247 + $0x90] sm:$0xf]
      %v330 = vld [vmem:[%s247 + $0x94] sm:$0xf]
      %v331 = vld [vmem:[%s247 + $0x98] sm:$0xf]
      %v332 = vld [vmem:[%s247 + $0x9c] sm:$0xf]
      %v333 = vld [vmem:[%s247 + $0xa0] sm:$0xf]
      %v334 = vld [vmem:[%s247 + $0xa4] sm:$0xf]
      %v335 = vld [vmem:[%s247 + $0xa8] sm:$0xf]
      %v336 = vld [vmem:[%s247 + $0xac] sm:$0xf]
      %v337 = vld [vmem:[%s247 + $0xb0] sm:$0xf]
      %v338 = vld [vmem:[%s247 + $0xb4] sm:$0xf]
      %v339 = vld [vmem:[%s247 + $0xb8] sm:$0xf]
      %v340 = vld [vmem:[%s247 + $0xbc] sm:$0xf]
      %v341 = vld [vmem:[%s247 + $0xc0] sm:$0xf]
      %v342 = vld [vmem:[%s247 + $0xc4] sm:$0xf]
      %v343 = vld [vmem:[%s247 + $0xc8] sm:$0xf]
      %v344 = vld [vmem:[%s247 + $0xcc] sm:$0xf]
      %v345 = vld [vmem:[%s247 + $0xd0] sm:$0xf]
      %v346 = vld [vmem:[%s247 + $0xd4] sm:$0xf]
      %v347 = vld [vmem:[%s247 + $0xd8] sm:$0xf]
      %v348 = vld [vmem:[%s247 + $0xdc] sm:$0xf]
      %v349 = vld [vmem:[%s247 + $0xe0] sm:$0xf]
      %v350 = vld [vmem:[%s247 + $0xe4] sm:$0xf]
      %v351 = vld [vmem:[%s247 + $0xe8] sm:$0xf]
      %v352 = vld [vmem:[%s247 + $0xec] sm:$0xf]
      %v353 = vld [vmem:[%s247 + $0xf0] sm:$0xf]
      %v354 = vld [vmem:[%s247 + $0xf4] sm:$0xf]
      %v355 = vld [vmem:[%s247 + $0xf8] sm:$0xf]
      %v356 = vld [vmem:[%s247 + $0xfc] sm:$0xf]
      %v421 = vunpack.c.l.b16 %v293
      %v422 = vunpack.c.l.b16 %v294
      %v423 = vunpack.c.l.b16 %v295
      %v424 = vunpack.c.l.b16 %v296
      %v425 = vunpack.c.l.b16 %v297
      %v426 = vunpack.c.l.b16 %v298
      %v427 = vunpack.c.l.b16 %v299
      %v428 = vunpack.c.l.b16 %v300
      %v429 = vunpack.c.l.b16 %v301
      %v430 = vunpack.c.l.b16 %v302
      %v431 = vunpack.c.l.b16 %v303
      %v432 = vunpack.c.l.b16 %v304
      %v433 = vunpack.c.l.b16 %v305
      %v434 = vunpack.c.l.b16 %v306
      %v435 = vunpack.c.l.b16 %v307
      %v436 = vunpack.c.l.b16 %v308
      %v437 = vunpack.c.l.b16 %v309
      %v438 = vunpack.c.l.b16 %v310
      %v439 = vunpack.c.l.b16 %v311
      %v440 = vunpack.c.l.b16 %v312
      %v441 = vunpack.c.l.b16 %v313
      %v442 = vunpack.c.l.b16 %v314
      %v443 = vunpack.c.l.b16 %v315
      %v444 = vunpack.c.l.b16 %v316
      %v445 = vunpack.c.l.b16 %v317
      %v446 = vunpack.c.l.b16 %v318
      %v447 = vunpack.c.l.b16 %v319
      %v448 = vunpack.c.l.b16 %v320
      %v449 = vunpack.c.l.b16 %v321
      %v450 = vunpack.c.l.b16 %v322
      %v451 = vunpack.c.l.b16 %v323
      %v452 = vunpack.c.l.b16 %v324
      %v453 = vunpack.c.l.b16 %v325
      %v454 = vunpack.c.l.b16 %v326
      %v455 = vunpack.c.l.b16 %v327
      %v456 = vunpack.c.l.b16 %v328
      %v457 = vunpack.c.l.b16 %v329
      %v458 = vunpack.c.l.b16 %v330
      %v459 = vunpack.c.l.b16 %v331
      %v460 = vunpack.c.l.b16 %v332
      %v461 = vunpack.c.l.b16 %v333
      %v462 = vunpack.c.l.b16 %v334
      %v463 = vunpack.c.l.b16 %v335
      %v464 = vunpack.c.l.b16 %v336
      %v465 = vunpack.c.l.b16 %v337
      %v466 = vunpack.c.l.b16 %v338
      %v467 = vunpack.c.l.b16 %v339
      %v468 = vunpack.c.l.b16 %v340
      %v469 = vunpack.c.l.b16 %v341
      %v470 = vunpack.c.l.b16 %v342
      %v471 = vunpack.c.l.b16 %v343
      %v472 = vunpack.c.l.b16 %v344
      %v473 = vunpack.c.l.b16 %v345
      %v474 = vunpack.c.l.b16 %v346
      %v475 = vunpack.c.l.b16 %v347
      %v476 = vunpack.c.l.b16 %v348
      %v477 = vunpack.c.l.b16 %v349
      %v478 = vunpack.c.l.b16 %v350
      %v479 = vunpack.c.l.b16 %v351
      %v480 = vunpack.c.l.b16 %v352
      %v481 = vunpack.c.l.b16 %v353
      %v482 = vunpack.c.l.b16 %v354
      %v483 = vunpack.c.l.b16 %v355
      %v484 = vunpack.c.l.b16 %v356
      %v485 = vpack.c.b16 %v422, %v421
      %v486 = vpack.c.b16 %v424, %v423
      %v487 = vpack.c.b16 %v426, %v425
      %v488 = vpack.c.b16 %v428, %v427
      %v489 = vpack.c.b16 %v430, %v429
      %v490 = vpack.c.b16 %v432, %v431
      %v491 = vpack.c.b16 %v434, %v433
      %v492 = vpack.c.b16 %v436, %v435
      %v493 = vpack.c.b16 %v438, %v437
      %v494 = vpack.c.b16 %v440, %v439
      %v495 = vpack.c.b16 %v442, %v441
      %v496 = vpack.c.b16 %v444, %v443
      %v497 = vpack.c.b16 %v446, %v445
      %v498 = vpack.c.b16 %v448, %v447
      %v499 = vpack.c.b16 %v450, %v449
      %v500 = vpack.c.b16 %v452, %v451
      %v501 = vpack.c.b16 %v454, %v453
      %v502 = vpack.c.b16 %v456, %v455
      %v503 = vpack.c.b16 %v458, %v457
      %v504 = vpack.c.b16 %v460, %v459
      %v505 = vpack.c.b16 %v462, %v461
      %v506 = vpack.c.b16 %v464, %v463
      %v507 = vpack.c.b16 %v466, %v465
      %v508 = vpack.c.b16 %v468, %v467
      %v509 = vpack.c.b16 %v470, %v469
      %v510 = vpack.c.b16 %v472, %v471
      %v511 = vpack.c.b16 %v474, %v473
      %v512 = vpack.c.b16 %v476, %v475
      %v513 = vpack.c.b16 %v478, %v477
      %v514 = vpack.c.b16 %v480, %v479
      %v515 = vpack.c.b16 %v482, %v481
      %v516 = vpack.c.b16 %v484, %v483
      %549 = vmatprep.subr.bf16.mxu0 0
      %550 = vmatpush1.bf16.msra.mxu0 %v485
      %551 = vmatprep.subr.bf16.mxu0 0
      %552 = vmatpush1.bf16.msra.mxu0 %v486
      %553 = vmatprep.subr.bf16.mxu0 0
      %554 = vmatpush1.bf16.msra.mxu0 %v487
      %555 = vmatprep.subr.bf16.mxu0 0
      %556 = vmatpush1.bf16.msra.mxu0 %v488
      %557 = vmatprep.subr.bf16.mxu0 0
      %558 = vmatpush1.bf16.msra.mxu0 %v489
      %559 = vmatprep.subr.bf16.mxu0 0
      %560 = vmatpush1.bf16.msra.mxu0 %v490
      %561 = vmatprep.subr.bf16.mxu0 0
      %562 = vmatpush1.bf16.msra.mxu0 %v491
      %563 = vmatprep.subr.bf16.mxu0 0
      %564 = vmatpush1.bf16.msra.mxu0 %v492
      %565 = vmatprep.subr.bf16.mxu0 0
      %566 = vmatpush1.bf16.msra.mxu0 %v493
      %567 = vmatprep.subr.bf16.mxu0 0
      %568 = vmatpush1.bf16.msra.mxu0 %v494
      %569 = vmatprep.subr.bf16.mxu0 0
      %570 = vmatpush1.bf16.msra.mxu0 %v495
      %571 = vmatprep.subr.bf16.mxu0 0
      %572 = vmatpush1.bf16.msra.mxu0 %v496
      %573 = vmatprep.subr.bf16.mxu0 0
      %574 = vmatpush1.bf16.msra.mxu0 %v497
      %575 = vmatprep.subr.bf16.mxu0 0
      %576 = vmatpush1.bf16.msra.mxu0 %v498
      %577 = vmatprep.subr.bf16.mxu0 0
      %578 = vmatpush1.bf16.msra.mxu0 %v499
      %579 = vmatprep.subr.bf16.mxu0 0
      %580 = vmatpush1.bf16.msra.mxu0 %v500
      %581 = vmatprep.mubr.bf16.mxu0 %v289
      %582 = vmatmul.mubr.bf16.gmra.mrb[0].mxu0 %v288
      %v583 = vpop.f32.mrb[0].mxu0
      %v584 = vadd.f32 0.0, %v583
      %v585 = vpop.f32.mrb[0].mxu0
      %v586 = vpop.f32.mrb[0].mxu0
      %v587 = vpop.f32.mrb[0].mxu0
      %588 = vdwg.mxu0
      %589 = vmatprep.subr.bf16.mxu0 0
      %590 = vmatpush1.bf16.msra.mxu0 %v501
      %591 = vmatprep.subr.bf16.mxu0 0
      %592 = vmatpush1.bf16.msra.mxu0 %v502
      %593 = vmatprep.subr.bf16.mxu0 0
      %594 = vmatpush1.bf16.msra.mxu0 %v503
      %595 = vmatprep.subr.bf16.mxu0 0
      %596 = vmatpush1.bf16.msra.mxu0 %v504
      %597 = vmatprep.subr.bf16.mxu0 0
      %598 = vmatpush1.bf16.msra.mxu0 %v505
      %599 = vmatprep.subr.bf16.mxu0 0
      %600 = vmatpush1.bf16.msra.mxu0 %v506
      %601 = vmatprep.subr.bf16.mxu0 0
      %602 = vmatpush1.bf16.msra.mxu0 %v507
      %603 = vmatprep.subr.bf16.mxu0 0
      %604 = vmatpush1.bf16.msra.mxu0 %v508
      %605 = vmatprep.subr.bf16.mxu0 0
      %606 = vmatpush1.bf16.msra.mxu0 %v509
      %607 = vmatprep.subr.bf16.mxu0 0
      %608 = vmatpush1.bf16.msra.mxu0 %v510
      %609 = vmatprep.subr.bf16.mxu0 0
      %610 = vmatpush1.bf16.msra.mxu0 %v511
      %611 = vmatprep.subr.bf16.mxu0 0
      %612 = vmatpush1.bf16.msra.mxu0 %v512
      %613 = vmatprep.subr.bf16.mxu0 0
      %614 = vmatpush1.bf16.msra.mxu0 %v513
      %615 = vmatprep.subr.bf16.mxu0 0
      %616 = vmatpush1.bf16.msra.mxu0 %v514
      %617 = vmatprep.subr.bf16.mxu0 0
      %618 = vmatpush1.bf16.msra.mxu0 %v515
      %619 = vmatprep.subr.bf16.mxu0 0
      %620 = vmatpush1.bf16.msra.mxu0 %v516
      %621 = vmatprep.mubr.bf16.mxu0 %v291
      %622 = vmatmul.mubr.bf16.gmra.mrb[0].mxu0 %v290
      %v623 = vpop.f32.mrb[0].mxu0
      %v624 = vadd.f32 %v584, %v623
      %v625 = vpop.f32.mrb[0].mxu0
      %v626 = vpop.f32.mrb[0].mxu0
      %v627 = vpop.f32.mrb[0].mxu0
      %628 = vdwg.mxu0
      %v629 = vadd.f32 %v292, %v624
      %630 = vst [vmem:[#allocation2] sm:$0x3] %v629
      %p631 = scmp.eq.s32.totalorder %s21, 3
      // Predicated region
      $region37: #{var_encoder_forward.7} parent=31 // pred_check
        %p632 = pneg %p631
      $region38: #{var_encoder_forward.7} parent=31 // pred_check_branch
        %634 = sbr.rel (%p632) target = $region40
      $region39: #{var_encoder_forward.7} parent=31 // pred_region
        %v635 = vld [vmem:[#allocation2] sm:$0x3]
        %v636 = vld [vmem:[%s251] sm:$0x1]
        %v638 = vlaneseq
        %v639 = vshrl.u32 %v638, 7
        %v640 = vsub.s32 0, %v639
        %v641 = vrot.slane %v636, %v640
        %v643 = vadd.f32 %v635, %v641
        %644 = vst [vmem:[%s258] sm:$0x3] %v643
      $region40: #{var_encoder_forward.7} parent=31 // pred_fallthru
        _
      %p645 = scmp.lt.s32.totalorder %s19, 0
      %s646 = scalar_select %p645, %s19, 0
      %p647 = scmp.lt.s32.totalorder %s20, 0
      %s648 = scalar_select %p647, %s20, 0
      %s649 = sadd.s32 %s648, %s646
      %s650 = smul.addr %s649, 2
      %s651 = scalar_lea.vmem %s3, %s650
      // Predicated region
      $region41: #{var_encoder_forward.7} parent=31 // pred_check
        %p652 = pneg %p135
      $region42: #{var_encoder_forward.7} parent=31 // pred_check_branch
        %654 = sbr.rel (%p652) target = $region44
      $region43: #{var_encoder_forward.7} parent=31 // pred_region
        _
      $region44: #{var_encoder_forward.7} parent=31 // pred_fallthru
        _
      // Predicated region
      $region45: #{var_encoder_forward.7} parent=31 // pred_check
        %p655 = pneg %p135
      $region46: #{var_encoder_forward.7} parent=31 // pred_check_branch
        %657 = sbr.rel (%p655) target = $region48
      $region47: #{var_encoder_forward.7} parent=31 // pred_region
        %p658 = scmp.lt.s32.totalorder %s19, 0
        %s659 = scalar_select %p658, %s19, 0
        %p660 = scmp.lt.s32.totalorder %s20, 0
        %s661 = scalar_select %p660, %s20, 0
        %s662 = sadd.s32 %s661, %s659
        %s663 = smul.addr %s662, 2
        %s664 = scalar_lea.vmem %s3, %s663
      $region48: #{var_encoder_forward.7} parent=31 // pred_fallthru
        _
    $region32: #{var_encoder_forward.7} parent=5 // pred_fallthru
      _
    %p665 = scmp.le.s32.totalorder 2, %s9
    // Predicated region
    $region49: #{var_encoder_forward.7} parent=5 // pred_check
      %p666 = pneg %p665
    $region50: #{var_encoder_forward.7} parent=5 // pred_check_branch
      %668 = sbr.rel (%p666) target = $region52
    $region51: #{var_encoder_forward.7} parent=5 // pred_region
      %s669 = ssub.s32 %s9, 2
    $region52: #{var_encoder_forward.7} parent=5 // pred_fallthru
      _
  $region6: #{var_encoder_forward.7} parent=0 // loop_footer
    %s13 = sadd.s32 1, %s9
  $region7: #{var_encoder_forward.7} parent=0 // loop_footer_branch
    %8 = sbr.rel target = $region3
  $region8: #{var_encoder_forward.7} parent=0 // loop_exit
    _

// kernel: var_encoder_forward.5
$region0: #{var_encoder_forward.5}
  #allocation0 [shape = 'u32[]', space=smem, size = 0x4, offset = 0x4, fixed_abs, tag = 'smem constant byte address 0x4 - core index']
  #allocation1 [shape = 'u32[144,128]{1,0:T(1,128)}', space=vmem, size = 0x12000, scoped, tag = 'internal scratch']
  %s0 = inlined_call_operand.vmem [shape: f32[2,2,2,5,9,128], index: 0, kind: input, shape index: {}]
  %s1 = inlined_call_operand.vmem [shape: bf16[9,128,128], index: 1, kind: input, shape index: {}]
  %s2 = inlined_call_operand.vmem [shape: f32[1,128], index: 2, kind: input, shape index: {}]
  %s3 = inlined_call_operand.vmem [shape: f32[2,32,128], index: 3, kind: output, shape index: {}]
  %s4 = sld [smem:[#allocation0]]
  $region83: #{var_encoder_forward.5} parent=0
    _
  %s6 = ssub.s32 1, %s4
  %s7 = scalar_select 0, %s6, %s4
  $region1: #{var_encoder_forward.5} parent=0
    #allocation2 [shape = 'u8[327680]{0}', space=vmem, size = 0x50000, scoped, tag = 'input window, operand 0']
    loop: start=0, step=1, limit=4
    $region2: #{var_encoder_forward.5} parent=1 // loop_pre_header
      _
    $region3: #{var_encoder_forward.5} parent=1 // loop_header
      %s9 = sphi 0, %s13
      %p10 = scmp.ge.s32.totalorder %s9, 4
      %s19 = sphi 0, %s21
      %s22 = sphi 0, %s19
      %s23 = sphi 0, %s22
      %s39 = sphi 0, %s23
      %s43 = sphi 0, %s43
      %s45 = sphi 0, %s43
      %s46 = sphi 0, %s45
      %s60 = sphi 0, %s46
      %s64 = sphi 0, %s64
      %s66 = sphi 0, %s64
      %s67 = sphi 0, %s66
      %s81 = sphi 0, %s67
      %s87 = sphi 0, %s89
      %s90 = sphi 0, %s87
      %s91 = sphi 0, %s90
      %s107 = sphi 0, %s91
    $region4: #{var_encoder_forward.5} parent=1 // loop_header_branch
      %12 = sbr.rel (%p10) target = $region8
    $region5: #{var_encoder_forward.5} parent=1 // loop_body
      %s14 = ssub.s32 %s9, 1
      %s15 = ssub.s32 %s9, 2
      %s16 = sadd.s32 %s9, 1
      %s17 = ssub.s32 %s9, %s16
      %p18 = scmp.eq.s32.totalorder %s17, 0
      %s20 = sadd.s32 %s19, 1
      %s21 = scalar_select %p18, %s19, %s20
      %p24 = pneg %p18
      %p25 = scmp.eq.s32.totalorder %s9, 1
      %p26 = por %p24, %p25
      %p27 = scmp.ne.s32.totalorder %s19, %s22
      %p28 = scmp.eq.s32.totalorder %s9, 0
      %p29 = por %p27, %p28
      %p30 = scmp.ne.s32.totalorder %s19, %s22
      %p31 = scmp.eq.s32.totalorder %s14, 1
      %p32 = por %p30, %p31
      %p33 = scmp.ne.s32.totalorder %s22, %s23
      %p34 = scmp.eq.s32.totalorder %s14, 0
      %p35 = por %p33, %p34
      %p36 = scmp.ne.s32.totalorder %s22, %s23
      %p37 = scmp.eq.s32.totalorder %s15, 1
      %p38 = por %p36, %p37
      %p40 = scmp.ne.s32.totalorder %s23, %s39
      %p41 = scmp.eq.s32.totalorder %s15, 0
      %p42 = por %p40, %p41
      %s44 = sadd.s32 %s43, 1
      %p47 = scmp.eq.s32.totalorder %s9, 1
      %p48 = scmp.ne.s32.totalorder %s43, %s45
      %p49 = scmp.eq.s32.totalorder %s9, 0
      %p50 = por %p48, %p49
      %p51 = scmp.ne.s32.totalorder %s43, %s45
      %p52 = scmp.eq.s32.totalorder %s14, 1
      %p53 = por %p51, %p52
      %p54 = scmp.ne.s32.totalorder %s45, %s46
      %p55 = scmp.eq.s32.totalorder %s14, 0
      %p56 = por %p54, %p55
      %p57 = scmp.ne.s32.totalorder %s45, %s46
      %p58 = scmp.eq.s32.totalorder %s15, 1
      %p59 = por %p57, %p58
      %p61 = scmp.ne.s32.totalorder %s46, %s60
      %p62 = scmp.eq.s32.totalorder %s15, 0
      %p63 = por %p61, %p62
      %s65 = sadd.s32 %s64, 1
      %p68 = scmp.eq.s32.totalorder %s9, 1
      %p69 = scmp.ne.s32.totalorder %s64, %s66
      %p70 = scmp.eq.s32.totalorder %s9, 0
      %p71 = por %p69, %p70
      %p72 = scmp.ne.s32.totalorder %s64, %s66
      %p73 = scmp.eq.s32.totalorder %s14, 1
      %p74 = por %p72, %p73
      %p75 = scmp.ne.s32.totalorder %s66, %s67
      %p76 = scmp.eq.s32.totalorder %s14, 0
      %p77 = por %p75, %p76
      %p78 = scmp.ne.s32.totalorder %s66, %s67
      %p79 = scmp.eq.s32.totalorder %s15, 1
      %p80 = por %p78, %p79
      %p82 = scmp.ne.s32.totalorder %s67, %s81
      %p83 = scmp.eq.s32.totalorder %s15, 0
      %p84 = por %p82, %p83
      %s85 = ssub.s32 %s9, %s16
      %p86 = scmp.eq.s32.totalorder %s85, 0
      %s88 = sadd.s32 %s87, 1
      %s89 = scalar_select %p86, %s87, %s88
      %p92 = pneg %p86
      %p93 = scmp.eq.s32.totalorder %s9, 1
      %p94 = por %p92, %p93
      %p95 = scmp.ne.s32.totalorder %s87, %s90
      %p96 = scmp.eq.s32.totalorder %s9, 0
      %p97 = por %p95, %p96
      %p98 = scmp.ne.s32.totalorder %s87, %s90
      %p99 = scmp.eq.s32.totalorder %s14, 1
      %p100 = por %p98, %p99
      %p101 = scmp.ne.s32.totalorder %s90, %s91
      %p102 = scmp.eq.s32.totalorder %s14, 0
      %p103 = por %p101, %p102
      %p104 = scmp.ne.s32.totalorder %s90, %s91
      %p105 = scmp.eq.s32.totalorder %s15, 1
      %p106 = por %p104, %p105
      %p108 = scmp.ne.s32.totalorder %s91, %s107
      %p109 = scmp.eq.s32.totalorder %s15, 0
      %p110 = por %p108, %p109
      %p111 = scmp.le.s32.totalorder 1, %s9
      %p112 = scmp.lt.s32.totalorder %s9, 3
      %p113 = pnand %p111, %p112
      %p114 = pneg %p113
      // Predicated region
      $region9: #{var_encoder_forward.5} parent=5 // pred_check
        _
      $region10: #{var_encoder_forward.5} parent=5 // pred_check_branch
        %116 = sbr.rel (%p113) target = $region12
      $region11: #{var_encoder_forward.5} parent=5 // pred_region
        %s117 = ssub.s32 %s9, 1
        // Predicated region
        $region13: #{var_encoder_forward.5} parent=11 // pred_check
          %p118 = pneg %p56
        $region14: #{var_encoder_forward.5} parent=11 // pred_check_branch
          %120 = sbr.rel (%p118) target = $region16
        $region15: #{var_encoder_forward.5} parent=11 // pred_region
          _
        $region16: #{var_encoder_forward.5} parent=11 // pred_fallthru
          _
        // Predicated region
        $region17: #{var_encoder_forward.5} parent=11 // pred_check
          %p121 = pneg %p77
        $region18: #{var_encoder_forward.5} parent=11 // pred_check_branch
          %123 = sbr.rel (%p121) target = $region20
        $region19: #{var_encoder_forward.5} parent=11 // pred_region
          _
        $region20: #{var_encoder_forward.5} parent=11 // pred_fallthru
          _
      $region12: #{var_encoder_forward.5} parent=5 // pred_fallthru
        _
      %p124 = scmp.lt.s32.totalorder %s9, 2
      // Predicated region
      $region21: #{var_encoder_forward.5} parent=5 // pred_check
        %p125 = pneg %p124
      $region22: #{var_encoder_forward.5} parent=5 // pred_check_branch
        %127 = sbr.rel (%p125) target = $region24
      $region23: #{var_encoder_forward.5} parent=5 // pred_region
        // Predicated region
        $region25: #{var_encoder_forward.5} parent=23 // pred_check
          %p128 = pneg %p29
        $region26: #{var_encoder_forward.5} parent=23 // pred_check_branch
          %130 = sbr.rel (%p128) target = $region28
        $region27: #{var_encoder_forward.5} parent=23 // pred_region
          %s131 = sand.u32 %s19, 1
          %s132 = sand.u32 %s19, 1
          %s133 = smul.addr %s132, 320
          %s134 = scalar_lea.vmem [#allocation2], %s133
          %s135 = smul.addr %s9, 10
          %s136 = smul.addr %s135, 8
          %s137 = scalar_lea.vmem %s0, %s136
          // Predicated region
          $region29: #{var_encoder_forward.5} parent=27 // pred_check
            _
          $region30: #{var_encoder_forward.5} parent=27 // pred_check_branch
            %139 = sbr.rel (0) target = $region32
          $region31: #{var_encoder_forward.5} parent=27 // pred_region
            // Predicated region
            $region33: #{var_encoder_forward.5} parent=31 // pred_check
              _
            $region34: #{var_encoder_forward.5} parent=31 // pred_check_branch
              %141 = sbr.rel (0) target = $region36
            $region35: #{var_encoder_forward.5} parent=31 // pred_region
              // Predicated region
              $region48: #{var_encoder_forward.5} parent=35 // pred_check
                _
              $region49: #{var_encoder_forward.5} parent=35 // pred_check_branch
                %234 = sbr.rel (0) target = $region51
              $region50: #{var_encoder_forward.5} parent=35 // pred_region
                loop: start=0, step=1, limit=1
                $region52: #{var_encoder_forward.5} parent=50 // loop_pre_header
                  _
                $region53: #{var_encoder_forward.5} parent=50 // loop_header
                  %s236 = sphi 0, %s240
                  %p237 = scmp.ge.s32.totalorder %s236, 1
                  %s241 = sphi %s137, %s137
                  %s242 = sphi %s134, %s134
                $region54: #{var_encoder_forward.5} parent=50 // loop_header_branch
                  %239 = sbr.rel (%p237) target = $region58
                $region55: #{var_encoder_forward.5} parent=50 // loop_body
                  %v243 = vld [vmem:[%s241] sm:$0xff]
                  %244 = vst [vmem:[%s242] sm:$0xff] %v243
                  %v245 = vld [vmem:[%s241 + $0x8] sm:$0xff]
                  %246 = vst [vmem:[%s242 + $0x8] sm:$0xff] %v245
                  %v247 = vld [vmem:[%s241 + $0x10] sm:$0xff]
                  %248 = vst [vmem:[%s242 + $0x10] sm:$0xff] %v247
                  %v249 = vld [vmem:[%s241 + $0x18] sm:$0xff]
                  %250 = vst [vmem:[%s242 + $0x18] sm:$0xff] %v249
                  %v251 = vld [vmem:[%s241 + $0x20] sm:$0xff]
                  %252 = vst [vmem:[%s242 + $0x20] sm:$0xff] %v251
                  %v253 = vld [vmem:[%s241 + $0x28] sm:$0xff]
                  %254 = vst [vmem:[%s242 + $0x28] sm:$0xff] %v253
                  %v255 = vld [vmem:[%s241 + $0x30] sm:$0xff]
                  %256 = vst [vmem:[%s242 + $0x30] sm:$0xff] %v255
                  %v257 = vld [vmem:[%s241 + $0x38] sm:$0xff]
                  %258 = vst [vmem:[%s242 + $0x38] sm:$0xff] %v257
                  %v259 = vld [vmem:[%s241 + $0x40] sm:$0xff]
                  %260 = vst [vmem:[%s242 + $0x40] sm:$0xff] %v259
                  %v261 = vld [vmem:[%s241 + $0x48] sm:$0xff]
                  %262 = vst [vmem:[%s242 + $0x48] sm:$0xff] %v261
                  %v263 = vld [vmem:[%s241 + $0xa0] sm:$0xff]
                  %264 = vst [vmem:[%s242 + $0x50] sm:$0xff] %v263
                  %v265 = vld [vmem:[%s241 + $0xa8] sm:$0xff]
                  %266 = vst [vmem:[%s242 + $0x58] sm:$0xff] %v265
                  %v267 = vld [vmem:[%s241 + $0xb0] sm:$0xff]
                  %268 = vst [vmem:[%s242 + $0x60] sm:$0xff] %v267
                  %v269 = vld [vmem:[%s241 + $0xb8] sm:$0xff]
                  %270 = vst [vmem:[%s242 + $0x68] sm:$0xff] %v269
                  %v271 = vld [vmem:[%s241 + $0xc0] sm:$0xff]
                  %272 = vst [vmem:[%s242 + $0x70] sm:$0xff] %v271
                  %v273 = vld [vmem:[%s241 + $0xc8] sm:$0xff]
                  %274 = vst [vmem:[%s242 + $0x78] sm:$0xff] %v273
                  %v275 = vld [vmem:[%s241 + $0xd0] sm:$0xff]
                  %276 = vst [vmem:[%s242 + $0x80] sm:$0xff] %v275
                  %v277 = vld [vmem:[%s241 + $0xd8] sm:$0xff]
                  %278 = vst [vmem:[%s242 + $0x88] sm:$0xff] %v277
                  %v279 = vld [vmem:[%s241 + $0xe0] sm:$0xff]
                  %280 = vst [vmem:[%s242 + $0x90] sm:$0xff] %v279
                  %v281 = vld [vmem:[%s241 + $0xe8] sm:$0xff]
                  %282 = vst [vmem:[%s242 + $0x98] sm:$0xff] %v281
                  %v283 = vld [vmem:[%s241 + $0x140] sm:$0xff]
                  %284 = vst [vmem:[%s242 + $0xa0] sm:$0xff] %v283
                  %v285 = vld [vmem:[%s241 + $0x148] sm:$0xff]
                  %286 = vst [vmem:[%s242 + $0xa8] sm:$0xff] %v285
                  %v287 = vld [vmem:[%s241 + $0x150] sm:$0xff]
                  %288 = vst [vmem:[%s242 + $0xb0] sm:$0xff] %v287
                  %v289 = vld [vmem:[%s241 + $0x158] sm:$0xff]
                  %290 = vst [vmem:[%s242 + $0xb8] sm:$0xff] %v289
                  %v291 = vld [vmem:[%s241 + $0x160] sm:$0xff]
                  %292 = vst [vmem:[%s242 + $0xc0] sm:$0xff] %v291
                  %v293 = vld [vmem:[%s241 + $0x168] sm:$0xff]
                  %294 = vst [vmem:[%s242 + $0xc8] sm:$0xff] %v293
                  %v295 = vld [vmem:[%s241 + $0x170] sm:$0xff]
                  %296 = vst [vmem:[%s242 + $0xd0] sm:$0xff] %v295
                  %v297 = vld [vmem:[%s241 + $0x178] sm:$0xff]
                  %298 = vst [vmem:[%s242 + $0xd8] sm:$0xff] %v297
                  %v299 = vld [vmem:[%s241 + $0x180] sm:$0xff]
                  %300 = vst [vmem:[%s242 + $0xe0] sm:$0xff] %v299
                  %v301 = vld [vmem:[%s241 + $0x188] sm:$0xff]
                  %302 = vst [vmem:[%s242 + $0xe8] sm:$0xff] %v301
                  %v303 = vld [vmem:[%s241 + $0x1e0] sm:$0xff]
                  %304 = vst [vmem:[%s242 + $0xf0] sm:$0xff] %v303
                  %v305 = vld [vmem:[%s241 + $0x1e8] sm:$0xff]
                  %306 = vst [vmem:[%s242 + $0xf8] sm:$0xff] %v305
                  %v307 = vld [vmem:[%s241 + $0x1f0] sm:$0xff]
                  %308 = vst [vmem:[%s242 + $0x100] sm:$0xff] %v307
                  %v309 = vld [vmem:[%s241 + $0x1f8] sm:$0xff]
                  %310 = vst [vmem:[%s242 + $0x108] sm:$0xff] %v309
                  %v311 = vld [vmem:[%s241 + $0x200] sm:$0xff]
                  %312 = vst [vmem:[%s242 + $0x110] sm:$0xff] %v311
                  %v313 = vld [vmem:[%s241 + $0x208] sm:$0xff]
                  %314 = vst [vmem:[%s242 + $0x118] sm:$0xff] %v313
                  %v315 = vld [vmem:[%s241 + $0x210] sm:$0xff]
                  %316 = vst [vmem:[%s242 + $0x120] sm:$0xff] %v315
                  %v317 = vld [vmem:[%s241 + $0x218] sm:$0xff]
                  %318 = vst [vmem:[%s242 + $0x128] sm:$0xff] %v317
                  %v319 = vld [vmem:[%s241 + $0x220] sm:$0xff]
                  %320 = vst [vmem:[%s242 + $0x130] sm:$0xff] %v319
                  %v321 = vld [vmem:[%s241 + $0x228] sm:$0xff]
                  %322 = vst [vmem:[%s242 + $0x138] sm:$0xff] %v321
                $region56: #{var_encoder_forward.5} parent=50 // loop_footer
                  %s240 = sadd.s32 1, %s236
                $region57: #{var_encoder_forward.5} parent=50 // loop_footer_branch
                  %235 = sbr.rel target = $region53
                $region58: #{var_encoder_forward.5} parent=50 // loop_exit
                  _
              $region51: #{var_encoder_forward.5} parent=35 // pred_fallthru
                _
              // Predicated region
              $region59: #{var_encoder_forward.5} parent=35 // pred_check
                _
              $region60: #{var_encoder_forward.5} parent=35 // pred_check_branch
                %324 = sbr.rel target = $region62
              $region61: #{var_encoder_forward.5} parent=35 // pred_region
                _
              $region62: #{var_encoder_forward.5} parent=35 // pred_fallthru
                _
            $region36: #{var_encoder_forward.5} parent=31 // pred_fallthru
              _
            // Predicated region
            $region37: #{var_encoder_forward.5} parent=31 // pred_check
              _
            $region38: #{var_encoder_forward.5} parent=31 // pred_check_branch
              %143 = sbr.rel target = $region40
            $region39: #{var_encoder_forward.5} parent=31 // pred_region
              loop: start=0, step=1, limit=1
              $region41: #{var_encoder_forward.5} parent=39 // loop_pre_header
                _
              $region42: #{var_encoder_forward.5} parent=39 // loop_header
                %s146 = sphi 0, %s150
                %p147 = scmp.ge.s32.totalorder %s146, 1
                %s151 = sphi %s137, %s137
                %s152 = sphi %s134, %s134
              $region43: #{var_encoder_forward.5} parent=39 // loop_header_branch
                %149 = sbr.rel (%p147) target = $region47
              $region44: #{var_encoder_forward.5} parent=39 // loop_body
                %v153 = vld [vmem:[%s151] sm:$0xff]
                %154 = vst [vmem:[%s152] sm:$0xff] %v153
                %v155 = vld [vmem:[%s151 + $0x8] sm:$0xff]
                %156 = vst [vmem:[%s152 + $0x8] sm:$0xff] %v155
                %v157 = vld [vmem:[%s151 + $0x10] sm:$0xff]
                %158 = vst [vmem:[%s152 + $0x10] sm:$0xff] %v157
                %v159 = vld [vmem:[%s151 + $0x18] sm:$0xff]
                %160 = vst [vmem:[%s152 + $0x18] sm:$0xff] %v159
                %v161 = vld [vmem:[%s151 + $0x20] sm:$0xff]
                %162 = vst [vmem:[%s152 + $0x20] sm:$0xff] %v161
                %v163 = vld [vmem:[%s151 + $0x28] sm:$0xff]
                %164 = vst [vmem:[%s152 + $0x28] sm:$0xff] %v163
                %v165 = vld [vmem:[%s151 + $0x30] sm:$0xff]
                %166 = vst [vmem:[%s152 + $0x30] sm:$0xff] %v165
                %v167 = vld [vmem:[%s151 + $0x38] sm:$0xff]
                %168 = vst [vmem:[%s152 + $0x38] sm:$0xff] %v167
                %v169 = vld [vmem:[%s151 + $0x40] sm:$0xff]
                %170 = vst [vmem:[%s152 + $0x40] sm:$0xff] %v169
                %v171 = vld [vmem:[%s151 + $0x48] sm:$0xff]
                %172 = vst [vmem:[%s152 + $0x48] sm:$0xff] %v171
                %v173 = vld [vmem:[%s151 + $0xa0] sm:$0xff]
                %174 = vst [vmem:[%s152 + $0x50] sm:$0xff] %v173
                %v175 = vld [vmem:[%s151 + $0xa8] sm:$0xff]
                %176 = vst [vmem:[%s152 + $0x58] sm:$0xff] %v175
                %v177 = vld [vmem:[%s151 + $0xb0] sm:$0xff]
                %178 = vst [vmem:[%s152 + $0x60] sm:$0xff] %v177
                %v179 = vld [vmem:[%s151 + $0xb8] sm:$0xff]
                %180 = vst [vmem:[%s152 + $0x68] sm:$0xff] %v179
                %v181 = vld [vmem:[%s151 + $0xc0] sm:$0xff]
                %182 = vst [vmem:[%s152 + $0x70] sm:$0xff] %v181
                %v183 = vld [vmem:[%s151 + $0xc8] sm:$0xff]
                %184 = vst [vmem:[%s152 + $0x78] sm:$0xff] %v183
                %v185 = vld [vmem:[%s151 + $0xd0] sm:$0xff]
                %186 = vst [vmem:[%s152 + $0x80] sm:$0xff] %v185
                %v187 = vld [vmem:[%s151 + $0xd8] sm:$0xff]
                %188 = vst [vmem:[%s152 + $0x88] sm:$0xff] %v187
                %v189 = vld [vmem:[%s151 + $0xe0] sm:$0xff]
                %190 = vst [vmem:[%s152 + $0x90] sm:$0xff] %v189
                %v191 = vld [vmem:[%s151 + $0xe8] sm:$0xff]
                %192 = vst [vmem:[%s152 + $0x98] sm:$0xff] %v191
                %v193 = vld [vmem:[%s151 + $0x140] sm:$0xff]
                %194 = vst [vmem:[%s152 + $0xa0] sm:$0xff] %v193
                %v195 = vld [vmem:[%s151 + $0x148] sm:$0xff]
                %196 = vst [vmem:[%s152 + $0xa8] sm:$0xff] %v195
                %v197 = vld [vmem:[%s151 + $0x150] sm:$0xff]
                %198 = vst [vmem:[%s152 + $0xb0] sm:$0xff] %v197
                %v199 = vld [vmem:[%s151 + $0x158] sm:$0xff]
                %200 = vst [vmem:[%s152 + $0xb8] sm:$0xff] %v199
                %v201 = vld [vmem:[%s151 + $0x160] sm:$0xff]
                %202 = vst [vmem:[%s152 + $0xc0] sm:$0xff] %v201
                %v203 = vld [vmem:[%s151 + $0x168] sm:$0xff]
                %204 = vst [vmem:[%s152 + $0xc8] sm:$0xff] %v203
                %v205 = vld [vmem:[%s151 + $0x170] sm:$0xff]
                %206 = vst [vmem:[%s152 + $0xd0] sm:$0xff] %v205
                %v207 = vld [vmem:[%s151 + $0x178] sm:$0xff]
                %208 = vst [vmem:[%s152 + $0xd8] sm:$0xff] %v207
                %v209 = vld [vmem:[%s151 + $0x180] sm:$0xff]
                %210 = vst [vmem:[%s152 + $0xe0] sm:$0xff] %v209
                %v211 = vld [vmem:[%s151 + $0x188] sm:$0xff]
                %212 = vst [vmem:[%s152 + $0xe8] sm:$0xff] %v211
                %v213 = vld [vmem:[%s151 + $0x1e0] sm:$0xff]
                %214 = vst [vmem:[%s152 + $0xf0] sm:$0xff] %v213
                %v215 = vld [vmem:[%s151 + $0x1e8] sm:$0xff]
                %216 = vst [vmem:[%s152 + $0xf8] sm:$0xff] %v215
                %v217 = vld [vmem:[%s151 + $0x1f0] sm:$0xff]
                %218 = vst [vmem:[%s152 + $0x100] sm:$0xff] %v217
                %v219 = vld [vmem:[%s151 + $0x1f8] sm:$0xff]
                %220 = vst [vmem:[%s152 + $0x108] sm:$0xff] %v219
                %v221 = vld [vmem:[%s151 + $0x200] sm:$0xff]
                %222 = vst [vmem:[%s152 + $0x110] sm:$0xff] %v221
                %v223 = vld [vmem:[%s151 + $0x208] sm:$0xff]
                %224 = vst [vmem:[%s152 + $0x118] sm:$0xff] %v223
                %v225 = vld [vmem:[%s151 + $0x210] sm:$0xff]
                %226 = vst [vmem:[%s152 + $0x120] sm:$0xff] %v225
                %v227 = vld [vmem:[%s151 + $0x218] sm:$0xff]
                %228 = vst [vmem:[%s152 + $0x128] sm:$0xff] %v227
                %v229 = vld [vmem:[%s151 + $0x220] sm:$0xff]
                %230 = vst [vmem:[%s152 + $0x130] sm:$0xff] %v229
                %v231 = vld [vmem:[%s151 + $0x228] sm:$0xff]
                %232 = vst [vmem:[%s152 + $0x138] sm:$0xff] %v231
              $region45: #{var_encoder_forward.5} parent=39 // loop_footer
                %s150 = sadd.s32 1, %s146
              $region46: #{var_encoder_forward.5} parent=39 // loop_footer_branch
                %145 = sbr.rel target = $region42
              $region47: #{var_encoder_forward.5} parent=39 // loop_exit
                _
            $region40: #{var_encoder_forward.5} parent=31 // pred_fallthru
              _
          $region32: #{var_encoder_forward.5} parent=27 // pred_fallthru
            _
          %325 = vnop
        $region28: #{var_encoder_forward.5} parent=23 // pred_fallthru
          _
      $region24: #{var_encoder_forward.5} parent=5 // pred_fallthru
        _
      %p326 = scmp.le.s32.totalorder 1, %s9
      %p327 = scmp.lt.s32.totalorder %s9, 3
      %p328 = pnand %p326, %p327
      %p329 = pneg %p328
      // Predicated region
      $region63: #{var_encoder_forward.5} parent=5 // pred_check
        _
      $region64: #{var_encoder_forward.5} parent=5 // pred_check_branch
        %331 = sbr.rel (%p328) target = $region66
      $region65: #{var_encoder_forward.5} parent=5 // pred_region
        %s332 = ssub.s32 %s9, 1
        %s333 = sand.u32 %s22, 1
        %s334 = sand.u32 %s22, 1
        %s335 = smul.addr %s334, 320
        %s336 = scalar_lea.vmem [#allocation2], %s335
        // Predicated region
        $region67: #{var_encoder_forward.5} parent=65 // pred_check
          %p337 = pneg %p35
        $region68: #{var_encoder_forward.5} parent=65 // pred_check_branch
          %339 = sbr.rel (%p337) target = $region70
        $region69: #{var_encoder_forward.5} parent=65 // pred_region
          _
        $region70: #{var_encoder_forward.5} parent=65 // pred_fallthru
          _
        %s340 = sand.u32 %s22, 1
        %s341 = sand.u32 %s22, 1
        %s342 = smul.addr %s341, 320
        %s343 = scalar_lea.vmem [#allocation2], %s342
        %p344 = pneg %p35
        %p345 = pneg %p32
        %p346 = pneg %p56
        %p347 = pneg %p53
        %p348 = pneg %p77
        %p349 = pneg %p74
        %p350 = pneg %p103
        %p351 = pneg %p100
        %p352 = scmp.lt.s32.totalorder %s14, 1
        %s353 = scalar_select %p352, %s14, 1
        %s354 = smul.addr %s353, 4
        %s355 = smul.addr %s354, 8
        %s356 = scalar_lea.vmem %s3, %s355
        %p357 = scmp.lt.s32.totalorder %s14, 1
        %s358 = scalar_select %p357, %s14, 1
        %s359 = smul.addr %s358, 4
        %s360 = smul.addr %s359, 8
        %s361 = scalar_lea.vmem %s3, %s360
        %v363 = vld [vmem:[%s336] sm:$0xff]
        %v364 = vld [vmem:[%s336 + $0x10] sm:$0xff]
        %v365 = vld [vmem:[%s336 + $0x20] sm:$0xff]
        %v366 = vld [vmem:[%s336 + $0x30] sm:$0xff]
        %v367 = vpack.c.bf16 %v364, %v363
        %v368 = vpack.c.bf16 %v366, %v365
        %v369 = vld [vmem:[%s1] sm:$0xf]
        %v370 = vld [vmem:[%s1 + $0x4] sm:$0xf]
        %v371 = vld [vmem:[%s1 + $0x8] sm:$0xf]
        %v372 = vld [vmem:[%s1 + $0xc] sm:$0xf]
        %v373 = vld [vmem:[%s1 + $0x10] sm:$0xf]
        %v374 = vld [vmem:[%s1 + $0x14] sm:$0xf]
        %v375 = vld [vmem:[%s1 + $0x18] sm:$0xf]
        %v376 = vld [vmem:[%s1 + $0x1c] sm:$0xf]
        %v377 = vld [vmem:[%s1 + $0x20] sm:$0xf]
        %v378 = vld [vmem:[%s1 + $0x24] sm:$0xf]
        %v379 = vld [vmem:[%s1 + $0x28] sm:$0xf]
        %v380 = vld [vmem:[%s1 + $0x2c] sm:$0xf]
        %v381 = vld [vmem:[%s1 + $0x30] sm:$0xf]
        %v382 = vld [vmem:[%s1 + $0x34] sm:$0xf]
        %v383 = vld [vmem:[%s1 + $0x38] sm:$0xf]
        %v384 = vld [vmem:[%s1 + $0x3c] sm:$0xf]
        %s385 = scalar_lea.vmem %s336, 80 [#allocation2]
        %v386 = vld [vmem:[%s385] sm:$0xff]
        %v387 = vld [vmem:[%s385 + $0x10] sm:$0xff]
        %v388 = vld [vmem:[%s385 + $0x20] sm:$0xff]
        %v389 = vld [vmem:[%s385 + $0x30] sm:$0xff]
        %v390 = vpack.c.bf16 %v387, %v386
        %v391 = vpack.c.bf16 %v389, %v388
        %s392 = scalar_lea.vmem %s1, 64
        %v393 = vld [vmem:[%s392] sm:$0xf]
        %v394 = vld [vmem:[%s392 + $0x4] sm:$0xf]
        %v395 = vld [vmem:[%s392 + $0x8] sm:$0xf]
        %v396 = vld [vmem:[%s392 + $0xc] sm:$0xf]
        %v397 = vld [vmem:[%s392 + $0x10] sm:$0xf]
        %v398 = vld [vmem:[%s392 + $0x14] sm:$0xf]
        %v399 = vld [vmem:[%s392 + $0x18] sm:$0xf]
        %v400 = vld [vmem:[%s392 + $0x1c] sm:$0xf]
        %v401 = vld [vmem:[%s392 + $0x20] sm:$0xf]
        %v402 = vld [vmem:[%s392 + $0x24] sm:$0xf]
        %v403 = vld [vmem:[%s392 + $0x28] sm:$0xf]
        %v404 = vld [vmem:[%s392 + $0x2c] sm:$0xf]
        %v405 = vld [vmem:[%s392 + $0x30] sm:$0xf]
        %v406 = vld [vmem:[%s392 + $0x34] sm:$0xf]
        %v407 = vld [vmem:[%s392 + $0x38] sm:$0xf]
        %v408 = vld [vmem:[%s392 + $0x3c] sm:$0xf]
        %v425 = vunpack.c.l.b16 %v393
        %v426 = vunpack.c.l.b16 %v394
        %v427 = vunpack.c.l.b16 %v395
        %v428 = vunpack.c.l.b16 %v396
        %v429 = vunpack.c.l.b16 %v397
        %v430 = vunpack.c.l.b16 %v398
        %v431 = vunpack.c.l.b16 %v399
        %v432 = vunpack.c.l.b16 %v400
        %v433 = vunpack.c.l.b16 %v401
        %v434 = vunpack.c.l.b16 %v402
        %v435 = vunpack.c.l.b16 %v403
        %v436 = vunpack.c.l.b16 %v404
        %v437 = vunpack.c.l.b16 %v405
        %v438 = vunpack.c.l.b16 %v406
        %v439 = vunpack.c.l.b16 %v407
        %v440 = vunpack.c.l.b16 %v408
        %v441 = vpack.c.b16 %v426, %v425
        %v442 = vpack.c.b16 %v428, %v427
        %v443 = vpack.c.b16 %v430, %v429
        %v444 = vpack.c.b16 %v432, %v431
        %v445 = vpack.c.b16 %v434, %v433
        %v446 = vpack.c.b16 %v436, %v435
        %v447 = vpack.c.b16 %v438, %v437
        %v448 = vpack.c.b16 %v440, %v439
        %457 = vmatprep.subr.bf16.mxu0 0
        %458 = vmatpush1.bf16.msra.mxu0 %v441
        %459 = vmatprep.subr.bf16.mxu0 0
        %460 = vmatpush1.bf16.msra.mxu0 %v442
        %461 = vmatprep.subr.bf16.mxu0 0
        %462 = vmatpush1.bf16.msra.mxu0 %v443
        %463 = vmatprep.subr.bf16.mxu0 0
        %464 = vmatpush1.bf16.msra.mxu0 %v444
        %465 = vmatprep.subr.bf16.mxu0 0
        %466 = vmatpush1.bf16.msra.mxu0 %v445
        %467 = vmatprep.subr.bf16.mxu0 0
        %468 = vmatpush1.bf16.msra.mxu0 %v446
        %469 = vmatprep.subr.bf16.mxu0 0
        %470 = vmatpush1.bf16.msra.mxu0 %v447
        %471 = vmatprep.subr.bf16.mxu0 0
        %472 = vmatpush1.bf16.msra.mxu0 %v448
        %473 = vmatprep.subr.bf16.mxu0 0
        %474 = vmatpush1.bf16.msra.mxu0 0
        %475 = vmatprep.subr.bf16.mxu0 0
        %476 = vmatpush1.bf16.msra.mxu0 0
        %477 = vmatprep.subr.bf16.mxu0 0
        %478 = vmatpush1.bf16.msra.mxu0 0
        %479 = vmatprep.subr.bf16.mxu0 0
        %480 = vmatpush1.bf16.msra.mxu0 0
        %481 = vmatprep.subr.bf16.mxu0 0
        %482 = vmatpush1.bf16.msra.mxu0 0
        %483 = vmatprep.subr.bf16.mxu0 0
        %484 = vmatpush1.bf16.msra.mxu0 0
        %485 = vmatprep.subr.bf16.mxu0 0
        %486 = vmatpush1.bf16.msra.mxu0 0
        %487 = vmatprep.subr.bf16.mxu0 0
        %488 = vmatpush1.bf16.msra.mxu0 0
        %489 = vmatprep.mubr.bf16.mxu0 0
        %490 = vmatmul.mubr.bf16.gmra.mrb[0].mxu0 %v390
        %v491 = vpop.f32.mrb[0].mxu0
        %v492 = vadd.f32 0.0, %v491
        %v493 = vpop.f32.mrb[0].mxu0
        %v494 = vpop.f32.mrb[0].mxu0
        %v495 = vadd.f32 0.0, %v494
        %v496 = vpop.f32.mrb[0].mxu0
        %497 = vmatprep.mubr.bf16.mxu0 0
        %498 = vmatmul.mubr.bf16.gmra.mrb[0].mxu0 %v391
        %v499 = vpop.f32.mrb[0].mxu0
        %v500 = vadd.f32 0.0, %v499
        %v501 = vpop.f32.mrb[0].mxu0
        %v502 = vpop.f32.mrb[0].mxu0
        %v503 = vadd.f32 0.0, %v502
        %v504 = vpop.f32.mrb[0].mxu0
        %505 = vdwg.mxu0
        %v522 = vunpack.c.l.b16 %v369
        %v523 = vunpack.c.l.b16 %v370
        %v524 = vunpack.c.l.b16 %v371
        %v525 = vunpack.c.l.b16 %v372
        %v526 = vunpack.c.l.b16 %v373
        %v527 = vunpack.c.l.b16 %v374
        %v528 = vunpack.c.l.b16 %v375
        %v529 = vunpack.c.l.b16 %v376
        %v530 = vunpack.c.l.b16 %v377
        %v531 = vunpack.c.l.b16 %v378
        %v532 = vunpack.c.l.b16 %v379
        %v533 = vunpack.c.l.b16 %v380
        %v534 = vunpack.c.l.b16 %v381
        %v535 = vunpack.c.l.b16 %v382
        %v536 = vunpack.c.l.b16 %v383
        %v537 = vunpack.c.l.b16 %v384
        %v538 = vpack.c.b16 %v523, %v522
        %v539 = vpack.c.b16 %v525, %v524
        %v540 = vpack.c.b16 %v527, %v526
        %v541 = vpack.c.b16 %v529, %v528
        %v542 = vpack.c.b16 %v531, %v530
        %v543 = vpack.c.b16 %v533, %v532
        %v544 = vpack.c.b16 %v535, %v534
        %v545 = vpack.c.b16 %v537, %v536
        %554 = vmatprep.subr.bf16.mxu0 0
        %555 = vmatpush1.bf16.msra.mxu0 %v538
        %556 = vmatprep.subr.bf16.mxu0 0
        %557 = vmatpush1.bf16.msra.mxu0 %v539
        %558 = vmatprep.subr.bf16.mxu0 0
        %559 = vmatpush1.bf16.msra.mxu0 %v540
        %560 = vmatprep.subr.bf16.mxu0 0
        %561 = vmatpush1.bf16.msra.mxu0 %v541
        %562 = vmatprep.subr.bf16.mxu0 0
        %563 = vmatpush1.bf16.msra.mxu0 %v542
        %564 = vmatprep.subr.bf16.mxu0 0
        %565 = vmatpush1.bf16.msra.mxu0 %v543
        %566 = vmatprep.subr.bf16.mxu0 0
        %567 = vmatpush1.bf16.msra.mxu0 %v544
        %568 = vmatprep.subr.bf16.mxu0 0
        %569 = vmatpush1.bf16.msra.mxu0 %v545
        %570 = vmatprep.subr.bf16.mxu0 0
        %571 = vmatpush1.bf16.msra.mxu0 0
        %572 = vmatprep.subr.bf16.mxu0 0
        %573 = vmatpush1.bf16.msra.mxu0 0
        %574 = vmatprep.subr.bf16.mxu0 0
        %575 = vmatpush1.bf16.msra.mxu0 0
        %576 = vmatprep.subr.bf16.mxu0 0
        %577 = vmatpush1.bf16.msra.mxu0 0
        %578 = vmatprep.subr.bf16.mxu0 0
        %579 = vmatpush1.bf16.msra.mxu0 0
        %580 = vmatprep.subr.bf16.mxu0 0
        %581 = vmatpush1.bf16.msra.mxu0 0
        %582 = vmatprep.subr.bf16.mxu0 0
        %583 = vmatpush1.bf16.msra.mxu0 0
        %584 = vmatprep.subr.bf16.mxu0 0
        %585 = vmatpush1.bf16.msra.mxu0 0
        %586 = vmatprep.mubr.bf16.mxu0 0
        %587 = vmatmul.mubr.bf16.gmra.mrb[0].mxu0 %v367
        %v588 = vpop.f32.mrb[0].mxu0
        %v589 = vadd.f32 %v492, %v588
        %v590 = vpop.f32.mrb[0].mxu0
        %v591 = vpop.f32.mrb[0].mxu0
        %v592 = vadd.f32 %v495, %v591
        %v593 = vpop.f32.mrb[0].mxu0
        %594 = vmatprep.mubr.bf16.mxu0 0
        %595 = vmatmul.mubr.bf16.gmra.mrb[0].mxu0 %v368
        %v596 = vpop.f32.mrb[0].mxu0
        %v597 = vadd.f32 %v500, %v596
        %v598 = vpop.f32.mrb[0].mxu0
        %v599 = vpop.f32.mrb[0].mxu0
        %v600 = vadd.f32 %v503, %v599
        %v601 = vpop.f32.mrb[0].mxu0
        %602 = vdwg.mxu0
        %v603 = vld [vmem:[%s336 + $0x1] sm:$0xff]
        %v604 = vld [vmem:[%s336 + $0x11] sm:$0xff]
        %v605 = vld [vmem:[%s336 + $0x21] sm:$0xff]
        %v606 = vld [vmem:[%s336 + $0x31] sm:$0xff]
        %v607 = vpack.c.bf16 %v604, %v603
        %v608 = vpack.c.bf16 %v606, %v605
        %s609 = scalar_lea.vmem %s1, 128
        %v610 = vld [vmem:[%s609] sm:$0xf]
        %v611 = vld [vmem:[%s609 + $0x4] sm:$0xf]
        %v612 = vld [vmem:[%s609 + $0x8] sm:$0xf]
        %v613 = vld [vmem:[%s609 + $0xc] sm:$0xf]
        %v614 = vld [vmem:[%s609 + $0x10] sm:$0xf]
        %v615 = vld [vmem:[%s609 + $0x14] sm:$0xf]
        %v616 = vld [vmem:[%s609 + $0x18] sm:$0xf]
        %v617 = vld [vmem:[%s609 + $0x1c] sm:$0xf]
        %v618 = vld [vmem:[%s609 + $0x20] sm:$0xf]
        %v619 = vld [vmem:[%s609 + $0x24] sm:$0xf]
        %v620 = vld [vmem:[%s609 + $0x28] sm:$0xf]
        %v621 = vld [vmem:[%s609 + $0x2c] sm:$0xf]
        %v622 = vld [vmem:[%s609 + $0x30] sm:$0xf]
        %v623 = vld [vmem:[%s609 + $0x34] sm:$0xf]
        %v624 = vld [vmem:[%s609 + $0x38] sm:$0xf]
        %v625 = vld [vmem:[%s609 + $0x3c] sm:$0xf]
        %v642 = vunpack.c.l.b16 %v610
        %v643 = vunpack.c.l.b16 %v611
        %v644 = vunpack.c.l.b16 %v612
        %v645 = vunpack.c.l.b16 %v613
        %v646 = vunpack.c.l.b16 %v614
        %v647 = vunpack.c.l.b16 %v615
        %v648 = vunpack.c.l.b16 %v616
        %v649 = vunpack.c.l.b16 %v617
        %v650 = vunpack.c.l.b16 %v618
        %v651 = vunpack.c.l.b16 %v619
        %v652 = vunpack.c.l.b16 %v620
        %v653 = vunpack.c.l.b16 %v621
        %v654 = vunpack.c.l.b16 %v622
        %v655 = vunpack.c.l.b16 %v623
        %v656 = vunpack.c.l.b16 %v624
        %v657 = vunpack.c.l.b16 %v625
        %v658 = vpack.c.b16 %v643, %v642
        %v659 = vpack.c.b16 %v645, %v644
        %v660 = vpack.c.b16 %v647, %v646
        %v661 = vpack.c.b16 %v649, %v648
        %v662 = vpack.c.b16 %v651, %v650
        %v663 = vpack.c.b16 %v653, %v652
        %v664 = vpack.c.b16 %v655, %v654
        %v665 = vpack.c.b16 %v657, %v656
        %674 = vmatprep.subr.bf16.mxu0 0
        %675 = vmatpush1.bf16.msra.mxu0 %v658
        %676 = vmatprep.subr.bf16.mxu0 0
        %677 = vmatpush1.bf16.msra.mxu0 %v659
        %678 = vmatprep.subr.bf16.mxu0 0
        %679 = vmatpush1.bf16.msra.mxu0 %v660
        %680 = vmatprep.subr.bf16.mxu0 0
        %681 = vmatpush1.bf16.msra.mxu0 %v661
        %682 = vmatprep.subr.bf16.mxu0 0
        %683 = vmatpush1.bf16.msra.mxu0 %v662
        %684 = vmatprep.subr.bf16.mxu0 0
        %685 = vmatpush1.bf16.msra.mxu0 %v663
        %686 = vmatprep.subr.bf16.mxu0 0
        %687 = vmatpush1.bf16.msra.mxu0 %v664
        %688 = vmatprep.subr.bf16.mxu0 0
        %689 = vmatpush1.bf16.msra.mxu0 %v665
        %690 = vmatprep.subr.bf16.mxu0 0
        %691 = vmatpush1.bf16.msra.mxu0 0
        %692 = vmatprep.subr.bf16.mxu0 0
        %693 = vmatpush1.bf16.msra.mxu0 0
        %694 = vmatprep.subr.bf16.mxu0 0
        %695 = vmatpush1.bf16.msra.mxu0 0
        %696 = vmatprep.subr.bf16.mxu0 0
        %697 = vmatpush1.bf16.msra.mxu0 0
        %698 = vmatprep.subr.bf16.mxu0 0
        %699 = vmatpush1.bf16.msra.mxu0 0
        %700 = vmatprep.subr.bf16.mxu0 0
        %701 = vmatpush1.bf16.msra.mxu0 0
        %702 = vmatprep.subr.bf16.mxu0 0
        %703 = vmatpush1.bf16.msra.mxu0 0
        %704 = vmatprep.subr.bf16.mxu0 0
        %705 = vmatpush1.bf16.msra.mxu0 0
        %706 = vmatprep.mubr.bf16.mxu0 0
        %707 = vmatmul.mubr.bf16.gmra.mrb[0].mxu0 %v607
        %v708 = vpop.f32.mrb[0].mxu0
        %v709 = vadd.f32 0.0, %v708
        %v710 = vpop.f32.mrb[0].mxu0
        %v711 = vpop.f32.mrb[0].mxu0
        %v712 = vadd.f32 0.0, %v711
        %v713 = vpop.f32.mrb[0].mxu0
        %714 = vmatprep.mubr.bf16.mxu0 0
        %715 = vmatmul.mubr.bf16.gmra.mrb[0].mxu0 %v608
        %v716 = vpop.f32.mrb[0].mxu0
        %v717 = vadd.f32 0.0, %v716
        %v718 = vpop.f32.mrb[0].mxu0
        %v719 = vpop.f32.mrb[0].mxu0
        %v720 = vadd.f32 0.0, %v719
        %v721 = vpop.f32.mrb[0].mxu0
        %722 = vdwg.mxu0
        %v723 = vadd.f32 %v589, %v709
        %v724 = vadd.f32 %v592, %v712
        %v725 = vadd.f32 %v597, %v717
        %v726 = vadd.f32 %v600, %v720
        %s727 = scalar_lea.vmem %s336, 160 [#allocation2]
        %v728 = vld [vmem:[%s727] sm:$0xff]
        %v729 = vld [vmem:[%s727 + $0x10] sm:$0xff]
        %v730 = vld [vmem:[%s727 + $0x20] sm:$0xff]
        %v731 = vld [vmem:[%s727 + $0x30] sm:$0xff]
        %v732 = vpack.c.bf16 %v729, %v728
        %v733 = vpack.c.bf16 %v731, %v730
        %s734 = scalar_lea.vmem %s1, 192
        %v735 = vld [vmem:[%s734] sm:$0xf]
        %v736 = vld [vmem:[%s734 + $0x4] sm:$0xf]
        %v737 = vld [vmem:[%s734 + $0x8] sm:$0xf]
        %v738 = vld [vmem:[%s734 + $0xc] sm:$0xf]
        %v739 = vld [vmem:[%s734 + $0x10] sm:$0xf]
        %v740 = vld [vmem:[%s734 + $0x14] sm:$0xf]
        %v741 = vld [vmem:[%s734 + $0x18] sm:$0xf]
        %v742 = vld [vmem:[%s734 + $0x1c] sm:$0xf]
        %v743 = vld [vmem:[%s734 + $0x20] sm:$0xf]
        %v744 = vld [vmem:[%s734 + $0x24] sm:$0xf]
        %v745 = vld [vmem:[%s734 + $0x28] sm:$0xf]
        %v746 = vld [vmem:[%s734 + $0x2c] sm:$0xf]
        %v747 = vld [vmem:[%s734 + $0x30] sm:$0xf]
        %v748 = vld [vmem:[%s734 + $0x34] sm:$0xf]
        %v749 = vld [vmem:[%s734 + $0x38] sm:$0xf]
        %v750 = vld [vmem:[%s734 + $0x3c] sm:$0xf]
        %v767 = vunpack.c.l.b16 %v735
        %v768 = vunpack.c.l.b16 %v736
        %v769 = vunpack.c.l.b16 %v737
        %v770 = vunpack.c.l.b16 %v738
        %v771 = vunpack.c.l.b16 %v739
        %v772 = vunpack.c.l.b16 %v740
        %v773 = vunpack.c.l.b16 %v741
        %v774 = vunpack.c.l.b16 %v742
        %v775 = vunpack.c.l.b16 %v743
        %v776 = vunpack.c.l.b16 %v744
        %v777 = vunpack.c.l.b16 %v745
        %v778 = vunpack.c.l.b16 %v746
        %v779 = vunpack.c.l.b16 %v747
        %v780 = vunpack.c.l.b16 %v748
        %v781 = vunpack.c.l.b16 %v749
        %v782 = vunpack.c.l.b16 %v750
        %v783 = vpack.c.b16 %v768, %v767
        %v784 = vpack.c.b16 %v770, %v769
        %v785 = vpack.c.b16 %v772, %v771
        %v786 = vpack.c.b16 %v774, %v773
        %v787 = vpack.c.b16 %v776, %v775
        %v788 = vpack.c.b16 %v778, %v777
        %v789 = vpack.c.b16 %v780, %v779
        %v790 = vpack.c.b16 %v782, %v781
        %799 = vmatprep.subr.bf16.mxu0 0
        %800 = vmatpush1.bf16.msra.mxu0 %v783
        %801 = vmatprep.subr.bf16.mxu0 0
        %802 = vmatpush1.bf16.msra.mxu0 %v784
        %803 = vmatprep.subr.bf16.mxu0 0
        %804 = vmatpush1.bf16.msra.mxu0 %v785
        %805 = vmatprep.subr.bf16.mxu0 0
        %806 = vmatpush1.bf16.msra.mxu0 %v786
        %807 = vmatprep.subr.bf16.mxu0 0
        %808 = vmatpush1.bf16.msra.mxu0 %v787
        %809 = vmatprep.subr.bf16.mxu0 0
        %810 = vmatpush1.bf16.msra.mxu0 %v788
        %811 = vmatprep.subr.bf16.mxu0 0
        %812 = vmatpush1.bf16.msra.mxu0 %v789
        %813 = vmatprep.subr.bf16.mxu0 0
        %814 = vmatpush1.bf16.msra.mxu0 %v790
        %815 = vmatprep.subr.bf16.mxu0 0
        %816 = vmatpush1.bf16.msra.mxu0 0
        %817 = vmatprep.subr.bf16.mxu0 0
        %818 = vmatpush1.bf16.msra.mxu0 0
        %819 = vmatprep.subr.bf16.mxu0 0
        %820 = vmatpush1.bf16.msra.mxu0 0
        %821 = vmatprep.subr.bf16.mxu0 0
        %822 = vmatpush1.bf16.msra.mxu0 0
        %823 = vmatprep.subr.bf16.mxu0 0
        %824 = vmatpush1.bf16.msra.mxu0 0
        %825 = vmatprep.subr.bf16.mxu0 0
        %826 = vmatpush1.bf16.msra.mxu0 0
        %827 = vmatprep.subr.bf16.mxu0 0
        %828 = vmatpush1.bf16.msra.mxu0 0
        %829 = vmatprep.subr.bf16.mxu0 0
        %830 = vmatpush1.bf16.msra.mxu0 0
        %831 = vmatprep.mubr.bf16.mxu0 0
        %832 = vmatmul.mubr.bf16.gmra.mrb[0].mxu0 %v732
        %v833 = vpop.f32.mrb[0].mxu0
        %v834 = vadd.f32 0.0, %v833
        %v835 = vpop.f32.mrb[0].mxu0
        %v836 = vpop.f32.mrb[0].mxu0
        %v837 = vadd.f32 0.0, %v836
        %v838 = vpop.f32.mrb[0].mxu0
        %839 = vmatprep.mubr.bf16.mxu0 0
        %840 = vmatmul.mubr.bf16.gmra.mrb[0].mxu0 %v733
        %v841 = vpop.f32.mrb[0].mxu0
        %v842 = vadd.f32 0.0, %v841
        %v843 = vpop.f32.mrb[0].mxu0
        %v844 = vpop.f32.mrb[0].mxu0
        %v845 = vadd.f32 0.0, %v844
        %v846 = vpop.f32.mrb[0].mxu0
        %847 = vdwg.mxu0
        %v848 = vadd.f32 %v723, %v834
        %v849 = vadd.f32 %v724, %v837
        %v850 = vadd.f32 %v725, %v842
        %v851 = vadd.f32 %v726, %v845
        %s852 = scalar_lea.vmem %s336, 240 [#allocation2]
        %v853 = vld [vmem:[%s852] sm:$0xff]
        %v854 = vld [vmem:[%s852 + $0x10] sm:$0xff]
        %v855 = vld [vmem:[%s852 + $0x20] sm:$0xff]
        %v856 = vld [vmem:[%s852 + $0x30] sm:$0xff]
        %v857 = vpack.c.bf16 %v854, %v853
        %v858 = vpack.c.bf16 %v856, %v855
        %s859 = scalar_lea.vmem %s1, 256
        %v860 = vld [vmem:[%s859] sm:$0xf]
        %v861 = vld [vmem:[%s859 + $0x4] sm:$0xf]
        %v862 = vld [vmem:[%s859 + $0x8] sm:$0xf]
        %v863 = vld [vmem:[%s859 + $0xc] sm:$0xf]
        %v864 = vld [vmem:[%s859 + $0x10] sm:$0xf]
        %v865 = vld [vmem:[%s859 + $0x14] sm:$0xf]
        %v866 = vld [vmem:[%s859 + $0x18] sm:$0xf]
        %v867 = vld [vmem:[%s859 + $0x1c] sm:$0xf]
        %v868 = vld [vmem:[%s859 + $0x20] sm:$0xf]
        %v869 = vld [vmem:[%s859 + $0x24] sm:$0xf]
        %v870 = vld [vmem:[%s859 + $0x28] sm:$0xf]
        %v871 = vld [vmem:[%s859 + $0x2c] sm:$0xf]
        %v872 = vld [vmem:[%s859 + $0x30] sm:$0xf]
        %v873 = vld [vmem:[%s859 + $0x34] sm:$0xf]
        %v874 = vld [vmem:[%s859 + $0x38] sm:$0xf]
        %v875 = vld [vmem:[%s859 + $0x3c] sm:$0xf]
        %v892 = vunpack.c.l.b16 %v860
        %v893 = vunpack.c.l.b16 %v861
        %v894 = vunpack.c.l.b16 %v862
        %v895 = vunpack.c.l.b16 %v863
        %v896 = vunpack.c.l.b16 %v864
        %v897 = vunpack.c.l.b16 %v865
        %v898 = vunpack.c.l.b16 %v866
        %v899 = vunpack.c.l.b16 %v867
        %v900 = vunpack.c.l.b16 %v868
        %v901 = vunpack.c.l.b16 %v869
        %v902 = vunpack.c.l.b16 %v870
        %v903 = vunpack.c.l.b16 %v871
        %v904 = vunpack.c.l.b16 %v872
        %v905 = vunpack.c.l.b16 %v873
        %v906 = vunpack.c.l.b16 %v874
        %v907 = vunpack.c.l.b16 %v875
        %v908 = vpack.c.b16 %v893, %v892
        %v909 = vpack.c.b16 %v895, %v894
        %v910 = vpack.c.b16 %v897, %v896
        %v911 = vpack.c.b16 %v899, %v898
        %v912 = vpack.c.b16 %v901, %v900
        %v913 = vpack.c.b16 %v903, %v902
        %v914 = vpack.c.b16 %v905, %v904
        %v915 = vpack.c.b16 %v907, %v906
        %924 = vmatprep.subr.bf16.mxu0 0
        %925 = vmatpush1.bf16.msra.mxu0 %v908
        %926 = vmatprep.subr.bf16.mxu0 0
        %927 = vmatpush1.bf16.msra.mxu0 %v909
        %928 = vmatprep.subr.bf16.mxu0 0
        %929 = vmatpush1.bf16.msra.mxu0 %v910
        %930 = vmatprep.subr.bf16.mxu0 0
        %931 = vmatpush1.bf16.msra.mxu0 %v911
        %932 = vmatprep.subr.bf16.mxu0 0
        %933 = vmatpush1.bf16.msra.mxu0 %v912
        %934 = vmatprep.subr.bf16.mxu0 0
        %935 = vmatpush1.bf16.msra.mxu0 %v913
        %936 = vmatprep.subr.bf16.mxu0 0
        %937 = vmatpush1.bf16.msra.mxu0 %v914
        %938 = vmatprep.subr.bf16.mxu0 0
        %939 = vmatpush1.bf16.msra.mxu0 %v915
        %940 = vmatprep.subr.bf16.mxu0 0
        %941 = vmatpush1.bf16.msra.mxu0 0
        %942 = vmatprep.subr.bf16.mxu0 0
        %943 = vmatpush1.bf16.msra.mxu0 0
        %944 = vmatprep.subr.bf16.mxu0 0
        %945 = vmatpush1.bf16.msra.mxu0 0
        %946 = vmatprep.subr.bf16.mxu0 0
        %947 = vmatpush1.bf16.msra.mxu0 0
        %948 = vmatprep.subr.bf16.mxu0 0
        %949 = vmatpush1.bf16.msra.mxu0 0
        %950 = vmatprep.subr.bf16.mxu0 0
        %951 = vmatpush1.bf16.msra.mxu0 0
        %952 = vmatprep.subr.bf16.mxu0 0
        %953 = vmatpush1.bf16.msra.mxu0 0
        %954 = vmatprep.subr.bf16.mxu0 0
        %955 = vmatpush1.bf16.msra.mxu0 0
        %956 = vmatprep.mubr.bf16.mxu0 0
        %957 = vmatmul.mubr.bf16.gmra.mrb[0].mxu0 %v857
        %v958 = vpop.f32.mrb[0].mxu0
        %v959 = vadd.f32 0.0, %v958
        %v960 = vpop.f32.mrb[0].mxu0
        %v961 = vpop.f32.mrb[0].mxu0
        %v962 = vadd.f32 0.0, %v961
        %v963 = vpop.f32.mrb[0].mxu0
        %964 = vmatprep.mubr.bf16.mxu0 0
        %965 = vmatmul.mubr.bf16.gmra.mrb[0].mxu0 %v858
        %v966 = vpop.f32.mrb[0].mxu0
        %v967 = vadd.f32 0.0, %v966
        %v968 = vpop.f32.mrb[0].mxu0
        %v969 = vpop.f32.mrb[0].mxu0
        %v970 = vadd.f32 0.0, %v969
        %v971 = vpop.f32.mrb[0].mxu0
        %972 = vdwg.mxu0
        %v973 = vadd.f32 %v848, %v959
        %v974 = vadd.f32 %v849, %v962
        %v975 = vadd.f32 %v850, %v967
        %v976 = vadd.f32 %v851, %v970
        %v977 = vld [vmem:[%s727 + $0x1] sm:$0xff]
        %v978 = vld [vmem:[%s727 + $0x11] sm:$0xff]
        %v979 = vld [vmem:[%s727 + $0x21] sm:$0xff]
        %v980 = vld [vmem:[%s727 + $0x31] sm:$0xff]
        %v981 = vpack.c.bf16 %v978, %v977
        %v982 = vpack.c.bf16 %v980, %v979
        %s983 = scalar_lea.vmem %s1, 320
        %v984 = vld [vmem:[%s983] sm:$0xf]
        %v985 = vld [vmem:[%s983 + $0x4] sm:$0xf]
        %v986 = vld [vmem:[%s983 + $0x8] sm:$0xf]
        %v987 = vld [vmem:[%s983 + $0xc] sm:$0xf]
        %v988 = vld [vmem:[%s983 + $0x10] sm:$0xf]
        %v989 = vld [vmem:[%s983 + $0x14] sm:$0xf]
        %v990 = vld [vmem:[%s983 + $0x18] sm:$0xf]
        %v991 = vld [vmem:[%s983 + $0x1c] sm:$0xf]
        %v992 = vld [vmem:[%s983 + $0x20] sm:$0xf]
        %v993 = vld [vmem:[%s983 + $0x24] sm:$0xf]
        %v994 = vld [vmem:[%s983 + $0x28] sm:$0xf]
        %v995 = vld [vmem:[%s983 + $0x2c] sm:$0xf]
        %v996 = vld [vmem:[%s983 + $0x30] sm:$0xf]
        %v997 = vld [vmem:[%s983 + $0x34] sm:$0xf]
        %v998 = vld [vmem:[%s983 + $0x38] sm:$0xf]
        %v999 = vld [vmem:[%s983 + $0x3c] sm:$0xf]
        %v1016 = vunpack.c.l.b16 %v984
        %v1017 = vunpack.c.l.b16 %v985
        %v1018 = vunpack.c.l.b16 %v986
        %v1019 = vunpack.c.l.b16 %v987
        %v1020 = vunpack.c.l.b16 %v988
        %v1021 = vunpack.c.l.b16 %v989
        %v1022 = vunpack.c.l.b16 %v990
        %v1023 = vunpack.c.l.b16 %v991
        %v1024 = vunpack.c.l.b16 %v992
        %v1025 = vunpack.c.l.b16 %v993
        %v1026 = vunpack.c.l.b16 %v994
        %v1027 = vunpack.c.l.b16 %v995
        %v1028 = vunpack.c.l.b16 %v996
        %v1029 = vunpack.c.l.b16 %v997
        %v1030 = vunpack.c.l.b16 %v998
        %v1031 = vunpack.c.l.b16 %v999
        %v1032 = vpack.c.b16 %v1017, %v1016
        %v1033 = vpack.c.b16 %v1019, %v1018
        %v1034 = vpack.c.b16 %v1021, %v1020
        %v1035 = vpack.c.b16 %v1023, %v1022
        %v1036 = vpack.c.b16 %v1025, %v1024
        %v1037 = vpack.c.b16 %v1027, %v1026
        %v1038 = vpack.c.b16 %v1029, %v1028
        %v1039 = vpack.c.b16 %v1031, %v1030
        %1048 = vmatprep.subr.bf16.mxu0 0
        %1049 = vmatpush1.bf16.msra.mxu0 %v1032
        %1050 = vmatprep.subr.bf16.mxu0 0
        %1051 = vmatpush1.bf16.msra.mxu0 %v1033
        %1052 = vmatprep.subr.bf16.mxu0 0
        %1053 = vmatpush1.bf16.msra.mxu0 %v1034
        %1054 = vmatprep.subr.bf16.mxu0 0
        %1055 = vmatpush1.bf16.msra.mxu0 %v1035
        %1056 = vmatprep.subr.bf16.mxu0 0
        %1057 = vmatpush1.bf16.msra.mxu0 %v1036
        %1058 = vmatprep.subr.bf16.mxu0 0
        %1059 = vmatpush1.bf16.msra.mxu0 %v1037
        %1060 = vmatprep.subr.bf16.mxu0 0
        %1061 = vmatpush1.bf16.msra.mxu0 %v1038
        %1062 = vmatprep.subr.bf16.mxu0 0
        %1063 = vmatpush1.bf16.msra.mxu0 %v1039
        %1064 = vmatprep.subr.bf16.mxu0 0
        %1065 = vmatpush1.bf16.msra.mxu0 0
        %1066 = vmatprep.subr.bf16.mxu0 0
        %1067 = vmatpush1.bf16.msra.mxu0 0
        %1068 = vmatprep.subr.bf16.mxu0 0
        %1069 = vmatpush1.bf16.msra.mxu0 0
        %1070 = vmatprep.subr.bf16.mxu0 0
        %1071 = vmatpush1.bf16.msra.mxu0 0
        %1072 = vmatprep.subr.bf16.mxu0 0
        %1073 = vmatpush1.bf16.msra.mxu0 0
        %1074 = vmatprep.subr.bf16.mxu0 0
        %1075 = vmatpush1.bf16.msra.mxu0 0
        %1076 = vmatprep.subr.bf16.mxu0 0
        %1077 = vmatpush1.bf16.msra.mxu0 0
        %1078 = vmatprep.subr.bf16.mxu0 0
        %1079 = vmatpush1.bf16.msra.mxu0 0
        %1080 = vmatprep.mubr.bf16.mxu0 0
        %1081 = vmatmul.mubr.bf16.gmra.mrb[0].mxu0 %v981
        %v1082 = vpop.f32.mrb[0].mxu0
        %v1083 = vadd.f32 0.0, %v1082
        %v1084 = vpop.f32.mrb[0].mxu0
        %v1085 = vpop.f32.mrb[0].mxu0
        %v1086 = vadd.f32 0.0, %v1085
        %v1087 = vpop.f32.mrb[0].mxu0
        %1088 = vmatprep.mubr.bf16.mxu0 0
        %1089 = vmatmul.mubr.bf16.gmra.mrb[0].mxu0 %v982
        %v1090 = vpop.f32.mrb[0].mxu0
        %v1091 = vadd.f32 0.0, %v1090
        %v1092 = vpop.f32.mrb[0].mxu0
        %v1093 = vpop.f32.mrb[0].mxu0
        %v1094 = vadd.f32 0.0, %v1093
        %v1095 = vpop.f32.mrb[0].mxu0
        %1096 = vdwg.mxu0
        %v1097 = vadd.f32 %v973, %v1083
        %v1098 = vadd.f32 %v974, %v1086
        %v1099 = vadd.f32 %v975, %v1091
        %v1100 = vadd.f32 %v976, %v1094
        %s1101 = scalar_lea.vmem %s336, 16 [#allocation2]
        %v1102 = vld [vmem:[%s1101] sm:$0xff]
        %v1103 = vld [vmem:[%s1101 + $0x10] sm:$0xff]
        %v1104 = vld [vmem:[%s1101 + $0x20] sm:$0xff]
        %v1105 = vld [vmem:[%s1101 + $0x30] sm:$0xff]
        %v1106 = vpack.c.bf16 %v1103, %v1102
        %v1107 = vpack.c.bf16 %v1105, %v1104
        %s1108 = scalar_lea.vmem %s1, 384
        %v1109 = vld [vmem:[%s1108] sm:$0xf]
        %v1110 = vld [vmem:[%s1108 + $0x4] sm:$0xf]
        %v1111 = vld [vmem:[%s1108 + $0x8] sm:$0xf]
        %v1112 = vld [vmem:[%s1108 + $0xc] sm:$0xf]
        %v1113 = vld [vmem:[%s1108 + $0x10] sm:$0xf]
        %v1114 = vld [vmem:[%s1108 + $0x14] sm:$0xf]
        %v1115 = vld [vmem:[%s1108 + $0x18] sm:$0xf]
        %v1116 = vld [vmem:[%s1108 + $0x1c] sm:$0xf]
        %v1117 = vld [vmem:[%s1108 + $0x20] sm:$0xf]
        %v1118 = vld [vmem:[%s1108 + $0x24] sm:$0xf]
        %v1119 = vld [vmem:[%s1108 + $0x28] sm:$0xf]
        %v1120 = vld [vmem:[%s1108 + $0x2c] sm:$0xf]
        %v1121 = vld [vmem:[%s1108 + $0x30] sm:$0xf]
        %v1122 = vld [vmem:[%s1108 + $0x34] sm:$0xf]
        %v1123 = vld [vmem:[%s1108 + $0x38] sm:$0xf]
        %v1124 = vld [vmem:[%s1108 + $0x3c] sm:$0xf]
        %v1141 = vunpack.c.l.b16 %v1109
        %v1142 = vunpack.c.l.b16 %v1110
        %v1143 = vunpack.c.l.b16 %v1111
        %v1144 = vunpack.c.l.b16 %v1112
        %v1145 = vunpack.c.l.b16 %v1113
        %v1146 = vunpack.c.l.b16 %v1114
        %v1147 = vunpack.c.l.b16 %v1115
        %v1148 = vunpack.c.l.b16 %v1116
        %v1149 = vunpack.c.l.b16 %v1117
        %v1150 = vunpack.c.l.b16 %v1118
        %v1151 = vunpack.c.l.b16 %v1119
        %v1152 = vunpack.c.l.b16 %v1120
        %v1153 = vunpack.c.l.b16 %v1121
        %v1154 = vunpack.c.l.b16 %v1122
        %v1155 = vunpack.c.l.b16 %v1123
        %v1156 = vunpack.c.l.b16 %v1124
        %v1157 = vpack.c.b16 %v1142, %v1141
        %v1158 = vpack.c.b16 %v1144, %v1143
        %v1159 = vpack.c.b16 %v1146, %v1145
        %v1160 = vpack.c.b16 %v1148, %v1147
        %v1161 = vpack.c.b16 %v1150, %v1149
        %v1162 = vpack.c.b16 %v1152, %v1151
        %v1163 = vpack.c.b16 %v1154, %v1153
        %v1164 = vpack.c.b16 %v1156, %v1155
        %1173 = vmatprep.subr.bf16.mxu0 0
        %1174 = vmatpush1.bf16.msra.mxu0 %v1157
        %1175 = vmatprep.subr.bf16.mxu0 0
        %1176 = vmatpush1.bf16.msra.mxu0 %v1158
        %1177 = vmatprep.subr.bf16.mxu0 0
        %1178 = vmatpush1.bf16.msra.mxu0 %v1159
        %1179 = vmatprep.subr.bf16.mxu0 0
        %1180 = vmatpush1.bf16.msra.mxu0 %v1160
        %1181 = vmatprep.subr.bf16.mxu0 0
        %1182 = vmatpush1.bf16.msra.mxu0 %v1161
        %1183 = vmatprep.subr.bf16.mxu0 0
        %1184 = vmatpush1.bf16.msra.mxu0 %v1162
        %1185 = vmatprep.subr.bf16.mxu0 0
        %1186 = vmatpush1.bf16.msra.mxu0 %v1163
        %1187 = vmatprep.subr.bf16.mxu0 0
        %1188 = vmatpush1.bf16.msra.mxu0 %v1164
        %1189 = vmatprep.subr.bf16.mxu0 0
        %1190 = vmatpush1.bf16.msra.mxu0 0
        %1191 = vmatprep.subr.bf16.mxu0 0
        %1192 = vmatpush1.bf16.msra.mxu0 0
        %1193 = vmatprep.subr.bf16.mxu0 0
        %1194 = vmatpush1.bf16.msra.mxu0 0
        %1195 = vmatprep.subr.bf16.mxu0 0
        %1196 = vmatpush1.bf16.msra.mxu0 0
        %1197 = vmatprep.subr.bf16.mxu0 0
        %1198 = vmatpush1.bf16.msra.mxu0 0
        %1199 = vmatprep.subr.bf16.mxu0 0
        %1200 = vmatpush1.bf16.msra.mxu0 0
        %1201 = vmatprep.subr.bf16.mxu0 0
        %1202 = vmatpush1.bf16.msra.mxu0 0
        %1203 = vmatprep.subr.bf16.mxu0 0
        %1204 = vmatpush1.bf16.msra.mxu0 0
        %1205 = vmatprep.mubr.bf16.mxu0 0
        %1206 = vmatmul.mubr.bf16.gmra.mrb[0].mxu0 %v1106
        %v1207 = vpop.f32.mrb[0].mxu0
        %v1208 = vadd.f32 0.0, %v1207
        %v1209 = vpop.f32.mrb[0].mxu0
        %v1210 = vpop.f32.mrb[0].mxu0
        %v1211 = vadd.f32 0.0, %v1210
        %v1212 = vpop.f32.mrb[0].mxu0
        %1213 = vmatprep.mubr.bf16.mxu0 0
        %1214 = vmatmul.mubr.bf16.gmra.mrb[0].mxu0 %v1107
        %v1215 = vpop.f32.mrb[0].mxu0
        %v1216 = vadd.f32 0.0, %v1215
        %v1217 = vpop.f32.mrb[0].mxu0
        %v1218 = vpop.f32.mrb[0].mxu0
        %v1219 = vadd.f32 0.0, %v1218
        %v1220 = vpop.f32.mrb[0].mxu0
        %1221 = vdwg.mxu0
        %v1222 = vadd.f32 %v1097, %v1208
        %v1223 = vadd.f32 %v1098, %v1211
        %v1224 = vadd.f32 %v1099, %v1216
        %v1225 = vadd.f32 %v1100, %v1219
        %s1226 = scalar_lea.vmem %s336, 96 [#allocation2]
        %v1227 = vld [vmem:[%s1226] sm:$0xff]
        %v1228 = vld [vmem:[%s1226 + $0x10] sm:$0xff]
        %v1229 = vld [vmem:[%s1226 + $0x20] sm:$0xff]
        %v1230 = vld [vmem:[%s1226 + $0x30] sm:$0xff]
        %v1231 = vpack.c.bf16 %v1228, %v1227
        %v1232 = vpack.c.bf16 %v1230, %v1229
        %s1233 = scalar_lea.vmem %s1, 448
        %v1234 = vld [vmem:[%s1233] sm:$0xf]
        %v1235 = vld [vmem:[%s1233 + $0x4] sm:$0xf]
        %v1236 = vld [vmem:[%s1233 + $0x8] sm:$0xf]
        %v1237 = vld [vmem:[%s1233 + $0xc] sm:$0xf]
        %v1238 = vld [vmem:[%s1233 + $0x10] sm:$0xf]
        %v1239 = vld [vmem:[%s1233 + $0x14] sm:$0xf]
        %v1240 = vld [vmem:[%s1233 + $0x18] sm:$0xf]
        %v1241 = vld [vmem:[%s1233 + $0x1c] sm:$0xf]
        %v1242 = vld [vmem:[%s1233 + $0x20] sm:$0xf]
        %v1243 = vld [vmem:[%s1233 + $0x24] sm:$0xf]
        %v1244 = vld [vmem:[%s1233 + $0x28] sm:$0xf]
        %v1245 = vld [vmem:[%s1233 + $0x2c] sm:$0xf]
        %v1246 = vld [vmem:[%s1233 + $0x30] sm:$0xf]
        %v1247 = vld [vmem:[%s1233 + $0x34] sm:$0xf]
        %v1248 = vld [vmem:[%s1233 + $0x38] sm:$0xf]
        %v1249 = vld [vmem:[%s1233 + $0x3c] sm:$0xf]
        %v1266 = vunpack.c.l.b16 %v1234
        %v1267 = vunpack.c.l.b16 %v1235
        %v1268 = vunpack.c.l.b16 %v1236
        %v1269 = vunpack.c.l.b16 %v1237
        %v1270 = vunpack.c.l.b16 %v1238
        %v1271 = vunpack.c.l.b16 %v1239
        %v1272 = vunpack.c.l.b16 %v1240
        %v1273 = vunpack.c.l.b16 %v1241
        %v1274 = vunpack.c.l.b16 %v1242
        %v1275 = vunpack.c.l.b16 %v1243
        %v1276 = vunpack.c.l.b16 %v1244
        %v1277 = vunpack.c.l.b16 %v1245
        %v1278 = vunpack.c.l.b16 %v1246
        %v1279 = vunpack.c.l.b16 %v1247
        %v1280 = vunpack.c.l.b16 %v1248
        %v1281 = vunpack.c.l.b16 %v1249
        %v1282 = vpack.c.b16 %v1267, %v1266
        %v1283 = vpack.c.b16 %v1269, %v1268
        %v1284 = vpack.c.b16 %v1271, %v1270
        %v1285 = vpack.c.b16 %v1273, %v1272
        %v1286 = vpack.c.b16 %v1275, %v1274
        %v1287 = vpack.c.b16 %v1277, %v1276
        %v1288 = vpack.c.b16 %v1279, %v1278
        %v1289 = vpack.c.b16 %v1281, %v1280
        %1298 = vmatprep.subr.bf16.mxu0 0
        %1299 = vmatpush1.bf16.msra.mxu0 %v1282
        %1300 = vmatprep.subr.bf16.mxu0 0
        %1301 = vmatpush1.bf16.msra.mxu0 %v1283
        %1302 = vmatprep.subr.bf16.mxu0 0
        %1303 = vmatpush1.bf16.msra.mxu0 %v1284
        %1304 = vmatprep.subr.bf16.mxu0 0
        %1305 = vmatpush1.bf16.msra.mxu0 %v1285
        %1306 = vmatprep.subr.bf16.mxu0 0
        %1307 = vmatpush1.bf16.msra.mxu0 %v1286
        %1308 = vmatprep.subr.bf16.mxu0 0
        %1309 = vmatpush1.bf16.msra.mxu0 %v1287
        %1310 = vmatprep.subr.bf16.mxu0 0
        %1311 = vmatpush1.bf16.msra.mxu0 %v1288
        %1312 = vmatprep.subr.bf16.mxu0 0
        %1313 = vmatpush1.bf16.msra.mxu0 %v1289
        %1314 = vmatprep.subr.bf16.mxu0 0
        %1315 = vmatpush1.bf16.msra.mxu0 0
        %1316 = vmatprep.subr.bf16.mxu0 0
        %1317 = vmatpush1.bf16.msra.mxu0 0
        %1318 = vmatprep.subr.bf16.mxu0 0
        %1319 = vmatpush1.bf16.msra.mxu0 0
        %1320 = vmatprep.subr.bf16.mxu0 0
        %1321 = vmatpush1.bf16.msra.mxu0 0
        %1322 = vmatprep.subr.bf16.mxu0 0
        %1323 = vmatpush1.bf16.msra.mxu0 0
        %1324 = vmatprep.subr.bf16.mxu0 0
        %1325 = vmatpush1.bf16.msra.mxu0 0
        %1326 = vmatprep.subr.bf16.mxu0 0
        %1327 = vmatpush1.bf16.msra.mxu0 0
        %1328 = vmatprep.subr.bf16.mxu0 0
        %1329 = vmatpush1.bf16.msra.mxu0 0
        %1330 = vmatprep.mubr.bf16.mxu0 0
        %1331 = vmatmul.mubr.bf16.gmra.mrb[0].mxu0 %v1231
        %v1332 = vpop.f32.mrb[0].mxu0
        %v1333 = vadd.f32 0.0, %v1332
        %v1334 = vpop.f32.mrb[0].mxu0
        %v1335 = vpop.f32.mrb[0].mxu0
        %v1336 = vadd.f32 0.0, %v1335
        %v1337 = vpop.f32.mrb[0].mxu0
        %1338 = vmatprep.mubr.bf16.mxu0 0
        %1339 = vmatmul.mubr.bf16.gmra.mrb[0].mxu0 %v1232
        %v1340 = vpop.f32.mrb[0].mxu0
        %v1341 = vadd.f32 0.0, %v1340
        %v1342 = vpop.f32.mrb[0].mxu0
        %v1343 = vpop.f32.mrb[0].mxu0
        %v1344 = vadd.f32 0.0, %v1343
        %v1345 = vpop.f32.mrb[0].mxu0
        %1346 = vdwg.mxu0
        %v1347 = vadd.f32 %v1222, %v1333
        %v1348 = vadd.f32 %v1223, %v1336
        %v1349 = vadd.f32 %v1224, %v1341
        %v1350 = vadd.f32 %v1225, %v1344
        %v1351 = vld [vmem:[%s1101 + $0x1] sm:$0xff]
        %v1352 = vld [vmem:[%s1101 + $0x11] sm:$0xff]
        %v1353 = vld [vmem:[%s1101 + $0x21] sm:$0xff]
        %v1354 = vld [vmem:[%s1101 + $0x31] sm:$0xff]
        %v1355 = vpack.c.bf16 %v1352, %v1351
        %v1356 = vpack.c.bf16 %v1354, %v1353
        %s1357 = scalar_lea.vmem %s1, 512
        %v1358 = vld [vmem:[%s1357] sm:$0xf]
        %v1359 = vld [vmem:[%s1357 + $0x4] sm:$0xf]
        %v1360 = vld [vmem:[%s1357 + $0x8] sm:$0xf]
        %v1361 = vld [vmem:[%s1357 + $0xc] sm:$0xf]
        %v1362 = vld [vmem:[%s1357 + $0x10] sm:$0xf]
        %v1363 = vld [vmem:[%s1357 + $0x14] sm:$0xf]
        %v1364 = vld [vmem:[%s1357 + $0x18] sm:$0xf]
        %v1365 = vld [vmem:[%s1357 + $0x1c] sm:$0xf]
        %v1366 = vld [vmem:[%s1357 + $0x20] sm:$0xf]
        %v1367 = vld [vmem:[%s1357 + $0x24] sm:$0xf]
        %v1368 = vld [vmem:[%s1357 + $0x28] sm:$0xf]
        %v1369 = vld [vmem:[%s1357 + $0x2c] sm:$0xf]
        %v1370 = vld [vmem:[%s1357 + $0x30] sm:$0xf]
        %v1371 = vld [vmem:[%s1357 + $0x34] sm:$0xf]
        %v1372 = vld [vmem:[%s1357 + $0x38] sm:$0xf]
        %v1373 = vld [vmem:[%s1357 + $0x3c] sm:$0xf]
        %v1390 = vunpack.c.l.b16 %v1358
        %v1391 = vunpack.c.l.b16 %v1359
        %v1392 = vunpack.c.l.b16 %v1360
        %v1393 = vunpack.c.l.b16 %v1361
        %v1394 = vunpack.c.l.b16 %v1362
        %v1395 = vunpack.c.l.b16 %v1363
        %v1396 = vunpack.c.l.b16 %v1364
        %v1397 = vunpack.c.l.b16 %v1365
        %v1398 = vunpack.c.l.b16 %v1366
        %v1399 = vunpack.c.l.b16 %v1367
        %v1400 = vunpack.c.l.b16 %v1368
        %v1401 = vunpack.c.l.b16 %v1369
        %v1402 = vunpack.c.l.b16 %v1370
        %v1403 = vunpack.c.l.b16 %v1371
        %v1404 = vunpack.c.l.b16 %v1372
        %v1405 = vunpack.c.l.b16 %v1373
        %v1406 = vpack.c.b16 %v1391, %v1390
        %v1407 = vpack.c.b16 %v1393, %v1392
        %v1408 = vpack.c.b16 %v1395, %v1394
        %v1409 = vpack.c.b16 %v1397, %v1396
        %v1410 = vpack.c.b16 %v1399, %v1398
        %v1411 = vpack.c.b16 %v1401, %v1400
        %v1412 = vpack.c.b16 %v1403, %v1402
        %v1413 = vpack.c.b16 %v1405, %v1404
        %1422 = vmatprep.subr.bf16.mxu0 0
        %1423 = vmatpush1.bf16.msra.mxu0 %v1406
        %1424 = vmatprep.subr.bf16.mxu0 0
        %1425 = vmatpush1.bf16.msra.mxu0 %v1407
        %1426 = vmatprep.subr.bf16.mxu0 0
        %1427 = vmatpush1.bf16.msra.mxu0 %v1408
        %1428 = vmatprep.subr.bf16.mxu0 0
        %1429 = vmatpush1.bf16.msra.mxu0 %v1409
        %1430 = vmatprep.subr.bf16.mxu0 0
        %1431 = vmatpush1.bf16.msra.mxu0 %v1410
        %1432 = vmatprep.subr.bf16.mxu0 0
        %1433 = vmatpush1.bf16.msra.mxu0 %v1411
        %1434 = vmatprep.subr.bf16.mxu0 0
        %1435 = vmatpush1.bf16.msra.mxu0 %v1412
        %1436 = vmatprep.subr.bf16.mxu0 0
        %1437 = vmatpush1.bf16.msra.mxu0 %v1413
        %1438 = vmatprep.subr.bf16.mxu0 0
        %1439 = vmatpush1.bf16.msra.mxu0 0
        %1440 = vmatprep.subr.bf16.mxu0 0
        %1441 = vmatpush1.bf16.msra.mxu0 0
        %1442 = vmatprep.subr.bf16.mxu0 0
        %1443 = vmatpush1.bf16.msra.mxu0 0
        %1444 = vmatprep.subr.bf16.mxu0 0
        %1445 = vmatpush1.bf16.msra.mxu0 0
        %1446 = vmatprep.subr.bf16.mxu0 0
        %1447 = vmatpush1.bf16.msra.mxu0 0
        %1448 = vmatprep.subr.bf16.mxu0 0
        %1449 = vmatpush1.bf16.msra.mxu0 0
        %1450 = vmatprep.subr.bf16.mxu0 0
        %1451 = vmatpush1.bf16.msra.mxu0 0
        %1452 = vmatprep.subr.bf16.mxu0 0
        %1453 = vmatpush1.bf16.msra.mxu0 0
        %1454 = vmatprep.mubr.bf16.mxu0 0
        %1455 = vmatmul.mubr.bf16.gmra.mrb[0].mxu0 %v1355
        %v1456 = vpop.f32.mrb[0].mxu0
        %v1457 = vadd.f32 0.0, %v1456
        %v1458 = vpop.f32.mrb[0].mxu0
        %v1459 = vpop.f32.mrb[0].mxu0
        %v1460 = vadd.f32 0.0, %v1459
        %v1461 = vpop.f32.mrb[0].mxu0
        %1462 = vmatprep.mubr.bf16.mxu0 0
        %1463 = vmatmul.mubr.bf16.gmra.mrb[0].mxu0 %v1356
        %v1464 = vpop.f32.mrb[0].mxu0
        %v1465 = vadd.f32 0.0, %v1464
        %v1466 = vpop.f32.mrb[0].mxu0
        %v1467 = vpop.f32.mrb[0].mxu0
        %v1468 = vadd.f32 0.0, %v1467
        %v1469 = vpop.f32.mrb[0].mxu0
        %1470 = vdwg.mxu0
        %v1471 = vadd.f32 %v1347, %v1457
        %v1472 = vadd.f32 %v1348, %v1460
        %v1473 = vadd.f32 %v1349, %v1465
        %v1474 = vadd.f32 %v1350, %v1468
        %v1475 = vld [vmem:[%s2] sm:$0x1]
        %v1477 = vlaneseq
        %v1478 = vshrl.u32 %v1477, 7
        %v1479 = vsub.s32 0, %v1478
        %v1480 = vrot.slane %v1475, %v1479
        %v1482 = vadd.f32 %v1471, %v1480
        %v1483 = vadd.f32 %v1472, %v1480
        %v1484 = vadd.f32 %v1473, %v1480
        %v1485 = vadd.f32 %v1474, %v1480
        %v1486 = vmax.f32 %v1482, 0.0
        %v1487 = vmax.f32 %v1483, 0.0
        %v1488 = vmax.f32 %v1484, 0.0
        %v1489 = vmax.f32 %v1485, 0.0
        %1490 = vst [vmem:[%s361] sm:$0xff] %v1486
        %1491 = vst [vmem:[%s361 + $0x8] sm:$0xff] %v1487
        %1492 = vst [vmem:[%s361 + $0x10] sm:$0xff] %v1488
        %1493 = vst [vmem:[%s361 + $0x18] sm:$0xff] %v1489
        %p1494 = scmp.lt.s32.totalorder %s14, 1
        %s1495 = scalar_select %p1494, %s14, 1
        %s1496 = smul.addr %s1495, 4
        %s1497 = smul.addr %s1496, 8
        %s1498 = scalar_lea.vmem %s3, %s1497
        // Predicated region
        $region71: #{var_encoder_forward.5} parent=65 // pred_check
          %p1499 = pneg %p100
        $region72: #{var_encoder_forward.5} parent=65 // pred_check_branch
          %1501 = sbr.rel (%p1499) target = $region74
        $region73: #{var_encoder_forward.5} parent=65 // pred_region
          _
        $region74: #{var_encoder_forward.5} parent=65 // pred_fallthru
          _
      $region66: #{var_encoder_forward.5} parent=5 // pred_fallthru
        _
      %p1502 = scmp.le.s32.totalorder 2, %s9
      // Predicated region
      $region75: #{var_encoder_forward.5} parent=5 // pred_check
        %p1503 = pneg %p1502
      $region76: #{var_encoder_forward.5} parent=5 // pred_check_branch
        %1505 = sbr.rel (%p1503) target = $region78
      $region77: #{var_encoder_forward.5} parent=5 // pred_region
        %s1506 = ssub.s32 %s9, 2
        // Predicated region
        $region79: #{var_encoder_forward.5} parent=77 // pred_check
          %p1507 = pneg %p106
        $region80: #{var_encoder_forward.5} parent=77 // pred_check_branch
          %1509 = sbr.rel (%p1507) target = $region82
        $region81: #{var_encoder_forward.5} parent=77 // pred_region
          %p1510 = scmp.lt.s32.totalorder %s15, 1
          %s1511 = scalar_select %p1510, %s15, 1
          %s1512 = smul.addr %s1511, 4
          %s1513 = smul.addr %s1512, 8
          %s1514 = scalar_lea.vmem %s3, %s1513
        $region82: #{var_encoder_forward.5} parent=77 // pred_fallthru
          _
      $region78: #{var_encoder_forward.5} parent=5 // pred_fallthru
        _
    $region6: #{var_encoder_forward.5} parent=1 // loop_footer
      %s13 = sadd.s32 1, %s9
    $region7: #{var_encoder_forward.5} parent=1 // loop_footer_branch
      %8 = sbr.rel target = $region3
    $region8: #{var_encoder_forward.5} parent=1 // loop_exit
      _

// kernel: var_encoder_forward.6
$region0: #{var_encoder_forward.6}
  #allocation0 [shape = 'u32[]', space=smem, size = 0x4, offset = 0x4, fixed_abs, tag = 'smem constant byte address 0x4 - core index']
  #allocation1 [shape = 'u32[144,128]{1,0:T(1,128)}', space=vmem, size = 0x12000, scoped, tag = 'internal scratch']
  %s0 = inlined_call_operand.vmem [shape: f32[1,1,2,6,10,128], index: 0, kind: input, shape index: {}]
  %s1 = inlined_call_operand.vmem [shape: bf16[9,128,128], index: 1, kind: input, shape index: {}]
  %s2 = inlined_call_operand.vmem [shape: f32[1,128], index: 2, kind: input, shape index: {}]
  %s3 = inlined_call_operand.vmem [shape: f32[2,32,128], index: 3, kind: output, shape index: {}]
  %s4 = sld [smem:[#allocation0]]
  $region45: #{var_encoder_forward.6} parent=0
    _
  %s6 = ssub.s32 1, %s4
  %s7 = scalar_select 0, %s6, %s4
  loop: start=0, step=1, limit=4
  $region2: #{var_encoder_forward.6} parent=0 // loop_pre_header
    _
  $region3: #{var_encoder_forward.6} parent=0 // loop_header
    %s9 = sphi 0, %s13
    %p10 = scmp.ge.s32.totalorder %s9, 4
    %s19 = sphi 0, %s21
    %s22 = sphi 0, %s19
    %s23 = sphi 0, %s22
    %s39 = sphi 0, %s23
    %s43 = sphi 0, %s43
    %s45 = sphi 0, %s43
    %s46 = sphi 0, %s45
    %s60 = sphi 0, %s46
    %s64 = sphi 0, %s64
    %s66 = sphi 0, %s64
    %s67 = sphi 0, %s66
    %s81 = sphi 0, %s67
    %s87 = sphi 0, %s89
    %s90 = sphi 0, %s87
    %s91 = sphi 0, %s90
    %s107 = sphi 0, %s91
  $region4: #{var_encoder_forward.6} parent=0 // loop_header_branch
    %12 = sbr.rel (%p10) target = $region8
  $region5: #{var_encoder_forward.6} parent=0 // loop_body
    %s14 = ssub.s32 %s9, 1
    %s15 = ssub.s32 %s9, 2
    %s16 = sadd.s32 %s9, 1
    %s17 = ssub.s32 %s9, %s16
    %p18 = scmp.eq.s32.totalorder %s17, 0
    %s20 = sadd.s32 %s19, 1
    %s21 = scalar_select %p18, %s19, %s20
    %p24 = pneg %p18
    %p25 = scmp.eq.s32.totalorder %s9, 1
    %p26 = por %p24, %p25
    %p27 = scmp.ne.s32.totalorder %s19, %s22
    %p28 = scmp.eq.s32.totalorder %s9, 0
    %p29 = por %p27, %p28
    %p30 = scmp.ne.s32.totalorder %s19, %s22
    %p31 = scmp.eq.s32.totalorder %s14, 1
    %p32 = por %p30, %p31
    %p33 = scmp.ne.s32.totalorder %s22, %s23
    %p34 = scmp.eq.s32.totalorder %s14, 0
    %p35 = por %p33, %p34
    %p36 = scmp.ne.s32.totalorder %s22, %s23
    %p37 = scmp.eq.s32.totalorder %s15, 1
    %p38 = por %p36, %p37
    %p40 = scmp.ne.s32.totalorder %s23, %s39
    %p41 = scmp.eq.s32.totalorder %s15, 0
    %p42 = por %p40, %p41
    %s44 = sadd.s32 %s43, 1
    %p47 = scmp.eq.s32.totalorder %s9, 1
    %p48 = scmp.ne.s32.totalorder %s43, %s45
    %p49 = scmp.eq.s32.totalorder %s9, 0
    %p50 = por %p48, %p49
    %p51 = scmp.ne.s32.totalorder %s43, %s45
    %p52 = scmp.eq.s32.totalorder %s14, 1
    %p53 = por %p51, %p52
    %p54 = scmp.ne.s32.totalorder %s45, %s46
    %p55 = scmp.eq.s32.totalorder %s14, 0
    %p56 = por %p54, %p55
    %p57 = scmp.ne.s32.totalorder %s45, %s46
    %p58 = scmp.eq.s32.totalorder %s15, 1
    %p59 = por %p57, %p58
    %p61 = scmp.ne.s32.totalorder %s46, %s60
    %p62 = scmp.eq.s32.totalorder %s15, 0
    %p63 = por %p61, %p62
    %s65 = sadd.s32 %s64, 1
    %p68 = scmp.eq.s32.totalorder %s9, 1
    %p69 = scmp.ne.s32.totalorder %s64, %s66
    %p70 = scmp.eq.s32.totalorder %s9, 0
    %p71 = por %p69, %p70
    %p72 = scmp.ne.s32.totalorder %s64, %s66
    %p73 = scmp.eq.s32.totalorder %s14, 1
    %p74 = por %p72, %p73
    %p75 = scmp.ne.s32.totalorder %s66, %s67
    %p76 = scmp.eq.s32.totalorder %s14, 0
    %p77 = por %p75, %p76
    %p78 = scmp.ne.s32.totalorder %s66, %s67
    %p79 = scmp.eq.s32.totalorder %s15, 1
    %p80 = por %p78, %p79
    %p82 = scmp.ne.s32.totalorder %s67, %s81
    %p83 = scmp.eq.s32.totalorder %s15, 0
    %p84 = por %p82, %p83
    %s85 = ssub.s32 %s9, %s16
    %p86 = scmp.eq.s32.totalorder %s85, 0
    %s88 = sadd.s32 %s87, 1
    %s89 = scalar_select %p86, %s87, %s88
    %p92 = pneg %p86
    %p93 = scmp.eq.s32.totalorder %s9, 1
    %p94 = por %p92, %p93
    %p95 = scmp.ne.s32.totalorder %s87, %s90
    %p96 = scmp.eq.s32.totalorder %s9, 0
    %p97 = por %p95, %p96
    %p98 = scmp.ne.s32.totalorder %s87, %s90
    %p99 = scmp.eq.s32.totalorder %s14, 1
    %p100 = por %p98, %p99
    %p101 = scmp.ne.s32.totalorder %s90, %s91
    %p102 = scmp.eq.s32.totalorder %s14, 0
    %p103 = por %p101, %p102
    %p104 = scmp.ne.s32.totalorder %s90, %s91
    %p105 = scmp.eq.s32.totalorder %s15, 1
    %p106 = por %p104, %p105
    %p108 = scmp.ne.s32.totalorder %s91, %s107
    %p109 = scmp.eq.s32.totalorder %s15, 0
    %p110 = por %p108, %p109
    %p111 = scmp.le.s32.totalorder 1, %s9
    %p112 = scmp.lt.s32.totalorder %s9, 3
    %p113 = pnand %p111, %p112
    %p114 = pneg %p113
    // Predicated region
    $region9: #{var_encoder_forward.6} parent=5 // pred_check
      _
    $region10: #{var_encoder_forward.6} parent=5 // pred_check_branch
      %116 = sbr.rel (%p113) target = $region12
    $region11: #{var_encoder_forward.6} parent=5 // pred_region
      %s117 = ssub.s32 %s9, 1
      // Predicated region
      $region13: #{var_encoder_forward.6} parent=11 // pred_check
        %p118 = pneg %p56
      $region14: #{var_encoder_forward.6} parent=11 // pred_check_branch
        %120 = sbr.rel (%p118) target = $region16
      $region15: #{var_encoder_forward.6} parent=11 // pred_region
        _
      $region16: #{var_encoder_forward.6} parent=11 // pred_fallthru
        _
      // Predicated region
      $region17: #{var_encoder_forward.6} parent=11 // pred_check
        %p121 = pneg %p77
      $region18: #{var_encoder_forward.6} parent=11 // pred_check_branch
        %123 = sbr.rel (%p121) target = $region20
      $region19: #{var_encoder_forward.6} parent=11 // pred_region
        _
      $region20: #{var_encoder_forward.6} parent=11 // pred_fallthru
        _
    $region12: #{var_encoder_forward.6} parent=5 // pred_fallthru
      _
    %p124 = scmp.lt.s32.totalorder %s9, 2
    // Predicated region
    $region21: #{var_encoder_forward.6} parent=5 // pred_check
      %p125 = pneg %p124
    $region22: #{var_encoder_forward.6} parent=5 // pred_check_branch
      %127 = sbr.rel (%p125) target = $region24
    $region23: #{var_encoder_forward.6} parent=5 // pred_region
      // Predicated region
      $region25: #{var_encoder_forward.6} parent=23 // pred_check
        %p128 = pneg %p29
      $region26: #{var_encoder_forward.6} parent=23 // pred_check_branch
        %130 = sbr.rel (%p128) target = $region28
      $region27: #{var_encoder_forward.6} parent=23 // pred_region
        %p131 = scmp.lt.s32.totalorder %s9, 1
        %s132 = scalar_select %p131, %s9, 1
        %s133 = smul.addr %s132, 12
        %s134 = smul.addr %s133, 8
        %s135 = scalar_lea.vmem %s0, %s134
      $region28: #{var_encoder_forward.6} parent=23 // pred_fallthru
        _
    $region24: #{var_encoder_forward.6} parent=5 // pred_fallthru
      _
    %p136 = scmp.le.s32.totalorder 1, %s9
    %p137 = scmp.lt.s32.totalorder %s9, 3
    %p138 = pnand %p136, %p137
    %p139 = pneg %p138
    // Predicated region
    $region29: #{var_encoder_forward.6} parent=5 // pred_check
      _
    $region30: #{var_encoder_forward.6} parent=5 // pred_check_branch
      %141 = sbr.rel (%p138) target = $region32
    $region31: #{var_encoder_forward.6} parent=5 // pred_region
      %s142 = ssub.s32 %s9, 1
      %p143 = scmp.lt.s32.totalorder %s14, 1
      %s144 = scalar_select %p143, %s14, 1
      %s145 = smul.addr %s144, 12
      %s146 = smul.addr %s145, 8
      %s147 = scalar_lea.vmem %s0, %s146
      %p148 = pneg %p35
      %p149 = pneg %p32
      %p150 = pneg %p56
      %p151 = pneg %p53
      %p152 = pneg %p77
      %p153 = pneg %p74
      %p154 = pneg %p103
      %p155 = pneg %p100
      %p156 = scmp.lt.s32.totalorder %s14, 1
      %s157 = scalar_select %p156, %s14, 1
      %s158 = smul.addr %s157, 4
      %s159 = smul.addr %s158, 8
      %s160 = scalar_lea.vmem %s3, %s159
      %p161 = scmp.lt.s32.totalorder %s14, 1
      %s162 = scalar_select %p161, %s14, 1
      %s163 = smul.addr %s162, 12
      %s164 = smul.addr %s163, 8
      %s165 = scalar_lea.vmem %s0, %s164
      %p166 = scmp.lt.s32.totalorder %s14, 1
      %s167 = scalar_select %p166, %s14, 1
      %s168 = smul.addr %s167, 4
      %s169 = smul.addr %s168, 8
      %s170 = scalar_lea.vmem %s3, %s169
      %v172 = vld [vmem:[%s165] sm:$0xff]
      %v173 = vld [vmem:[%s165 + $0x10] sm:$0xff]
      %v174 = vld [vmem:[%s165 + $0x20] sm:$0xff]
      %v175 = vld [vmem:[%s165 + $0x30] sm:$0xff]
      %v176 = vpack.c.bf16 %v173, %v172
      %v177 = vpack.c.bf16 %v175, %v174
      %v178 = vld [vmem:[%s1] sm:$0xf]
      %v179 = vld [vmem:[%s1 + $0x4] sm:$0xf]
      %v180 = vld [vmem:[%s1 + $0x8] sm:$0xf]
      %v181 = vld [vmem:[%s1 + $0xc] sm:$0xf]
      %v182 = vld [vmem:[%s1 + $0x10] sm:$0xf]
      %v183 = vld [vmem:[%s1 + $0x14] sm:$0xf]
      %v184 = vld [vmem:[%s1 + $0x18] sm:$0xf]
      %v185 = vld [vmem:[%s1 + $0x1c] sm:$0xf]
      %v186 = vld [vmem:[%s1 + $0x20] sm:$0xf]
      %v187 = vld [vmem:[%s1 + $0x24] sm:$0xf]
      %v188 = vld [vmem:[%s1 + $0x28] sm:$0xf]
      %v189 = vld [vmem:[%s1 + $0x2c] sm:$0xf]
      %v190 = vld [vmem:[%s1 + $0x30] sm:$0xf]
      %v191 = vld [vmem:[%s1 + $0x34] sm:$0xf]
      %v192 = vld [vmem:[%s1 + $0x38] sm:$0xf]
      %v193 = vld [vmem:[%s1 + $0x3c] sm:$0xf]
      %v194 = vld [vmem:[%s165 + $0x1] sm:$0xff]
      %v195 = vld [vmem:[%s165 + $0x11] sm:$0xff]
      %v196 = vld [vmem:[%s165 + $0x21] sm:$0xff]
      %v197 = vld [vmem:[%s165 + $0x31] sm:$0xff]
      %v198 = vpack.c.bf16 %v195, %v194
      %v199 = vpack.c.bf16 %v197, %v196
      %s200 = scalar_lea.vmem %s1, 64
      %v201 = vld [vmem:[%s200] sm:$0xf]
      %v202 = vld [vmem:[%s200 + $0x4] sm:$0xf]
      %v203 = vld [vmem:[%s200 + $0x8] sm:$0xf]
      %v204 = vld [vmem:[%s200 + $0xc] sm:$0xf]
      %v205 = vld [vmem:[%s200 + $0x10] sm:$0xf]
      %v206 = vld [vmem:[%s200 + $0x14] sm:$0xf]
      %v207 = vld [vmem:[%s200 + $0x18] sm:$0xf]
      %v208 = vld [vmem:[%s200 + $0x1c] sm:$0xf]
      %v209 = vld [vmem:[%s200 + $0x20] sm:$0xf]
      %v210 = vld [vmem:[%s200 + $0x24] sm:$0xf]
      %v211 = vld [vmem:[%s200 + $0x28] sm:$0xf]
      %v212 = vld [vmem:[%s200 + $0x2c] sm:$0xf]
      %v213 = vld [vmem:[%s200 + $0x30] sm:$0xf]
      %v214 = vld [vmem:[%s200 + $0x34] sm:$0xf]
      %v215 = vld [vmem:[%s200 + $0x38] sm:$0xf]
      %v216 = vld [vmem:[%s200 + $0x3c] sm:$0xf]
      %v233 = vunpack.c.l.b16 %v201
      %v234 = vunpack.c.l.b16 %v202
      %v235 = vunpack.c.l.b16 %v203
      %v236 = vunpack.c.l.b16 %v204
      %v237 = vunpack.c.l.b16 %v205
      %v238 = vunpack.c.l.b16 %v206
      %v239 = vunpack.c.l.b16 %v207
      %v240 = vunpack.c.l.b16 %v208
      %v241 = vunpack.c.l.b16 %v209
      %v242 = vunpack.c.l.b16 %v210
      %v243 = vunpack.c.l.b16 %v211
      %v244 = vunpack.c.l.b16 %v212
      %v245 = vunpack.c.l.b16 %v213
      %v246 = vunpack.c.l.b16 %v214
      %v247 = vunpack.c.l.b16 %v215
      %v248 = vunpack.c.l.b16 %v216
      %v249 = vpack.c.b16 %v234, %v233
      %v250 = vpack.c.b16 %v236, %v235
      %v251 = vpack.c.b16 %v238, %v237
      %v252 = vpack.c.b16 %v240, %v239
      %v253 = vpack.c.b16 %v242, %v241
      %v254 = vpack.c.b16 %v244, %v243
      %v255 = vpack.c.b16 %v246, %v245
      %v256 = vpack.c.b16 %v248, %v247
      %265 = vmatprep.subr.bf16.mxu0 0
      %266 = vmatpush1.bf16.msra.mxu0 %v249
      %267 = vmatprep.subr.bf16.mxu0 0
      %268 = vmatpush1.bf16.msra.mxu0 %v250
      %269 = vmatprep.subr.bf16.mxu0 0
      %270 = vmatpush1.bf16.msra.mxu0 %v251
      %271 = vmatprep.subr.bf16.mxu0 0
      %272 = vmatpush1.bf16.msra.mxu0 %v252
      %273 = vmatprep.subr.bf16.mxu0 0
      %274 = vmatpush1.bf16.msra.mxu0 %v253
      %275 = vmatprep.subr.bf16.mxu0 0
      %276 = vmatpush1.bf16.msra.mxu0 %v254
      %277 = vmatprep.subr.bf16.mxu0 0
      %278 = vmatpush1.bf16.msra.mxu0 %v255
      %279 = vmatprep.subr.bf16.mxu0 0
      %280 = vmatpush1.bf16.msra.mxu0 %v256
      %281 = vmatprep.subr.bf16.mxu0 0
      %282 = vmatpush1.bf16.msra.mxu0 0
      %283 = vmatprep.subr.bf16.mxu0 0
      %284 = vmatpush1.bf16.msra.mxu0 0
      %285 = vmatprep.subr.bf16.mxu0 0
      %286 = vmatpush1.bf16.msra.mxu0 0
      %287 = vmatprep.subr.bf16.mxu0 0
      %288 = vmatpush1.bf16.msra.mxu0 0
      %289 = vmatprep.subr.bf16.mxu0 0
      %290 = vmatpush1.bf16.msra.mxu0 0
      %291 = vmatprep.subr.bf16.mxu0 0
      %292 = vmatpush1.bf16.msra.mxu0 0
      %293 = vmatprep.subr.bf16.mxu0 0
      %294 = vmatpush1.bf16.msra.mxu0 0
      %295 = vmatprep.subr.bf16.mxu0 0
      %296 = vmatpush1.bf16.msra.mxu0 0
      %297 = vmatprep.mubr.bf16.mxu0 0
      %298 = vmatmul.mubr.bf16.gmra.mrb[0].mxu0 %v198
      %v299 = vpop.f32.mrb[0].mxu0
      %v300 = vadd.f32 0.0, %v299
      %v301 = vpop.f32.mrb[0].mxu0
      %v302 = vpop.f32.mrb[0].mxu0
      %v303 = vadd.f32 0.0, %v302
      %v304 = vpop.f32.mrb[0].mxu0
      %305 = vmatprep.mubr.bf16.mxu0 0
      %306 = vmatmul.mubr.bf16.gmra.mrb[0].mxu0 %v199
      %v307 = vpop.f32.mrb[0].mxu0
      %v308 = vadd.f32 0.0, %v307
      %v309 = vpop.f32.mrb[0].mxu0
      %v310 = vpop.f32.mrb[0].mxu0
      %v311 = vadd.f32 0.0, %v310
      %v312 = vpop.f32.mrb[0].mxu0
      %313 = vdwg.mxu0
      %v330 = vunpack.c.l.b16 %v178
      %v331 = vunpack.c.l.b16 %v179
      %v332 = vunpack.c.l.b16 %v180
      %v333 = vunpack.c.l.b16 %v181
      %v334 = vunpack.c.l.b16 %v182
      %v335 = vunpack.c.l.b16 %v183
      %v336 = vunpack.c.l.b16 %v184
      %v337 = vunpack.c.l.b16 %v185
      %v338 = vunpack.c.l.b16 %v186
      %v339 = vunpack.c.l.b16 %v187
      %v340 = vunpack.c.l.b16 %v188
      %v341 = vunpack.c.l.b16 %v189
      %v342 = vunpack.c.l.b16 %v190
      %v343 = vunpack.c.l.b16 %v191
      %v344 = vunpack.c.l.b16 %v192
      %v345 = vunpack.c.l.b16 %v193
      %v346 = vpack.c.b16 %v331, %v330
      %v347 = vpack.c.b16 %v333, %v332
      %v348 = vpack.c.b16 %v335, %v334
      %v349 = vpack.c.b16 %v337, %v336
      %v350 = vpack.c.b16 %v339, %v338
      %v351 = vpack.c.b16 %v341, %v340
      %v352 = vpack.c.b16 %v343, %v342
      %v353 = vpack.c.b16 %v345, %v344
      %362 = vmatprep.subr.bf16.mxu0 0
      %363 = vmatpush1.bf16.msra.mxu0 %v346
      %364 = vmatprep.subr.bf16.mxu0 0
      %365 = vmatpush1.bf16.msra.mxu0 %v347
      %366 = vmatprep.subr.bf16.mxu0 0
      %367 = vmatpush1.bf16.msra.mxu0 %v348
      %368 = vmatprep.subr.bf16.mxu0 0
      %369 = vmatpush1.bf16.msra.mxu0 %v349
      %370 = vmatprep.subr.bf16.mxu0 0
      %371 = vmatpush1.bf16.msra.mxu0 %v350
      %372 = vmatprep.subr.bf16.mxu0 0
      %373 = vmatpush1.bf16.msra.mxu0 %v351
      %374 = vmatprep.subr.bf16.mxu0 0
      %375 = vmatpush1.bf16.msra.mxu0 %v352
      %376 = vmatprep.subr.bf16.mxu0 0
      %377 = vmatpush1.bf16.msra.mxu0 %v353
      %378 = vmatprep.subr.bf16.mxu0 0
      %379 = vmatpush1.bf16.msra.mxu0 0
      %380 = vmatprep.subr.bf16.mxu0 0
      %381 = vmatpush1.bf16.msra.mxu0 0
      %382 = vmatprep.subr.bf16.mxu0 0
      %383 = vmatpush1.bf16.msra.mxu0 0
      %384 = vmatprep.subr.bf16.mxu0 0
      %385 = vmatpush1.bf16.msra.mxu0 0
      %386 = vmatprep.subr.bf16.mxu0 0
      %387 = vmatpush1.bf16.msra.mxu0 0
      %388 = vmatprep.subr.bf16.mxu0 0
      %389 = vmatpush1.bf16.msra.mxu0 0
      %390 = vmatprep.subr.bf16.mxu0 0
      %391 = vmatpush1.bf16.msra.mxu0 0
      %392 = vmatprep.subr.bf16.mxu0 0
      %393 = vmatpush1.bf16.msra.mxu0 0
      %394 = vmatprep.mubr.bf16.mxu0 0
      %395 = vmatmul.mubr.bf16.gmra.mrb[0].mxu0 %v176
      %v396 = vpop.f32.mrb[0].mxu0
      %v397 = vadd.f32 %v300, %v396
      %v398 = vpop.f32.mrb[0].mxu0
      %v399 = vpop.f32.mrb[0].mxu0
      %v400 = vadd.f32 %v303, %v399
      %v401 = vpop.f32.mrb[0].mxu0
      %402 = vmatprep.mubr.bf16.mxu0 0
      %403 = vmatmul.mubr.bf16.gmra.mrb[0].mxu0 %v177
      %v404 = vpop.f32.mrb[0].mxu0
      %v405 = vadd.f32 %v308, %v404
      %v406 = vpop.f32.mrb[0].mxu0
      %v407 = vpop.f32.mrb[0].mxu0
      %v408 = vadd.f32 %v311, %v407
      %v409 = vpop.f32.mrb[0].mxu0
      %410 = vdwg.mxu0
      %v411 = vld [vmem:[%s165 + $0x2] sm:$0xff]
      %v412 = vld [vmem:[%s165 + $0x12] sm:$0xff]
      %v413 = vld [vmem:[%s165 + $0x22] sm:$0xff]
      %v414 = vld [vmem:[%s165 + $0x32] sm:$0xff]
      %v415 = vpack.c.bf16 %v412, %v411
      %v416 = vpack.c.bf16 %v414, %v413
      %s417 = scalar_lea.vmem %s1, 128
      %v418 = vld [vmem:[%s417] sm:$0xf]
      %v419 = vld [vmem:[%s417 + $0x4] sm:$0xf]
      %v420 = vld [vmem:[%s417 + $0x8] sm:$0xf]
      %v421 = vld [vmem:[%s417 + $0xc] sm:$0xf]
      %v422 = vld [vmem:[%s417 + $0x10] sm:$0xf]
      %v423 = vld [vmem:[%s417 + $0x14] sm:$0xf]
      %v424 = vld [vmem:[%s417 + $0x18] sm:$0xf]
      %v425 = vld [vmem:[%s417 + $0x1c] sm:$0xf]
      %v426 = vld [vmem:[%s417 + $0x20] sm:$0xf]
      %v427 = vld [vmem:[%s417 + $0x24] sm:$0xf]
      %v428 = vld [vmem:[%s417 + $0x28] sm:$0xf]
      %v429 = vld [vmem:[%s417 + $0x2c] sm:$0xf]
      %v430 = vld [vmem:[%s417 + $0x30] sm:$0xf]
      %v431 = vld [vmem:[%s417 + $0x34] sm:$0xf]
      %v432 = vld [vmem:[%s417 + $0x38] sm:$0xf]
      %v433 = vld [vmem:[%s417 + $0x3c] sm:$0xf]
      %v450 = vunpack.c.l.b16 %v418
      %v451 = vunpack.c.l.b16 %v419
      %v452 = vunpack.c.l.b16 %v420
      %v453 = vunpack.c.l.b16 %v421
      %v454 = vunpack.c.l.b16 %v422
      %v455 = vunpack.c.l.b16 %v423
      %v456 = vunpack.c.l.b16 %v424
      %v457 = vunpack.c.l.b16 %v425
      %v458 = vunpack.c.l.b16 %v426
      %v459 = vunpack.c.l.b16 %v427
      %v460 = vunpack.c.l.b16 %v428
      %v461 = vunpack.c.l.b16 %v429
      %v462 = vunpack.c.l.b16 %v430
      %v463 = vunpack.c.l.b16 %v431
      %v464 = vunpack.c.l.b16 %v432
      %v465 = vunpack.c.l.b16 %v433
      %v466 = vpack.c.b16 %v451, %v450
      %v467 = vpack.c.b16 %v453, %v452
      %v468 = vpack.c.b16 %v455, %v454
      %v469 = vpack.c.b16 %v457, %v456
      %v470 = vpack.c.b16 %v459, %v458
      %v471 = vpack.c.b16 %v461, %v460
      %v472 = vpack.c.b16 %v463, %v462
      %v473 = vpack.c.b16 %v465, %v464
      %482 = vmatprep.subr.bf16.mxu0 0
      %483 = vmatpush1.bf16.msra.mxu0 %v466
      %484 = vmatprep.subr.bf16.mxu0 0
      %485 = vmatpush1.bf16.msra.mxu0 %v467
      %486 = vmatprep.subr.bf16.mxu0 0
      %487 = vmatpush1.bf16.msra.mxu0 %v468
      %488 = vmatprep.subr.bf16.mxu0 0
      %489 = vmatpush1.bf16.msra.mxu0 %v469
      %490 = vmatprep.subr.bf16.mxu0 0
      %491 = vmatpush1.bf16.msra.mxu0 %v470
      %492 = vmatprep.subr.bf16.mxu0 0
      %493 = vmatpush1.bf16.msra.mxu0 %v471
      %494 = vmatprep.subr.bf16.mxu0 0
      %495 = vmatpush1.bf16.msra.mxu0 %v472
      %496 = vmatprep.subr.bf16.mxu0 0
      %497 = vmatpush1.bf16.msra.mxu0 %v473
      %498 = vmatprep.subr.bf16.mxu0 0
      %499 = vmatpush1.bf16.msra.mxu0 0
      %500 = vmatprep.subr.bf16.mxu0 0
      %501 = vmatpush1.bf16.msra.mxu0 0
      %502 = vmatprep.subr.bf16.mxu0 0
      %503 = vmatpush1.bf16.msra.mxu0 0
      %504 = vmatprep.subr.bf16.mxu0 0
      %505 = vmatpush1.bf16.msra.mxu0 0
      %506 = vmatprep.subr.bf16.mxu0 0
      %507 = vmatpush1.bf16.msra.mxu0 0
      %508 = vmatprep.subr.bf16.mxu0 0
      %509 = vmatpush1.bf16.msra.mxu0 0
      %510 = vmatprep.subr.bf16.mxu0 0
      %511 = vmatpush1.bf16.msra.mxu0 0
      %512 = vmatprep.subr.bf16.mxu0 0
      %513 = vmatpush1.bf16.msra.mxu0 0
      %514 = vmatprep.mubr.bf16.mxu0 0
      %515 = vmatmul.mubr.bf16.gmra.mrb[0].mxu0 %v415
      %v516 = vpop.f32.mrb[0].mxu0
      %v517 = vadd.f32 0.0, %v516
      %v518 = vpop.f32.mrb[0].mxu0
      %v519 = vpop.f32.mrb[0].mxu0
      %v520 = vadd.f32 0.0, %v519
      %v521 = vpop.f32.mrb[0].mxu0
      %522 = vmatprep.mubr.bf16.mxu0 0
      %523 = vmatmul.mubr.bf16.gmra.mrb[0].mxu0 %v416
      %v524 = vpop.f32.mrb[0].mxu0
      %v525 = vadd.f32 0.0, %v524
      %v526 = vpop.f32.mrb[0].mxu0
      %v527 = vpop.f32.mrb[0].mxu0
      %v528 = vadd.f32 0.0, %v527
      %v529 = vpop.f32.mrb[0].mxu0
      %530 = vdwg.mxu0
      %v531 = vadd.f32 %v397, %v517
      %v532 = vadd.f32 %v400, %v520
      %v533 = vadd.f32 %v405, %v525
      %v534 = vadd.f32 %v408, %v528
      %s535 = scalar_lea.vmem %s165, 16
      %v536 = vld [vmem:[%s535] sm:$0xff]
      %v537 = vld [vmem:[%s535 + $0x10] sm:$0xff]
      %v538 = vld [vmem:[%s535 + $0x20] sm:$0xff]
      %v539 = vld [vmem:[%s535 + $0x30] sm:$0xff]
      %v540 = vpack.c.bf16 %v537, %v536
      %v541 = vpack.c.bf16 %v539, %v538
      %s542 = scalar_lea.vmem %s1, 192
      %v543 = vld [vmem:[%s542] sm:$0xf]
      %v544 = vld [vmem:[%s542 + $0x4] sm:$0xf]
      %v545 = vld [vmem:[%s542 + $0x8] sm:$0xf]
      %v546 = vld [vmem:[%s542 + $0xc] sm:$0xf]
      %v547 = vld [vmem:[%s542 + $0x10] sm:$0xf]
      %v548 = vld [vmem:[%s542 + $0x14] sm:$0xf]
      %v549 = vld [vmem:[%s542 + $0x18] sm:$0xf]
      %v550 = vld [vmem:[%s542 + $0x1c] sm:$0xf]
      %v551 = vld [vmem:[%s542 + $0x20] sm:$0xf]
      %v552 = vld [vmem:[%s542 + $0x24] sm:$0xf]
      %v553 = vld [vmem:[%s542 + $0x28] sm:$0xf]
      %v554 = vld [vmem:[%s542 + $0x2c] sm:$0xf]
      %v555 = vld [vmem:[%s542 + $0x30] sm:$0xf]
      %v556 = vld [vmem:[%s542 + $0x34] sm:$0xf]
      %v557 = vld [vmem:[%s542 + $0x38] sm:$0xf]
      %v558 = vld [vmem:[%s542 + $0x3c] sm:$0xf]
      %v575 = vunpack.c.l.b16 %v543
      %v576 = vunpack.c.l.b16 %v544
      %v577 = vunpack.c.l.b16 %v545
      %v578 = vunpack.c.l.b16 %v546
      %v579 = vunpack.c.l.b16 %v547
      %v580 = vunpack.c.l.b16 %v548
      %v581 = vunpack.c.l.b16 %v549
      %v582 = vunpack.c.l.b16 %v550
      %v583 = vunpack.c.l.b16 %v551
      %v584 = vunpack.c.l.b16 %v552
      %v585 = vunpack.c.l.b16 %v553
      %v586 = vunpack.c.l.b16 %v554
      %v587 = vunpack.c.l.b16 %v555
      %v588 = vunpack.c.l.b16 %v556
      %v589 = vunpack.c.l.b16 %v557
      %v590 = vunpack.c.l.b16 %v558
      %v591 = vpack.c.b16 %v576, %v575
      %v592 = vpack.c.b16 %v578, %v577
      %v593 = vpack.c.b16 %v580, %v579
      %v594 = vpack.c.b16 %v582, %v581
      %v595 = vpack.c.b16 %v584, %v583
      %v596 = vpack.c.b16 %v586, %v585
      %v597 = vpack.c.b16 %v588, %v587
      %v598 = vpack.c.b16 %v590, %v589
      %607 = vmatprep.subr.bf16.mxu0 0
      %608 = vmatpush1.bf16.msra.mxu0 %v591
      %609 = vmatprep.subr.bf16.mxu0 0
      %610 = vmatpush1.bf16.msra.mxu0 %v592
      %611 = vmatprep.subr.bf16.mxu0 0
      %612 = vmatpush1.bf16.msra.mxu0 %v593
      %613 = vmatprep.subr.bf16.mxu0 0
      %614 = vmatpush1.bf16.msra.mxu0 %v594
      %615 = vmatprep.subr.bf16.mxu0 0
      %616 = vmatpush1.bf16.msra.mxu0 %v595
      %617 = vmatprep.subr.bf16.mxu0 0
      %618 = vmatpush1.bf16.msra.mxu0 %v596
      %619 = vmatprep.subr.bf16.mxu0 0
      %620 = vmatpush1.bf16.msra.mxu0 %v597
      %621 = vmatprep.subr.bf16.mxu0 0
      %622 = vmatpush1.bf16.msra.mxu0 %v598
      %623 = vmatprep.subr.bf16.mxu0 0
      %624 = vmatpush1.bf16.msra.mxu0 0
      %625 = vmatprep.subr.bf16.mxu0 0
      %626 = vmatpush1.bf16.msra.mxu0 0
      %627 = vmatprep.subr.bf16.mxu0 0
      %628 = vmatpush1.bf16.msra.mxu0 0
      %629 = vmatprep.subr.bf16.mxu0 0
      %630 = vmatpush1.bf16.msra.mxu0 0
      %631 = vmatprep.subr.bf16.mxu0 0
      %632 = vmatpush1.bf16.msra.mxu0 0
      %633 = vmatprep.subr.bf16.mxu0 0
      %634 = vmatpush1.bf16.msra.mxu0 0
      %635 = vmatprep.subr.bf16.mxu0 0
      %636 = vmatpush1.bf16.msra.mxu0 0
      %637 = vmatprep.subr.bf16.mxu0 0
      %638 = vmatpush1.bf16.msra.mxu0 0
      %639 = vmatprep.mubr.bf16.mxu0 0
      %640 = vmatmul.mubr.bf16.gmra.mrb[0].mxu0 %v540
      %v641 = vpop.f32.mrb[0].mxu0
      %v642 = vadd.f32 0.0, %v641
      %v643 = vpop.f32.mrb[0].mxu0
      %v644 = vpop.f32.mrb[0].mxu0
      %v645 = vadd.f32 0.0, %v644
      %v646 = vpop.f32.mrb[0].mxu0
      %647 = vmatprep.mubr.bf16.mxu0 0
      %648 = vmatmul.mubr.bf16.gmra.mrb[0].mxu0 %v541
      %v649 = vpop.f32.mrb[0].mxu0
      %v650 = vadd.f32 0.0, %v649
      %v651 = vpop.f32.mrb[0].mxu0
      %v652 = vpop.f32.mrb[0].mxu0
      %v653 = vadd.f32 0.0, %v652
      %v654 = vpop.f32.mrb[0].mxu0
      %655 = vdwg.mxu0
      %v656 = vadd.f32 %v531, %v642
      %v657 = vadd.f32 %v532, %v645
      %v658 = vadd.f32 %v533, %v650
      %v659 = vadd.f32 %v534, %v653
      %v660 = vld [vmem:[%s535 + $0x1] sm:$0xff]
      %v661 = vld [vmem:[%s535 + $0x11] sm:$0xff]
      %v662 = vld [vmem:[%s535 + $0x21] sm:$0xff]
      %v663 = vld [vmem:[%s535 + $0x31] sm:$0xff]
      %v664 = vpack.c.bf16 %v661, %v660
      %v665 = vpack.c.bf16 %v663, %v662
      %s666 = scalar_lea.vmem %s1, 256
      %v667 = vld [vmem:[%s666] sm:$0xf]
      %v668 = vld [vmem:[%s666 + $0x4] sm:$0xf]
      %v669 = vld [vmem:[%s666 + $0x8] sm:$0xf]
      %v670 = vld [vmem:[%s666 + $0xc] sm:$0xf]
      %v671 = vld [vmem:[%s666 + $0x10] sm:$0xf]
      %v672 = vld [vmem:[%s666 + $0x14] sm:$0xf]
      %v673 = vld [vmem:[%s666 + $0x18] sm:$0xf]
      %v674 = vld [vmem:[%s666 + $0x1c] sm:$0xf]
      %v675 = vld [vmem:[%s666 + $0x20] sm:$0xf]
      %v676 = vld [vmem:[%s666 + $0x24] sm:$0xf]
      %v677 = vld [vmem:[%s666 + $0x28] sm:$0xf]
      %v678 = vld [vmem:[%s666 + $0x2c] sm:$0xf]
      %v679 = vld [vmem:[%s666 + $0x30] sm:$0xf]
      %v680 = vld [vmem:[%s666 + $0x34] sm:$0xf]
      %v681 = vld [vmem:[%s666 + $0x38] sm:$0xf]
      %v682 = vld [vmem:[%s666 + $0x3c] sm:$0xf]
      %v699 = vunpack.c.l.b16 %v667
      %v700 = vunpack.c.l.b16 %v668
      %v701 = vunpack.c.l.b16 %v669
      %v702 = vunpack.c.l.b16 %v670
      %v703 = vunpack.c.l.b16 %v671
      %v704 = vunpack.c.l.b16 %v672
      %v705 = vunpack.c.l.b16 %v673
      %v706 = vunpack.c.l.b16 %v674
      %v707 = vunpack.c.l.b16 %v675
      %v708 = vunpack.c.l.b16 %v676
      %v709 = vunpack.c.l.b16 %v677
      %v710 = vunpack.c.l.b16 %v678
      %v711 = vunpack.c.l.b16 %v679
      %v712 = vunpack.c.l.b16 %v680
      %v713 = vunpack.c.l.b16 %v681
      %v714 = vunpack.c.l.b16 %v682
      %v715 = vpack.c.b16 %v700, %v699
      %v716 = vpack.c.b16 %v702, %v701
      %v717 = vpack.c.b16 %v704, %v703
      %v718 = vpack.c.b16 %v706, %v705
      %v719 = vpack.c.b16 %v708, %v707
      %v720 = vpack.c.b16 %v710, %v709
      %v721 = vpack.c.b16 %v712, %v711
      %v722 = vpack.c.b16 %v714, %v713
      %731 = vmatprep.subr.bf16.mxu0 0
      %732 = vmatpush1.bf16.msra.mxu0 %v715
      %733 = vmatprep.subr.bf16.mxu0 0
      %734 = vmatpush1.bf16.msra.mxu0 %v716
      %735 = vmatprep.subr.bf16.mxu0 0
      %736 = vmatpush1.bf16.msra.mxu0 %v717
      %737 = vmatprep.subr.bf16.mxu0 0
      %738 = vmatpush1.bf16.msra.mxu0 %v718
      %739 = vmatprep.subr.bf16.mxu0 0
      %740 = vmatpush1.bf16.msra.mxu0 %v719
      %741 = vmatprep.subr.bf16.mxu0 0
      %742 = vmatpush1.bf16.msra.mxu0 %v720
      %743 = vmatprep.subr.bf16.mxu0 0
      %744 = vmatpush1.bf16.msra.mxu0 %v721
      %745 = vmatprep.subr.bf16.mxu0 0
      %746 = vmatpush1.bf16.msra.mxu0 %v722
      %747 = vmatprep.subr.bf16.mxu0 0
      %748 = vmatpush1.bf16.msra.mxu0 0
      %749 = vmatprep.subr.bf16.mxu0 0
      %750 = vmatpush1.bf16.msra.mxu0 0
      %751 = vmatprep.subr.bf16.mxu0 0
      %752 = vmatpush1.bf16.msra.mxu0 0
      %753 = vmatprep.subr.bf16.mxu0 0
      %754 = vmatpush1.bf16.msra.mxu0 0
      %755 = vmatprep.subr.bf16.mxu0 0
      %756 = vmatpush1.bf16.msra.mxu0 0
      %757 = vmatprep.subr.bf16.mxu0 0
      %758 = vmatpush1.bf16.msra.mxu0 0
      %759 = vmatprep.subr.bf16.mxu0 0
      %760 = vmatpush1.bf16.msra.mxu0 0
      %761 = vmatprep.subr.bf16.mxu0 0
      %762 = vmatpush1.bf16.msra.mxu0 0
      %763 = vmatprep.mubr.bf16.mxu0 0
      %764 = vmatmul.mubr.bf16.gmra.mrb[0].mxu0 %v664
      %v765 = vpop.f32.mrb[0].mxu0
      %v766 = vadd.f32 0.0, %v765
      %v767 = vpop.f32.mrb[0].mxu0
      %v768 = vpop.f32.mrb[0].mxu0
      %v769 = vadd.f32 0.0, %v768
      %v770 = vpop.f32.mrb[0].mxu0
      %771 = vmatprep.mubr.bf16.mxu0 0
      %772 = vmatmul.mubr.bf16.gmra.mrb[0].mxu0 %v665
      %v773 = vpop.f32.mrb[0].mxu0
      %v774 = vadd.f32 0.0, %v773
      %v775 = vpop.f32.mrb[0].mxu0
      %v776 = vpop.f32.mrb[0].mxu0
      %v777 = vadd.f32 0.0, %v776
      %v778 = vpop.f32.mrb[0].mxu0
      %779 = vdwg.mxu0
      %v780 = vadd.f32 %v656, %v766
      %v781 = vadd.f32 %v657, %v769
      %v782 = vadd.f32 %v658, %v774
      %v783 = vadd.f32 %v659, %v777
      %v784 = vld [vmem:[%s535 + $0x2] sm:$0xff]
      %v785 = vld [vmem:[%s535 + $0x12] sm:$0xff]
      %v786 = vld [vmem:[%s535 + $0x22] sm:$0xff]
      %v787 = vld [vmem:[%s535 + $0x32] sm:$0xff]
      %v788 = vpack.c.bf16 %v785, %v784
      %v789 = vpack.c.bf16 %v787, %v786
      %s790 = scalar_lea.vmem %s1, 320
      %v791 = vld [vmem:[%s790] sm:$0xf]
      %v792 = vld [vmem:[%s790 + $0x4] sm:$0xf]
      %v793 = vld [vmem:[%s790 + $0x8] sm:$0xf]
      %v794 = vld [vmem:[%s790 + $0xc] sm:$0xf]
      %v795 = vld [vmem:[%s790 + $0x10] sm:$0xf]
      %v796 = vld [vmem:[%s790 + $0x14] sm:$0xf]
      %v797 = vld [vmem:[%s790 + $0x18] sm:$0xf]
      %v798 = vld [vmem:[%s790 + $0x1c] sm:$0xf]
      %v799 = vld [vmem:[%s790 + $0x20] sm:$0xf]
      %v800 = vld [vmem:[%s790 + $0x24] sm:$0xf]
      %v801 = vld [vmem:[%s790 + $0x28] sm:$0xf]
      %v802 = vld [vmem:[%s790 + $0x2c] sm:$0xf]
      %v803 = vld [vmem:[%s790 + $0x30] sm:$0xf]
      %v804 = vld [vmem:[%s790 + $0x34] sm:$0xf]
      %v805 = vld [vmem:[%s790 + $0x38] sm:$0xf]
      %v806 = vld [vmem:[%s790 + $0x3c] sm:$0xf]
      %v823 = vunpack.c.l.b16 %v791
      %v824 = vunpack.c.l.b16 %v792
      %v825 = vunpack.c.l.b16 %v793
      %v826 = vunpack.c.l.b16 %v794
      %v827 = vunpack.c.l.b16 %v795
      %v828 = vunpack.c.l.b16 %v796
      %v829 = vunpack.c.l.b16 %v797
      %v830 = vunpack.c.l.b16 %v798
      %v831 = vunpack.c.l.b16 %v799
      %v832 = vunpack.c.l.b16 %v800
      %v833 = vunpack.c.l.b16 %v801
      %v834 = vunpack.c.l.b16 %v802
      %v835 = vunpack.c.l.b16 %v803
      %v836 = vunpack.c.l.b16 %v804
      %v837 = vunpack.c.l.b16 %v805
      %v838 = vunpack.c.l.b16 %v806
      %v839 = vpack.c.b16 %v824, %v823
      %v840 = vpack.c.b16 %v826, %v825
      %v841 = vpack.c.b16 %v828, %v827
      %v842 = vpack.c.b16 %v830, %v829
      %v843 = vpack.c.b16 %v832, %v831
      %v844 = vpack.c.b16 %v834, %v833
      %v845 = vpack.c.b16 %v836, %v835
      %v846 = vpack.c.b16 %v838, %v837
      %855 = vmatprep.subr.bf16.mxu0 0
      %856 = vmatpush1.bf16.msra.mxu0 %v839
      %857 = vmatprep.subr.bf16.mxu0 0
      %858 = vmatpush1.bf16.msra.mxu0 %v840
      %859 = vmatprep.subr.bf16.mxu0 0
      %860 = vmatpush1.bf16.msra.mxu0 %v841
      %861 = vmatprep.subr.bf16.mxu0 0
      %862 = vmatpush1.bf16.msra.mxu0 %v842
      %863 = vmatprep.subr.bf16.mxu0 0
      %864 = vmatpush1.bf16.msra.mxu0 %v843
      %865 = vmatprep.subr.bf16.mxu0 0
      %866 = vmatpush1.bf16.msra.mxu0 %v844
      %867 = vmatprep.subr.bf16.mxu0 0
      %868 = vmatpush1.bf16.msra.mxu0 %v845
      %869 = vmatprep.subr.bf16.mxu0 0
      %870 = vmatpush1.bf16.msra.mxu0 %v846
      %871 = vmatprep.subr.bf16.mxu0 0
      %872 = vmatpush1.bf16.msra.mxu0 0
      %873 = vmatprep.subr.bf16.mxu0 0
      %874 = vmatpush1.bf16.msra.mxu0 0
      %875 = vmatprep.subr.bf16.mxu0 0
      %876 = vmatpush1.bf16.msra.mxu0 0
      %877 = vmatprep.subr.bf16.mxu0 0
      %878 = vmatpush1.bf16.msra.mxu0 0
      %879 = vmatprep.subr.bf16.mxu0 0
      %880 = vmatpush1.bf16.msra.mxu0 0
      %881 = vmatprep.subr.bf16.mxu0 0
      %882 = vmatpush1.bf16.msra.mxu0 0
      %883 = vmatprep.subr.bf16.mxu0 0
      %884 = vmatpush1.bf16.msra.mxu0 0
      %885 = vmatprep.subr.bf16.mxu0 0
      %886 = vmatpush1.bf16.msra.mxu0 0
      %887 = vmatprep.mubr.bf16.mxu0 0
      %888 = vmatmul.mubr.bf16.gmra.mrb[0].mxu0 %v788
      %v889 = vpop.f32.mrb[0].mxu0
      %v890 = vadd.f32 0.0, %v889
      %v891 = vpop.f32.mrb[0].mxu0
      %v892 = vpop.f32.mrb[0].mxu0
      %v893 = vadd.f32 0.0, %v892
      %v894 = vpop.f32.mrb[0].mxu0
      %895 = vmatprep.mubr.bf16.mxu0 0
      %896 = vmatmul.mubr.bf16.gmra.mrb[0].mxu0 %v789
      %v897 = vpop.f32.mrb[0].mxu0
      %v898 = vadd.f32 0.0, %v897
      %v899 = vpop.f32.mrb[0].mxu0
      %v900 = vpop.f32.mrb[0].mxu0
      %v901 = vadd.f32 0.0, %v900
      %v902 = vpop.f32.mrb[0].mxu0
      %903 = vdwg.mxu0
      %v904 = vadd.f32 %v780, %v890
      %v905 = vadd.f32 %v781, %v893
      %v906 = vadd.f32 %v782, %v898
      %v907 = vadd.f32 %v783, %v901
      %s908 = scalar_lea.vmem %s165, 32
      %v909 = vld [vmem:[%s908] sm:$0xff]
      %v910 = vld [vmem:[%s908 + $0x10] sm:$0xff]
      %v911 = vld [vmem:[%s908 + $0x20] sm:$0xff]
      %v912 = vld [vmem:[%s908 + $0x30] sm:$0xff]
      %v913 = vpack.c.bf16 %v910, %v909
      %v914 = vpack.c.bf16 %v912, %v911
      %s915 = scalar_lea.vmem %s1, 384
      %v916 = vld [vmem:[%s915] sm:$0xf]
      %v917 = vld [vmem:[%s915 + $0x4] sm:$0xf]
      %v918 = vld [vmem:[%s915 + $0x8] sm:$0xf]
      %v919 = vld [vmem:[%s915 + $0xc] sm:$0xf]
      %v920 = vld [vmem:[%s915 + $0x10] sm:$0xf]
      %v921 = vld [vmem:[%s915 + $0x14] sm:$0xf]
      %v922 = vld [vmem:[%s915 + $0x18] sm:$0xf]
      %v923 = vld [vmem:[%s915 + $0x1c] sm:$0xf]
      %v924 = vld [vmem:[%s915 + $0x20] sm:$0xf]
      %v925 = vld [vmem:[%s915 + $0x24] sm:$0xf]
      %v926 = vld [vmem:[%s915 + $0x28] sm:$0xf]
      %v927 = vld [vmem:[%s915 + $0x2c] sm:$0xf]
      %v928 = vld [vmem:[%s915 + $0x30] sm:$0xf]
      %v929 = vld [vmem:[%s915 + $0x34] sm:$0xf]
      %v930 = vld [vmem:[%s915 + $0x38] sm:$0xf]
      %v931 = vld [vmem:[%s915 + $0x3c] sm:$0xf]
      %v948 = vunpack.c.l.b16 %v916
      %v949 = vunpack.c.l.b16 %v917
      %v950 = vunpack.c.l.b16 %v918
      %v951 = vunpack.c.l.b16 %v919
      %v952 = vunpack.c.l.b16 %v920
      %v953 = vunpack.c.l.b16 %v921
      %v954 = vunpack.c.l.b16 %v922
      %v955 = vunpack.c.l.b16 %v923
      %v956 = vunpack.c.l.b16 %v924
      %v957 = vunpack.c.l.b16 %v925
      %v958 = vunpack.c.l.b16 %v926
      %v959 = vunpack.c.l.b16 %v927
      %v960 = vunpack.c.l.b16 %v928
      %v961 = vunpack.c.l.b16 %v929
      %v962 = vunpack.c.l.b16 %v930
      %v963 = vunpack.c.l.b16 %v931
      %v964 = vpack.c.b16 %v949, %v948
      %v965 = vpack.c.b16 %v951, %v950
      %v966 = vpack.c.b16 %v953, %v952
      %v967 = vpack.c.b16 %v955, %v954
      %v968 = vpack.c.b16 %v957, %v956
      %v969 = vpack.c.b16 %v959, %v958
      %v970 = vpack.c.b16 %v961, %v960
      %v971 = vpack.c.b16 %v963, %v962
      %980 = vmatprep.subr.bf16.mxu0 0
      %981 = vmatpush1.bf16.msra.mxu0 %v964
      %982 = vmatprep.subr.bf16.mxu0 0
      %983 = vmatpush1.bf16.msra.mxu0 %v965
      %984 = vmatprep.subr.bf16.mxu0 0
      %985 = vmatpush1.bf16.msra.mxu0 %v966
      %986 = vmatprep.subr.bf16.mxu0 0
      %987 = vmatpush1.bf16.msra.mxu0 %v967
      %988 = vmatprep.subr.bf16.mxu0 0
      %989 = vmatpush1.bf16.msra.mxu0 %v968
      %990 = vmatprep.subr.bf16.mxu0 0
      %991 = vmatpush1.bf16.msra.mxu0 %v969
      %992 = vmatprep.subr.bf16.mxu0 0
      %993 = vmatpush1.bf16.msra.mxu0 %v970
      %994 = vmatprep.subr.bf16.mxu0 0
      %995 = vmatpush1.bf16.msra.mxu0 %v971
      %996 = vmatprep.subr.bf16.mxu0 0
      %997 = vmatpush1.bf16.msra.mxu0 0
      %998 = vmatprep.subr.bf16.mxu0 0
      %999 = vmatpush1.bf16.msra.mxu0 0
      %1000 = vmatprep.subr.bf16.mxu0 0
      %1001 = vmatpush1.bf16.msra.mxu0 0
      %1002 = vmatprep.subr.bf16.mxu0 0
      %1003 = vmatpush1.bf16.msra.mxu0 0
      %1004 = vmatprep.subr.bf16.mxu0 0
      %1005 = vmatpush1.bf16.msra.mxu0 0
      %1006 = vmatprep.subr.bf16.mxu0 0
      %1007 = vmatpush1.bf16.msra.mxu0 0
      %1008 = vmatprep.subr.bf16.mxu0 0
      %1009 = vmatpush1.bf16.msra.mxu0 0
      %1010 = vmatprep.subr.bf16.mxu0 0
      %1011 = vmatpush1.bf16.msra.mxu0 0
      %1012 = vmatprep.mubr.bf16.mxu0 0
      %1013 = vmatmul.mubr.bf16.gmra.mrb[0].mxu0 %v913
      %v1014 = vpop.f32.mrb[0].mxu0
      %v1015 = vadd.f32 0.0, %v1014
      %v1016 = vpop.f32.mrb[0].mxu0
      %v1017 = vpop.f32.mrb[0].mxu0
      %v1018 = vadd.f32 0.0, %v1017
      %v1019 = vpop.f32.mrb[0].mxu0
      %1020 = vmatprep.mubr.bf16.mxu0 0
      %1021 = vmatmul.mubr.bf16.gmra.mrb[0].mxu0 %v914
      %v1022 = vpop.f32.mrb[0].mxu0
      %v1023 = vadd.f32 0.0, %v1022
      %v1024 = vpop.f32.mrb[0].mxu0
      %v1025 = vpop.f32.mrb[0].mxu0
      %v1026 = vadd.f32 0.0, %v1025
      %v1027 = vpop.f32.mrb[0].mxu0
      %1028 = vdwg.mxu0
      %v1029 = vadd.f32 %v904, %v1015
      %v1030 = vadd.f32 %v905, %v1018
      %v1031 = vadd.f32 %v906, %v1023
      %v1032 = vadd.f32 %v907, %v1026
      %v1033 = vld [vmem:[%s908 + $0x1] sm:$0xff]
      %v1034 = vld [vmem:[%s908 + $0x11] sm:$0xff]
      %v1035 = vld [vmem:[%s908 + $0x21] sm:$0xff]
      %v1036 = vld [vmem:[%s908 + $0x31] sm:$0xff]
      %v1037 = vpack.c.bf16 %v1034, %v1033
      %v1038 = vpack.c.bf16 %v1036, %v1035
      %s1039 = scalar_lea.vmem %s1, 448
      %v1040 = vld [vmem:[%s1039] sm:$0xf]
      %v1041 = vld [vmem:[%s1039 + $0x4] sm:$0xf]
      %v1042 = vld [vmem:[%s1039 + $0x8] sm:$0xf]
      %v1043 = vld [vmem:[%s1039 + $0xc] sm:$0xf]
      %v1044 = vld [vmem:[%s1039 + $0x10] sm:$0xf]
      %v1045 = vld [vmem:[%s1039 + $0x14] sm:$0xf]
      %v1046 = vld [vmem:[%s1039 + $0x18] sm:$0xf]
      %v1047 = vld [vmem:[%s1039 + $0x1c] sm:$0xf]
      %v1048 = vld [vmem:[%s1039 + $0x20] sm:$0xf]
      %v1049 = vld [vmem:[%s1039 + $0x24] sm:$0xf]
      %v1050 = vld [vmem:[%s1039 + $0x28] sm:$0xf]
      %v1051 = vld [vmem:[%s1039 + $0x2c] sm:$0xf]
      %v1052 = vld [vmem:[%s1039 + $0x30] sm:$0xf]
      %v1053 = vld [vmem:[%s1039 + $0x34] sm:$0xf]
      %v1054 = vld [vmem:[%s1039 + $0x38] sm:$0xf]
      %v1055 = vld [vmem:[%s1039 + $0x3c] sm:$0xf]
      %v1072 = vunpack.c.l.b16 %v1040
      %v1073 = vunpack.c.l.b16 %v1041
      %v1074 = vunpack.c.l.b16 %v1042
      %v1075 = vunpack.c.l.b16 %v1043
      %v1076 = vunpack.c.l.b16 %v1044
      %v1077 = vunpack.c.l.b16 %v1045
      %v1078 = vunpack.c.l.b16 %v1046
      %v1079 = vunpack.c.l.b16 %v1047
      %v1080 = vunpack.c.l.b16 %v1048
      %v1081 = vunpack.c.l.b16 %v1049
      %v1082 = vunpack.c.l.b16 %v1050
      %v1083 = vunpack.c.l.b16 %v1051
      %v1084 = vunpack.c.l.b16 %v1052
      %v1085 = vunpack.c.l.b16 %v1053
      %v1086 = vunpack.c.l.b16 %v1054
      %v1087 = vunpack.c.l.b16 %v1055
      %v1088 = vpack.c.b16 %v1073, %v1072
      %v1089 = vpack.c.b16 %v1075, %v1074
      %v1090 = vpack.c.b16 %v1077, %v1076
      %v1091 = vpack.c.b16 %v1079, %v1078
      %v1092 = vpack.c.b16 %v1081, %v1080
      %v1093 = vpack.c.b16 %v1083, %v1082
      %v1094 = vpack.c.b16 %v1085, %v1084
      %v1095 = vpack.c.b16 %v1087, %v1086
      %1104 = vmatprep.subr.bf16.mxu0 0
      %1105 = vmatpush1.bf16.msra.mxu0 %v1088
      %1106 = vmatprep.subr.bf16.mxu0 0
      %1107 = vmatpush1.bf16.msra.mxu0 %v1089
      %1108 = vmatprep.subr.bf16.mxu0 0
      %1109 = vmatpush1.bf16.msra.mxu0 %v1090
      %1110 = vmatprep.subr.bf16.mxu0 0
      %1111 = vmatpush1.bf16.msra.mxu0 %v1091
      %1112 = vmatprep.subr.bf16.mxu0 0
      %1113 = vmatpush1.bf16.msra.mxu0 %v1092
      %1114 = vmatprep.subr.bf16.mxu0 0
      %1115 = vmatpush1.bf16.msra.mxu0 %v1093
      %1116 = vmatprep.subr.bf16.mxu0 0
      %1117 = vmatpush1.bf16.msra.mxu0 %v1094
      %1118 = vmatprep.subr.bf16.mxu0 0
      %1119 = vmatpush1.bf16.msra.mxu0 %v1095
      %1120 = vmatprep.subr.bf16.mxu0 0
      %1121 = vmatpush1.bf16.msra.mxu0 0
      %1122 = vmatprep.subr.bf16.mxu0 0
      %1123 = vmatpush1.bf16.msra.mxu0 0
      %1124 = vmatprep.subr.bf16.mxu0 0
      %1125 = vmatpush1.bf16.msra.mxu0 0
      %1126 = vmatprep.subr.bf16.mxu0 0
      %1127 = vmatpush1.bf16.msra.mxu0 0
      %1128 = vmatprep.subr.bf16.mxu0 0
      %1129 = vmatpush1.bf16.msra.mxu0 0
      %1130 = vmatprep.subr.bf16.mxu0 0
      %1131 = vmatpush1.bf16.msra.mxu0 0
      %1132 = vmatprep.subr.bf16.mxu0 0
      %1133 = vmatpush1.bf16.msra.mxu0 0
      %1134 = vmatprep.subr.bf16.mxu0 0
      %1135 = vmatpush1.bf16.msra.mxu0 0
      %1136 = vmatprep.mubr.bf16.mxu0 0
      %1137 = vmatmul.mubr.bf16.gmra.mrb[0].mxu0 %v1037
      %v1138 = vpop.f32.mrb[0].mxu0
      %v1139 = vadd.f32 0.0, %v1138
      %v1140 = vpop.f32.mrb[0].mxu0
      %v1141 = vpop.f32.mrb[0].mxu0
      %v1142 = vadd.f32 0.0, %v1141
      %v1143 = vpop.f32.mrb[0].mxu0
      %1144 = vmatprep.mubr.bf16.mxu0 0
      %1145 = vmatmul.mubr.bf16.gmra.mrb[0].mxu0 %v1038
      %v1146 = vpop.f32.mrb[0].mxu0
      %v1147 = vadd.f32 0.0, %v1146
      %v1148 = vpop.f32.mrb[0].mxu0
      %v1149 = vpop.f32.mrb[0].mxu0
      %v1150 = vadd.f32 0.0, %v1149
      %v1151 = vpop.f32.mrb[0].mxu0
      %1152 = vdwg.mxu0
      %v1153 = vadd.f32 %v1029, %v1139
      %v1154 = vadd.f32 %v1030, %v1142
      %v1155 = vadd.f32 %v1031, %v1147
      %v1156 = vadd.f32 %v1032, %v1150
      %v1157 = vld [vmem:[%s908 + $0x2] sm:$0xff]
      %v1158 = vld [vmem:[%s908 + $0x12] sm:$0xff]
      %v1159 = vld [vmem:[%s908 + $0x22] sm:$0xff]
      %v1160 = vld [vmem:[%s908 + $0x32] sm:$0xff]
      %v1161 = vpack.c.bf16 %v1158, %v1157
      %v1162 = vpack.c.bf16 %v1160, %v1159
      %s1163 = scalar_lea.vmem %s1, 512
      %v1164 = vld [vmem:[%s1163] sm:$0xf]
      %v1165 = vld [vmem:[%s1163 + $0x4] sm:$0xf]
      %v1166 = vld [vmem:[%s1163 + $0x8] sm:$0xf]
      %v1167 = vld [vmem:[%s1163 + $0xc] sm:$0xf]
      %v1168 = vld [vmem:[%s1163 + $0x10] sm:$0xf]
      %v1169 = vld [vmem:[%s1163 + $0x14] sm:$0xf]
      %v1170 = vld [vmem:[%s1163 + $0x18] sm:$0xf]
      %v1171 = vld [vmem:[%s1163 + $0x1c] sm:$0xf]
      %v1172 = vld [vmem:[%s1163 + $0x20] sm:$0xf]
      %v1173 = vld [vmem:[%s1163 + $0x24] sm:$0xf]
      %v1174 = vld [vmem:[%s1163 + $0x28] sm:$0xf]
      %v1175 = vld [vmem:[%s1163 + $0x2c] sm:$0xf]
      %v1176 = vld [vmem:[%s1163 + $0x30] sm:$0xf]
      %v1177 = vld [vmem:[%s1163 + $0x34] sm:$0xf]
      %v1178 = vld [vmem:[%s1163 + $0x38] sm:$0xf]
      %v1179 = vld [vmem:[%s1163 + $0x3c] sm:$0xf]
      %v1196 = vunpack.c.l.b16 %v1164
      %v1197 = vunpack.c.l.b16 %v1165
      %v1198 = vunpack.c.l.b16 %v1166
      %v1199 = vunpack.c.l.b16 %v1167
      %v1200 = vunpack.c.l.b16 %v1168
      %v1201 = vunpack.c.l.b16 %v1169
      %v1202 = vunpack.c.l.b16 %v1170
      %v1203 = vunpack.c.l.b16 %v1171
      %v1204 = vunpack.c.l.b16 %v1172
      %v1205 = vunpack.c.l.b16 %v1173
      %v1206 = vunpack.c.l.b16 %v1174
      %v1207 = vunpack.c.l.b16 %v1175
      %v1208 = vunpack.c.l.b16 %v1176
      %v1209 = vunpack.c.l.b16 %v1177
      %v1210 = vunpack.c.l.b16 %v1178
      %v1211 = vunpack.c.l.b16 %v1179
      %v1212 = vpack.c.b16 %v1197, %v1196
      %v1213 = vpack.c.b16 %v1199, %v1198
      %v1214 = vpack.c.b16 %v1201, %v1200
      %v1215 = vpack.c.b16 %v1203, %v1202
      %v1216 = vpack.c.b16 %v1205, %v1204
      %v1217 = vpack.c.b16 %v1207, %v1206
      %v1218 = vpack.c.b16 %v1209, %v1208
      %v1219 = vpack.c.b16 %v1211, %v1210
      %1228 = vmatprep.subr.bf16.mxu0 0
      %1229 = vmatpush1.bf16.msra.mxu0 %v1212
      %1230 = vmatprep.subr.bf16.mxu0 0
      %1231 = vmatpush1.bf16.msra.mxu0 %v1213
      %1232 = vmatprep.subr.bf16.mxu0 0
      %1233 = vmatpush1.bf16.msra.mxu0 %v1214
      %1234 = vmatprep.subr.bf16.mxu0 0
      %1235 = vmatpush1.bf16.msra.mxu0 %v1215
      %1236 = vmatprep.subr.bf16.mxu0 0
      %1237 = vmatpush1.bf16.msra.mxu0 %v1216
      %1238 = vmatprep.subr.bf16.mxu0 0
      %1239 = vmatpush1.bf16.msra.mxu0 %v1217
      %1240 = vmatprep.subr.bf16.mxu0 0
      %1241 = vmatpush1.bf16.msra.mxu0 %v1218
      %1242 = vmatprep.subr.bf16.mxu0 0
      %1243 = vmatpush1.bf16.msra.mxu0 %v1219
      %1244 = vmatprep.subr.bf16.mxu0 0
      %1245 = vmatpush1.bf16.msra.mxu0 0
      %1246 = vmatprep.subr.bf16.mxu0 0
      %1247 = vmatpush1.bf16.msra.mxu0 0
      %1248 = vmatprep.subr.bf16.mxu0 0
      %1249 = vmatpush1.bf16.msra.mxu0 0
      %1250 = vmatprep.subr.bf16.mxu0 0
      %1251 = vmatpush1.bf16.msra.mxu0 0
      %1252 = vmatprep.subr.bf16.mxu0 0
      %1253 = vmatpush1.bf16.msra.mxu0 0
      %1254 = vmatprep.subr.bf16.mxu0 0
      %1255 = vmatpush1.bf16.msra.mxu0 0
      %1256 = vmatprep.subr.bf16.mxu0 0
      %1257 = vmatpush1.bf16.msra.mxu0 0
      %1258 = vmatprep.subr.bf16.mxu0 0
      %1259 = vmatpush1.bf16.msra.mxu0 0
      %1260 = vmatprep.mubr.bf16.mxu0 0
      %1261 = vmatmul.mubr.bf16.gmra.mrb[0].mxu0 %v1161
      %v1262 = vpop.f32.mrb[0].mxu0
      %v1263 = vadd.f32 0.0, %v1262
      %v1264 = vpop.f32.mrb[0].mxu0
      %v1265 = vpop.f32.mrb[0].mxu0
      %v1266 = vadd.f32 0.0, %v1265
      %v1267 = vpop.f32.mrb[0].mxu0
      %1268 = vmatprep.mubr.bf16.mxu0 0
      %1269 = vmatmul.mubr.bf16.gmra.mrb[0].mxu0 %v1162
      %v1270 = vpop.f32.mrb[0].mxu0
      %v1271 = vadd.f32 0.0, %v1270
      %v1272 = vpop.f32.mrb[0].mxu0
      %v1273 = vpop.f32.mrb[0].mxu0
      %v1274 = vadd.f32 0.0, %v1273
      %v1275 = vpop.f32.mrb[0].mxu0
      %1276 = vdwg.mxu0
      %v1277 = vadd.f32 %v1153, %v1263
      %v1278 = vadd.f32 %v1154, %v1266
      %v1279 = vadd.f32 %v1155, %v1271
      %v1280 = vadd.f32 %v1156, %v1274
      %v1281 = vld [vmem:[%s2] sm:$0x1]
      %v1283 = vlaneseq
      %v1284 = vshrl.u32 %v1283, 7
      %v1285 = vsub.s32 0, %v1284
      %v1286 = vrot.slane %v1281, %v1285
      %v1288 = vadd.f32 %v1277, %v1286
      %v1289 = vadd.f32 %v1278, %v1286
      %v1290 = vadd.f32 %v1279, %v1286
      %v1291 = vadd.f32 %v1280, %v1286
      %v1292 = vmax.f32 %v1288, 0.0
      %v1293 = vmax.f32 %v1289, 0.0
      %v1294 = vmax.f32 %v1290, 0.0
      %v1295 = vmax.f32 %v1291, 0.0
      %1296 = vst [vmem:[%s170] sm:$0xff] %v1292
      %1297 = vst [vmem:[%s170 + $0x8] sm:$0xff] %v1293
      %1298 = vst [vmem:[%s170 + $0x10] sm:$0xff] %v1294
      %1299 = vst [vmem:[%s170 + $0x18] sm:$0xff] %v1295
      %p1300 = scmp.lt.s32.totalorder %s14, 1
      %s1301 = scalar_select %p1300, %s14, 1
      %s1302 = smul.addr %s1301, 4
      %s1303 = smul.addr %s1302, 8
      %s1304 = scalar_lea.vmem %s3, %s1303
      // Predicated region
      $region33: #{var_encoder_forward.6} parent=31 // pred_check
        %p1305 = pneg %p100
      $region34: #{var_encoder_forward.6} parent=31 // pred_check_branch
        %1307 = sbr.rel (%p1305) target = $region36
      $region35: #{var_encoder_forward.6} parent=31 // pred_region
        _
      $region36: #{var_encoder_forward.6} parent=31 // pred_fallthru
        _
    $region32: #{var_encoder_forward.6} parent=5 // pred_fallthru
      _
    %p1308 = scmp.le.s32.totalorder 2, %s9
    // Predicated region
    $region37: #{var_encoder_forward.6} parent=5 // pred_check
      %p1309 = pneg %p1308
    $region38: #{var_encoder_forward.6} parent=5 // pred_check_branch
      %1311 = sbr.rel (%p1309) target = $region40
    $region39: #{var_encoder_forward.6} parent=5 // pred_region
      %s1312 = ssub.s32 %s9, 2
      // Predicated region
      $region41: #{var_encoder_forward.6} parent=39 // pred_check
        %p1313 = pneg %p106
      $region42: #{var_encoder_forward.6} parent=39 // pred_check_branch
        %1315 = sbr.rel (%p1313) target = $region44
      $region43: #{var_encoder_forward.6} parent=39 // pred_region
        %p1316 = scmp.lt.s32.totalorder %s15, 1
        %s1317 = scalar_select %p1316, %s15, 1
        %s1318 = smul.addr %s1317, 4
        %s1319 = smul.addr %s1318, 8
        %s1320 = scalar_lea.vmem %s3, %s1319
      $region44: #{var_encoder_forward.6} parent=39 // pred_fallthru
        _
    $region40: #{var_encoder_forward.6} parent=5 // pred_fallthru
      _
  $region6: #{var_encoder_forward.6} parent=0 // loop_footer
    %s13 = sadd.s32 1, %s9
  $region7: #{var_encoder_forward.6} parent=0 // loop_footer_branch
    %8 = sbr.rel target = $region3
  $region8: #{var_encoder_forward.6} parent=0 // loop_exit
    _

</llo_original>
